<compile_context>
chip_gen: v7x
topology: tpu7x:2x2x1
jax: 0.10.0
libtpu: 0.0.40
codegen_flags: <defaults>
</compile_context>

<pallas_src>
import functools
import math

import numpy as np
import jax
import jax.numpy as jnp
from jax.experimental import pallas as pl
from jax.experimental.pallas import tpu as pltpu


LEAK = 0.2                    # FusedLeakyReLU negative_slope
ACT_GAIN = math.sqrt(2.0)     # FusedLeakyReLU scale
# 3x3 tap offsets, tap index t = (sy+1)*3 + (sx+1) == ky*3 + kx (OIHW order).
_OFFSETS = tuple((sy, sx) for sy in (-1, 0, 1) for sx in (-1, 0, 1))


def _tap_masks(H, W):
    """(9, 1, H*W) f32 validity masks for zero-padded 3x3 taps (host constants)."""
    hh = np.arange(H)[:, None]
    ww = np.arange(W)[None, :]
    m = np.ones((9, 1, H, W), np.float32)
    for t, (sy, sx) in enumerate(_OFFSETS):
        valid = (hh + sy >= 0) & (hh + sy < H) & (ww + sx >= 0) & (ww + sx < W)
        m[t, 0] = valid.astype(np.float32)
    return m.reshape(9, 1, H * W)


# ------------------------------------------------------------------
# Fused Pallas kernel: conv1(styled) -> conv2(styled) -> occ(1x1 modulated)
# ------------------------------------------------------------------
def _occlusion_kernel(nw_ref, eff1_ref, eff2_ref, effocc_ref, fb1_ref, fb2_ref,
                      masks_ref, x_ref, n1_ref, n2_ref, o_ref, *, B, C, H, W):
    HW = H * W

    # Per-tap lane-validity masks, (1, HW) each; identical for every batch /
    # channel / conv, so loaded once.  The centre tap needs no mask.
    mask_rows = [None if (sy == 0 and sx == 0) else masks_ref[t]
                 for t, (sy, sx) in enumerate(_OFFSETS)]
    fb1 = fb1_ref[...]                      # (C, 1) bias columns (lane-broadcast)
    fb2 = fb2_ref[...]
    nw1 = nw_ref[0]                         # NoiseInjection scalars (SMEM)
    nw2 = nw_ref[1]

    def mod_conv3x3(img, w_ref, b):
        # img: (C, HW) - channels on sublanes, pixels lane-dense.
        acc = jnp.zeros((C, HW), jnp.float32)
        for t, (sy, sx) in enumerate(_OFFSETS):
            shift = (-(sy * W + sx)) % HW
            rolled = img if shift == 0 else pltpu.roll(img, shift, axis=1)
            if mask_rows[t] is not None:
                rolled = rolled * mask_rows[t]     # zero the wrapped-around taps
            w_t = w_ref[b, t]                      # (C_out, C_in) effective weights
            for i in range(C):
                # (C_out,1) weight column (broadcast along lanes) x (1,HW) input
                # row (broadcast along sublanes): one vector FMA per (tap, i).
                acc = acc + w_t[:, i:i + 1] * rolled[i:i + 1, :]
        return acc

    def noise_bias_act(y, noise_row, nw, fb_col):
        a = y + nw * noise_row + fb_col            # NoiseInjection + bias
        return jnp.where(a >= 0.0, a, LEAK * a) * ACT_GAIN   # FusedLeakyReLU

    for b in range(B):                             # tiny batch: unrolled at trace time
        a1 = noise_bias_act(mod_conv3x3(x_ref[b], eff1_ref, b),
                            n1_ref[b], nw1, fb1)
        a2 = noise_bias_act(mod_conv3x3(a1, eff2_ref, b),
                            n2_ref[b], nw2, fb2)
        # occ: modulated 1x1 conv to one channel (no demodulation, no activation)
        effocc_b = effocc_ref[b]                   # (1, C)
        occ = jnp.zeros((1, HW), jnp.float32)
        for i in range(C):
            occ = occ + effocc_b[:, i:i + 1] * a2[i:i + 1, :]
        o_ref[b] = occ                             # lane-dense (1, HW) store


# ------------------------------------------------------------------
# Wrapper: style/demod folding in plain JAX (288 scalars), everything else fused
# ------------------------------------------------------------------
def occlusion_forward(x, motion, noise1, noise2, params):
    b, C, H, W = x.shape
    HW = H * W
    style_dim = motion.shape[1]
    lin_scale = 1.0 / math.sqrt(style_dim)        # EqualLinear scale (lr_mul=1)
    conv3_scale = 1.0 / math.sqrt(C * 9)          # ModulatedConv2d scale, k=3
    conv1_scale = 1.0 / math.sqrt(C * 1)          # ModulatedConv2d scale, k=1

    def equal_linear(wt, bias):
        return jnp.dot(motion, wt * lin_scale,
                       precision=jax.lax.Precision.HIGHEST) + bias[None, :]

    def effective_weights(weight, style):
        # Fold style modulation, demodulation and the conv scale into one
        # per-batch weight table eff[b, t, o, i] (B*9*C*C = 288 scalars).
        w = conv3_scale * weight[None] * style[:, None, :, None, None]   # (b,O,I,3,3)
        d = jax.lax.rsqrt(jnp.sum(w * w, axis=(2, 3, 4)) + 1e-8)         # (b,O)
        w = w * d[:, :, None, None, None]
        return jnp.transpose(w.reshape(b, C, C, 9), (0, 3, 1, 2)).astype(jnp.float32)

    s1 = equal_linear(params["mod1_w"], params["mod1_b"])
    s2 = equal_linear(params["mod2_w"], params["mod2_b"])
    socc = equal_linear(params["modocc_w"], params["modocc_b"])

    eff1 = effective_weights(params["w1"], s1)                            # (b,9,C,C)
    eff2 = effective_weights(params["w2"], s2)
    effocc = (conv1_scale * socc * params["wocc"].reshape(1, C))          # (b, C)
    effocc = effocc.reshape(b, 1, C).astype(jnp.float32)                  # no demod

    nw = jnp.stack([params["nw1"], params["nw2"]]).astype(jnp.float32)    # (2,)
    fb1 = params["fb1"].reshape(C, 1).astype(jnp.float32)
    fb2 = params["fb2"].reshape(C, 1).astype(jnp.float32)
    masks = jnp.asarray(_tap_masks(H, W))                                 # (9,1,HW)

    kernel = functools.partial(_occlusion_kernel, B=b, C=C, H=H, W=W)
    vmem = pl.BlockSpec(memory_space=pltpu.MemorySpace.VMEM)
    smem = pl.BlockSpec(memory_space=pltpu.MemorySpace.SMEM)

    out = pl.pallas_call(
        kernel,
        out_shape=jax.ShapeDtypeStruct((b, 1, HW), jnp.float32),
        in_specs=[smem] + [vmem] * 9,
        out_specs=vmem,
    )(nw, eff1, eff2, effocc, fb1, fb2, masks,
      x.reshape(b, C, HW), noise1.reshape(b, 1, HW), noise2.reshape(b, 1, HW))
    return out.reshape(b, 1, H, W)


# ------------------------------------------------------------------
# Pure-JAX reference (same math as the PyTorch module) for validation
# ------------------------------------------------------------------
def occlusion_reference(x, motion, noise1, noise2, params):
    b, C, H, W = x.shape
    style_dim = motion.shape[1]
    lin_scale = 1.0 / math.sqrt(style_dim)

    def equal_linear(wt, bias):
        return jnp.dot(motion, wt * lin_scale,
                       precision=jax.lax.Precision.HIGHEST) + bias[None, :]

    def mod_conv(inp, weight, style_mod, demodulate, k):
        scale = 1.0 / math.sqrt(inp.shape[1] * k * k)
        w = scale * weight[None] * style_mod[:, None, :, None, None]     # (b,O,I,k,k)
        if demodulate:
            d = jax.lax.rsqrt(jnp.sum(w * w, axis=(2, 3, 4)) + 1e-8)
            w = w * d[:, :, None, None, None]
        outs = []
        for bb in range(b):
            o = jax.lax.conv_general_dilated(
                inp[bb:bb + 1], w[bb], window_strides=(1, 1),
                padding="SAME" if k == 3 else "VALID",
                dimension_numbers=("NCHW", "OIHW", "NCHW"),
                precision=jax.lax.Precision.HIGHEST)
            outs.append(o)
        return jnp.concatenate(outs, axis=0)

    def flrelu(a, bias):
        a = a + bias[None, :, None, None]
        return jnp.where(a >= 0.0, a, LEAK * a) * ACT_GAIN

    s1 = equal_linear(params["mod1_w"], params["mod1_b"])
    a = mod_conv(x, params["w1"], s1, True, 3)
    a = flrelu(a + params["nw1"] * noise1, params["fb1"])

    s2 = equal_linear(params["mod2_w"], params["mod2_b"])
    a = mod_conv(a, params["w2"], s2, True, 3)
    a = flrelu(a + params["nw2"] * noise2, params["fb2"])

    socc = equal_linear(params["modocc_w"], params["modocc_b"])
    return mod_conv(a, params["wocc"], socc, False, 1)


# ------------------------------------------------------------------
# Synthetic parameters (deterministic)
# ------------------------------------------------------------------
def init_params(key, C, style_dim):
    ks = jax.random.split(key, 6)
    rnd = lambda k, shape: jax.random.normal(k, shape, jnp.float32)
    return dict(
        mod1_w=rnd(ks[0], (style_dim, C)),
        mod1_b=jnp.ones((C,), jnp.float32),        # EqualLinear bias_init=1
        w1=rnd(ks[1], (C, C, 3, 3)),
        fb1=jnp.zeros((C,), jnp.float32),          # FusedLeakyReLU bias
        nw1=jnp.float32(0.1),                      # NoiseInjection weight
        mod2_w=rnd(ks[2], (style_dim, C)),
        mod2_b=jnp.ones((C,), jnp.float32),
        w2=rnd(ks[3], (C, C, 3, 3)),
        fb2=jnp.zeros((C,), jnp.float32),
        nw2=jnp.float32(0.1),
        modocc_w=rnd(ks[4], (style_dim, C)),
        modocc_b=jnp.ones((C,), jnp.float32),
        wocc=rnd(ks[5], (1, C, 1, 1)),             # 1x1 conv, out_channel=1
    )


if __name__ == "__main__":
    B, C, H, W = 2, 4, 16, 16
    STYLE_DIM = 64

    key = jax.random.PRNGKey(0)
    kp, kx, km, kn1, kn2 = jax.random.split(key, 5)
    params = init_params(kp, C, STYLE_DIM)

    x = jax.random.normal(kx, (B, C, H, W), jnp.float32)
    motion = jax.random.normal(km, (B, STYLE_DIM), jnp.float32)
    # TODO(synk): NoiseInjection(noise=None) samples fresh N(0,1) noise inside the
    # module; here it is sampled deterministically outside and passed in.
    noise1 = jax.random.normal(kn1, (B, 1, H, W), jnp.float32)
    noise2 = jax.random.normal(kn2, (B, 1, H, W), jnp.float32)

    fwd = jax.jit(lambda x, m, n1, n2: occlusion_forward(x, m, n1, n2, params))
    out = jax.block_until_ready(fwd(x, motion, noise1, noise2))

    assert out.shape == (B, 1, H, W)
    assert bool(jnp.all(jnp.isfinite(out)))

    ref = jax.jit(lambda x, m, n1, n2: occlusion_reference(x, m, n1, n2, params))(
        x, motion, noise1, noise2)
    ref = jax.block_until_ready(ref)
    max_err = float(jnp.max(jnp.abs(out - ref)))
    assert max_err < 2e-3, f"mismatch vs reference: {max_err}"

    print("KERNEL_OK")
</pallas_src>

<mosaic_0001>
module attributes {stable_mosaic.version = 11 : i64} {
  func.func @_occlusion_kernel(%arg0: memref<2xf32, #tpu.memory_space<smem>>, %arg1: memref<2x9x4x4xf32, #tpu.memory_space<vmem>>, %arg2: memref<2x9x4x4xf32, #tpu.memory_space<vmem>>, %arg3: memref<2x1x4xf32, #tpu.memory_space<vmem>>, %arg4: memref<4x1xf32, #tpu.memory_space<vmem>>, %arg5: memref<4x1xf32, #tpu.memory_space<vmem>>, %arg6: memref<9x1x256xf32, #tpu.memory_space<vmem>>, %arg7: memref<2x4x256xf32, #tpu.memory_space<vmem>>, %arg8: memref<2x1x256xf32, #tpu.memory_space<vmem>>, %arg9: memref<2x1x256xf32, #tpu.memory_space<vmem>>, %arg10: memref<2x1x256xf32, #tpu.memory_space<vmem>>) attributes {dimension_semantics = [], scalar_prefetch = 0 : i64, scratch_operands = 0 : i64, tpu.core_type = #tpu.core_type<tc>} {
    %c0 = arith.constant 0 : index
    %c0_0 = arith.constant 0 : index
    %c0_1 = arith.constant 0 : index
    %0 = vector.load %arg6[%c0, %c0_0, %c0_1] : memref<9x1x256xf32, #tpu.memory_space<vmem>>, vector<1x1x256xf32>
    %1 = vector.shape_cast %0 : vector<1x1x256xf32> to vector<1x256xf32>
    %c1 = arith.constant 1 : index
    %c0_2 = arith.constant 0 : index
    %c0_3 = arith.constant 0 : index
    %2 = vector.load %arg6[%c1, %c0_2, %c0_3] : memref<9x1x256xf32, #tpu.memory_space<vmem>>, vector<1x1x256xf32>
    %3 = vector.shape_cast %2 : vector<1x1x256xf32> to vector<1x256xf32>
    %c2 = arith.constant 2 : index
    %c0_4 = arith.constant 0 : index
    %c0_5 = arith.constant 0 : index
    %4 = vector.load %arg6[%c2, %c0_4, %c0_5] : memref<9x1x256xf32, #tpu.memory_space<vmem>>, vector<1x1x256xf32>
    %5 = vector.shape_cast %4 : vector<1x1x256xf32> to vector<1x256xf32>
    %c3 = arith.constant 3 : index
    %c0_6 = arith.constant 0 : index
    %c0_7 = arith.constant 0 : index
    %6 = vector.load %arg6[%c3, %c0_6, %c0_7] : memref<9x1x256xf32, #tpu.memory_space<vmem>>, vector<1x1x256xf32>
    %7 = vector.shape_cast %6 : vector<1x1x256xf32> to vector<1x256xf32>
    %c5 = arith.constant 5 : index
    %c0_8 = arith.constant 0 : index
    %c0_9 = arith.constant 0 : index
    %8 = vector.load %arg6[%c5, %c0_8, %c0_9] : memref<9x1x256xf32, #tpu.memory_space<vmem>>, vector<1x1x256xf32>
    %9 = vector.shape_cast %8 : vector<1x1x256xf32> to vector<1x256xf32>
    %c6 = arith.constant 6 : index
    %c0_10 = arith.constant 0 : index
    %c0_11 = arith.constant 0 : index
    %10 = vector.load %arg6[%c6, %c0_10, %c0_11] : memref<9x1x256xf32, #tpu.memory_space<vmem>>, vector<1x1x256xf32>
    %11 = vector.shape_cast %10 : vector<1x1x256xf32> to vector<1x256xf32>
    %c7 = arith.constant 7 : index
    %c0_12 = arith.constant 0 : index
    %c0_13 = arith.constant 0 : index
    %12 = vector.load %arg6[%c7, %c0_12, %c0_13] : memref<9x1x256xf32, #tpu.memory_space<vmem>>, vector<1x1x256xf32>
    %13 = vector.shape_cast %12 : vector<1x1x256xf32> to vector<1x256xf32>
    %c8 = arith.constant 8 : index
    %c0_14 = arith.constant 0 : index
    %c0_15 = arith.constant 0 : index
    %14 = vector.load %arg6[%c8, %c0_14, %c0_15] : memref<9x1x256xf32, #tpu.memory_space<vmem>>, vector<1x1x256xf32>
    %15 = vector.shape_cast %14 : vector<1x1x256xf32> to vector<1x256xf32>
    %c0_16 = arith.constant 0 : index
    %c0_17 = arith.constant 0 : index
    %16 = vector.load %arg4[%c0_16, %c0_17] : memref<4x1xf32, #tpu.memory_space<vmem>>, vector<4x1xf32>
    %c0_18 = arith.constant 0 : index
    %c0_19 = arith.constant 0 : index
    %17 = vector.load %arg5[%c0_18, %c0_19] : memref<4x1xf32, #tpu.memory_space<vmem>>, vector<4x1xf32>
    %c0_20 = arith.constant 0 : index
    %18 = memref.load %arg0[%c0_20] : memref<2xf32, #tpu.memory_space<smem>>
    %c1_21 = arith.constant 1 : index
    %19 = memref.load %arg0[%c1_21] : memref<2xf32, #tpu.memory_space<smem>>
    %c0_22 = arith.constant 0 : index
    %c0_23 = arith.constant 0 : index
    %c0_24 = arith.constant 0 : index
    %20 = vector.load %arg7[%c0_22, %c0_23, %c0_24] : memref<2x4x256xf32, #tpu.memory_space<vmem>>, vector<1x4x256xf32>
    %21 = vector.shape_cast %20 : vector<1x4x256xf32> to vector<4x256xf32>
    %cst = arith.constant 0.000000e+00 : f32
    %22 = vector.broadcast %cst : f32 to vector<4x256xf32>
    %c17_i32 = arith.constant 17 : i32
    %23 = tpu.dynamic_rotate %21 by %c17_i32 dim 1 : vector<4x256xf32>, i32 -> vector<4x256xf32>
    %24 = vector.broadcast %1 : vector<1x256xf32> to vector<4x256xf32>
    %25 = arith.mulf %23, %24 : vector<4x256xf32>
    %c0_25 = arith.constant 0 : index
    %c0_26 = arith.constant 0 : index
    %c0_27 = arith.constant 0 : index
    %c0_28 = arith.constant 0 : index
    %26 = vector.load %arg1[%c0_25, %c0_26, %c0_27, %c0_28] : memref<2x9x4x4xf32, #tpu.memory_space<vmem>>, vector<1x1x4x4xf32>
    %27 = vector.shape_cast %26 : vector<1x1x4x4xf32> to vector<4x4xf32>
    %28 = vector.extract_strided_slice %27 {offsets = [0, 0], sizes = [4, 1], strides = [1, 1]} : vector<4x4xf32> to vector<4x1xf32>
    %29 = vector.extract_strided_slice %25 {offsets = [0, 0], sizes = [1, 256], strides = [1, 1]} : vector<4x256xf32> to vector<1x256xf32>
    %30 = vector.broadcast %28 : vector<4x1xf32> to vector<4x256xf32>
    %31 = vector.broadcast %29 : vector<1x256xf32> to vector<4x256xf32>
    %32 = arith.mulf %30, %31 : vector<4x256xf32>
    %33 = arith.addf %22, %32 : vector<4x256xf32>
    %34 = vector.extract_strided_slice %27 {offsets = [0, 1], sizes = [4, 1], strides = [1, 1]} : vector<4x4xf32> to vector<4x1xf32>
    %35 = vector.extract_strided_slice %25 {offsets = [1, 0], sizes = [1, 256], strides = [1, 1]} : vector<4x256xf32> to vector<1x256xf32>
    %36 = vector.broadcast %34 : vector<4x1xf32> to vector<4x256xf32>
    %37 = vector.broadcast %35 : vector<1x256xf32> to vector<4x256xf32>
    %38 = arith.mulf %36, %37 : vector<4x256xf32>
    %39 = arith.addf %33, %38 : vector<4x256xf32>
    %40 = vector.extract_strided_slice %27 {offsets = [0, 2], sizes = [4, 1], strides = [1, 1]} : vector<4x4xf32> to vector<4x1xf32>
    %41 = vector.extract_strided_slice %25 {offsets = [2, 0], sizes = [1, 256], strides = [1, 1]} : vector<4x256xf32> to vector<1x256xf32>
    %42 = vector.broadcast %40 : vector<4x1xf32> to vector<4x256xf32>
    %43 = vector.broadcast %41 : vector<1x256xf32> to vector<4x256xf32>
    %44 = arith.mulf %42, %43 : vector<4x256xf32>
    %45 = arith.addf %39, %44 : vector<4x256xf32>
    %46 = vector.extract_strided_slice %27 {offsets = [0, 3], sizes = [4, 1], strides = [1, 1]} : vector<4x4xf32> to vector<4x1xf32>
    %47 = vector.extract_strided_slice %25 {offsets = [3, 0], sizes = [1, 256], strides = [1, 1]} : vector<4x256xf32> to vector<1x256xf32>
    %48 = vector.broadcast %46 : vector<4x1xf32> to vector<4x256xf32>
    %49 = vector.broadcast %47 : vector<1x256xf32> to vector<4x256xf32>
    %50 = arith.mulf %48, %49 : vector<4x256xf32>
    %51 = arith.addf %45, %50 : vector<4x256xf32>
    %c16_i32 = arith.constant 16 : i32
    %52 = tpu.dynamic_rotate %21 by %c16_i32 dim 1 : vector<4x256xf32>, i32 -> vector<4x256xf32>
    %53 = vector.broadcast %3 : vector<1x256xf32> to vector<4x256xf32>
    %54 = arith.mulf %52, %53 : vector<4x256xf32>
    %c0_29 = arith.constant 0 : index
    %c1_30 = arith.constant 1 : index
    %c0_31 = arith.constant 0 : index
    %c0_32 = arith.constant 0 : index
    %55 = vector.load %arg1[%c0_29, %c1_30, %c0_31, %c0_32] : memref<2x9x4x4xf32, #tpu.memory_space<vmem>>, vector<1x1x4x4xf32>
    %56 = vector.shape_cast %55 : vector<1x1x4x4xf32> to vector<4x4xf32>
    %57 = vector.extract_strided_slice %56 {offsets = [0, 0], sizes = [4, 1], strides = [1, 1]} : vector<4x4xf32> to vector<4x1xf32>
    %58 = vector.extract_strided_slice %54 {offsets = [0, 0], sizes = [1, 256], strides = [1, 1]} : vector<4x256xf32> to vector<1x256xf32>
    %59 = vector.broadcast %57 : vector<4x1xf32> to vector<4x256xf32>
    %60 = vector.broadcast %58 : vector<1x256xf32> to vector<4x256xf32>
    %61 = arith.mulf %59, %60 : vector<4x256xf32>
    %62 = arith.addf %51, %61 : vector<4x256xf32>
    %63 = vector.extract_strided_slice %56 {offsets = [0, 1], sizes = [4, 1], strides = [1, 1]} : vector<4x4xf32> to vector<4x1xf32>
    %64 = vector.extract_strided_slice %54 {offsets = [1, 0], sizes = [1, 256], strides = [1, 1]} : vector<4x256xf32> to vector<1x256xf32>
    %65 = vector.broadcast %63 : vector<4x1xf32> to vector<4x256xf32>
    %66 = vector.broadcast %64 : vector<1x256xf32> to vector<4x256xf32>
    %67 = arith.mulf %65, %66 : vector<4x256xf32>
    %68 = arith.addf %62, %67 : vector<4x256xf32>
    %69 = vector.extract_strided_slice %56 {offsets = [0, 2], sizes = [4, 1], strides = [1, 1]} : vector<4x4xf32> to vector<4x1xf32>
    %70 = vector.extract_strided_slice %54 {offsets = [2, 0], sizes = [1, 256], strides = [1, 1]} : vector<4x256xf32> to vector<1x256xf32>
    %71 = vector.broadcast %69 : vector<4x1xf32> to vector<4x256xf32>
    %72 = vector.broadcast %70 : vector<1x256xf32> to vector<4x256xf32>
    %73 = arith.mulf %71, %72 : vector<4x256xf32>
    %74 = arith.addf %68, %73 : vector<4x256xf32>
    %75 = vector.extract_strided_slice %56 {offsets = [0, 3], sizes = [4, 1], strides = [1, 1]} : vector<4x4xf32> to vector<4x1xf32>
    %76 = vector.extract_strided_slice %54 {offsets = [3, 0], sizes = [1, 256], strides = [1, 1]} : vector<4x256xf32> to vector<1x256xf32>
    %77 = vector.broadcast %75 : vector<4x1xf32> to vector<4x256xf32>
    %78 = vector.broadcast %76 : vector<1x256xf32> to vector<4x256xf32>
    %79 = arith.mulf %77, %78 : vector<4x256xf32>
    %80 = arith.addf %74, %79 : vector<4x256xf32>
    %c15_i32 = arith.constant 15 : i32
    %81 = tpu.dynamic_rotate %21 by %c15_i32 dim 1 : vector<4x256xf32>, i32 -> vector<4x256xf32>
    %82 = vector.broadcast %5 : vector<1x256xf32> to vector<4x256xf32>
    %83 = arith.mulf %81, %82 : vector<4x256xf32>
    %c0_33 = arith.constant 0 : index
    %c2_34 = arith.constant 2 : index
    %c0_35 = arith.constant 0 : index
    %c0_36 = arith.constant 0 : index
    %84 = vector.load %arg1[%c0_33, %c2_34, %c0_35, %c0_36] : memref<2x9x4x4xf32, #tpu.memory_space<vmem>>, vector<1x1x4x4xf32>
    %85 = vector.shape_cast %84 : vector<1x1x4x4xf32> to vector<4x4xf32>
    %86 = vector.extract_strided_slice %85 {offsets = [0, 0], sizes = [4, 1], strides = [1, 1]} : vector<4x4xf32> to vector<4x1xf32>
    %87 = vector.extract_strided_slice %83 {offsets = [0, 0], sizes = [1, 256], strides = [1, 1]} : vector<4x256xf32> to vector<1x256xf32>
    %88 = vector.broadcast %86 : vector<4x1xf32> to vector<4x256xf32>
    %89 = vector.broadcast %87 : vector<1x256xf32> to vector<4x256xf32>
    %90 = arith.mulf %88, %89 : vector<4x256xf32>
    %91 = arith.addf %80, %90 : vector<4x256xf32>
    %92 = vector.extract_strided_slice %85 {offsets = [0, 1], sizes = [4, 1], strides = [1, 1]} : vector<4x4xf32> to vector<4x1xf32>
    %93 = vector.extract_strided_slice %83 {offsets = [1, 0], sizes = [1, 256], strides = [1, 1]} : vector<4x256xf32> to vector<1x256xf32>
    %94 = vector.broadcast %92 : vector<4x1xf32> to vector<4x256xf32>
    %95 = vector.broadcast %93 : vector<1x256xf32> to vector<4x256xf32>
    %96 = arith.mulf %94, %95 : vector<4x256xf32>
    %97 = arith.addf %91, %96 : vector<4x256xf32>
    %98 = vector.extract_strided_slice %85 {offsets = [0, 2], sizes = [4, 1], strides = [1, 1]} : vector<4x4xf32> to vector<4x1xf32>
    %99 = vector.extract_strided_slice %83 {offsets = [2, 0], sizes = [1, 256], strides = [1, 1]} : vector<4x256xf32> to vector<1x256xf32>
    %100 = vector.broadcast %98 : vector<4x1xf32> to vector<4x256xf32>
    %101 = vector.broadcast %99 : vector<1x256xf32> to vector<4x256xf32>
    %102 = arith.mulf %100, %101 : vector<4x256xf32>
    %103 = arith.addf %97, %102 : vector<4x256xf32>
    %104 = vector.extract_strided_slice %85 {offsets = [0, 3], sizes = [4, 1], strides = [1, 1]} : vector<4x4xf32> to vector<4x1xf32>
    %105 = vector.extract_strided_slice %83 {offsets = [3, 0], sizes = [1, 256], strides = [1, 1]} : vector<4x256xf32> to vector<1x256xf32>
    %106 = vector.broadcast %104 : vector<4x1xf32> to vector<4x256xf32>
    %107 = vector.broadcast %105 : vector<1x256xf32> to vector<4x256xf32>
    %108 = arith.mulf %106, %107 : vector<4x256xf32>
    %109 = arith.addf %103, %108 : vector<4x256xf32>
    %c1_i32 = arith.constant 1 : i32
    %110 = tpu.dynamic_rotate %21 by %c1_i32 dim 1 : vector<4x256xf32>, i32 -> vector<4x256xf32>
    %111 = vector.broadcast %7 : vector<1x256xf32> to vector<4x256xf32>
    %112 = arith.mulf %110, %111 : vector<4x256xf32>
    %c0_37 = arith.constant 0 : index
    %c3_38 = arith.constant 3 : index
    %c0_39 = arith.constant 0 : index
    %c0_40 = arith.constant 0 : index
    %113 = vector.load %arg1[%c0_37, %c3_38, %c0_39, %c0_40] : memref<2x9x4x4xf32, #tpu.memory_space<vmem>>, vector<1x1x4x4xf32>
    %114 = vector.shape_cast %113 : vector<1x1x4x4xf32> to vector<4x4xf32>
    %115 = vector.extract_strided_slice %114 {offsets = [0, 0], sizes = [4, 1], strides = [1, 1]} : vector<4x4xf32> to vector<4x1xf32>
    %116 = vector.extract_strided_slice %112 {offsets = [0, 0], sizes = [1, 256], strides = [1, 1]} : vector<4x256xf32> to vector<1x256xf32>
    %117 = vector.broadcast %115 : vector<4x1xf32> to vector<4x256xf32>
    %118 = vector.broadcast %116 : vector<1x256xf32> to vector<4x256xf32>
    %119 = arith.mulf %117, %118 : vector<4x256xf32>
    %120 = arith.addf %109, %119 : vector<4x256xf32>
    %121 = vector.extract_strided_slice %114 {offsets = [0, 1], sizes = [4, 1], strides = [1, 1]} : vector<4x4xf32> to vector<4x1xf32>
    %122 = vector.extract_strided_slice %112 {offsets = [1, 0], sizes = [1, 256], strides = [1, 1]} : vector<4x256xf32> to vector<1x256xf32>
    %123 = vector.broadcast %121 : vector<4x1xf32> to vector<4x256xf32>
    %124 = vector.broadcast %122 : vector<1x256xf32> to vector<4x256xf32>
    %125 = arith.mulf %123, %124 : vector<4x256xf32>
    %126 = arith.addf %120, %125 : vector<4x256xf32>
    %127 = vector.extract_strided_slice %114 {offsets = [0, 2], sizes = [4, 1], strides = [1, 1]} : vector<4x4xf32> to vector<4x1xf32>
    %128 = vector.extract_strided_slice %112 {offsets = [2, 0], sizes = [1, 256], strides = [1, 1]} : vector<4x256xf32> to vector<1x256xf32>
    %129 = vector.broadcast %127 : vector<4x1xf32> to vector<4x256xf32>
    %130 = vector.broadcast %128 : vector<1x256xf32> to vector<4x256xf32>
    %131 = arith.mulf %129, %130 : vector<4x256xf32>
    %132 = arith.addf %126, %131 : vector<4x256xf32>
    %133 = vector.extract_strided_slice %114 {offsets = [0, 3], sizes = [4, 1], strides = [1, 1]} : vector<4x4xf32> to vector<4x1xf32>
    %134 = vector.extract_strided_slice %112 {offsets = [3, 0], sizes = [1, 256], strides = [1, 1]} : vector<4x256xf32> to vector<1x256xf32>
    %135 = vector.broadcast %133 : vector<4x1xf32> to vector<4x256xf32>
    %136 = vector.broadcast %134 : vector<1x256xf32> to vector<4x256xf32>
    %137 = arith.mulf %135, %136 : vector<4x256xf32>
    %138 = arith.addf %132, %137 : vector<4x256xf32>
    %c0_41 = arith.constant 0 : index
    %c4 = arith.constant 4 : index
    %c0_42 = arith.constant 0 : index
    %c0_43 = arith.constant 0 : index
    %139 = vector.load %arg1[%c0_41, %c4, %c0_42, %c0_43] : memref<2x9x4x4xf32, #tpu.memory_space<vmem>>, vector<1x1x4x4xf32>
    %140 = vector.shape_cast %139 : vector<1x1x4x4xf32> to vector<4x4xf32>
    %141 = vector.extract_strided_slice %140 {offsets = [0, 0], sizes = [4, 1], strides = [1, 1]} : vector<4x4xf32> to vector<4x1xf32>
    %142 = vector.extract_strided_slice %21 {offsets = [0, 0], sizes = [1, 256], strides = [1, 1]} : vector<4x256xf32> to vector<1x256xf32>
    %143 = vector.broadcast %141 : vector<4x1xf32> to vector<4x256xf32>
    %144 = vector.broadcast %142 : vector<1x256xf32> to vector<4x256xf32>
    %145 = arith.mulf %143, %144 : vector<4x256xf32>
    %146 = arith.addf %138, %145 : vector<4x256xf32>
    %147 = vector.extract_strided_slice %140 {offsets = [0, 1], sizes = [4, 1], strides = [1, 1]} : vector<4x4xf32> to vector<4x1xf32>
    %148 = vector.extract_strided_slice %21 {offsets = [1, 0], sizes = [1, 256], strides = [1, 1]} : vector<4x256xf32> to vector<1x256xf32>
    %149 = vector.broadcast %147 : vector<4x1xf32> to vector<4x256xf32>
    %150 = vector.broadcast %148 : vector<1x256xf32> to vector<4x256xf32>
    %151 = arith.mulf %149, %150 : vector<4x256xf32>
    %152 = arith.addf %146, %151 : vector<4x256xf32>
    %153 = vector.extract_strided_slice %140 {offsets = [0, 2], sizes = [4, 1], strides = [1, 1]} : vector<4x4xf32> to vector<4x1xf32>
    %154 = vector.extract_strided_slice %21 {offsets = [2, 0], sizes = [1, 256], strides = [1, 1]} : vector<4x256xf32> to vector<1x256xf32>
    %155 = vector.broadcast %153 : vector<4x1xf32> to vector<4x256xf32>
    %156 = vector.broadcast %154 : vector<1x256xf32> to vector<4x256xf32>
    %157 = arith.mulf %155, %156 : vector<4x256xf32>
    %158 = arith.addf %152, %157 : vector<4x256xf32>
    %159 = vector.extract_strided_slice %140 {offsets = [0, 3], sizes = [4, 1], strides = [1, 1]} : vector<4x4xf32> to vector<4x1xf32>
    %160 = vector.extract_strided_slice %21 {offsets = [3, 0], sizes = [1, 256], strides = [1, 1]} : vector<4x256xf32> to vector<1x256xf32>
    %161 = vector.broadcast %159 : vector<4x1xf32> to vector<4x256xf32>
    %162 = vector.broadcast %160 : vector<1x256xf32> to vector<4x256xf32>
    %163 = arith.mulf %161, %162 : vector<4x256xf32>
    %164 = arith.addf %158, %163 : vector<4x256xf32>
    %c255_i32 = arith.constant 255 : i32
    %165 = tpu.dynamic_rotate %21 by %c255_i32 dim 1 : vector<4x256xf32>, i32 -> vector<4x256xf32>
    %166 = vector.broadcast %9 : vector<1x256xf32> to vector<4x256xf32>
    %167 = arith.mulf %165, %166 : vector<4x256xf32>
    %c0_44 = arith.constant 0 : index
    %c5_45 = arith.constant 5 : index
    %c0_46 = arith.constant 0 : index
    %c0_47 = arith.constant 0 : index
    %168 = vector.load %arg1[%c0_44, %c5_45, %c0_46, %c0_47] : memref<2x9x4x4xf32, #tpu.memory_space<vmem>>, vector<1x1x4x4xf32>
    %169 = vector.shape_cast %168 : vector<1x1x4x4xf32> to vector<4x4xf32>
    %170 = vector.extract_strided_slice %169 {offsets = [0, 0], sizes = [4, 1], strides = [1, 1]} : vector<4x4xf32> to vector<4x1xf32>
    %171 = vector.extract_strided_slice %167 {offsets = [0, 0], sizes = [1, 256], strides = [1, 1]} : vector<4x256xf32> to vector<1x256xf32>
    %172 = vector.broadcast %170 : vector<4x1xf32> to vector<4x256xf32>
    %173 = vector.broadcast %171 : vector<1x256xf32> to vector<4x256xf32>
    %174 = arith.mulf %172, %173 : vector<4x256xf32>
    %175 = arith.addf %164, %174 : vector<4x256xf32>
    %176 = vector.extract_strided_slice %169 {offsets = [0, 1], sizes = [4, 1], strides = [1, 1]} : vector<4x4xf32> to vector<4x1xf32>
    %177 = vector.extract_strided_slice %167 {offsets = [1, 0], sizes = [1, 256], strides = [1, 1]} : vector<4x256xf32> to vector<1x256xf32>
    %178 = vector.broadcast %176 : vector<4x1xf32> to vector<4x256xf32>
    %179 = vector.broadcast %177 : vector<1x256xf32> to vector<4x256xf32>
    %180 = arith.mulf %178, %179 : vector<4x256xf32>
    %181 = arith.addf %175, %180 : vector<4x256xf32>
    %182 = vector.extract_strided_slice %169 {offsets = [0, 2], sizes = [4, 1], strides = [1, 1]} : vector<4x4xf32> to vector<4x1xf32>
    %183 = vector.extract_strided_slice %167 {offsets = [2, 0], sizes = [1, 256], strides = [1, 1]} : vector<4x256xf32> to vector<1x256xf32>
    %184 = vector.broadcast %182 : vector<4x1xf32> to vector<4x256xf32>
    %185 = vector.broadcast %183 : vector<1x256xf32> to vector<4x256xf32>
    %186 = arith.mulf %184, %185 : vector<4x256xf32>
    %187 = arith.addf %181, %186 : vector<4x256xf32>
    %188 = vector.extract_strided_slice %169 {offsets = [0, 3], sizes = [4, 1], strides = [1, 1]} : vector<4x4xf32> to vector<4x1xf32>
    %189 = vector.extract_strided_slice %167 {offsets = [3, 0], sizes = [1, 256], strides = [1, 1]} : vector<4x256xf32> to vector<1x256xf32>
    %190 = vector.broadcast %188 : vector<4x1xf32> to vector<4x256xf32>
    %191 = vector.broadcast %189 : vector<1x256xf32> to vector<4x256xf32>
    %192 = arith.mulf %190, %191 : vector<4x256xf32>
    %193 = arith.addf %187, %192 : vector<4x256xf32>
    %c241_i32 = arith.constant 241 : i32
    %194 = tpu.dynamic_rotate %21 by %c241_i32 dim 1 : vector<4x256xf32>, i32 -> vector<4x256xf32>
    %195 = vector.broadcast %11 : vector<1x256xf32> to vector<4x256xf32>
    %196 = arith.mulf %194, %195 : vector<4x256xf32>
    %c0_48 = arith.constant 0 : index
    %c6_49 = arith.constant 6 : index
    %c0_50 = arith.constant 0 : index
    %c0_51 = arith.constant 0 : index
    %197 = vector.load %arg1[%c0_48, %c6_49, %c0_50, %c0_51] : memref<2x9x4x4xf32, #tpu.memory_space<vmem>>, vector<1x1x4x4xf32>
    %198 = vector.shape_cast %197 : vector<1x1x4x4xf32> to vector<4x4xf32>
    %199 = vector.extract_strided_slice %198 {offsets = [0, 0], sizes = [4, 1], strides = [1, 1]} : vector<4x4xf32> to vector<4x1xf32>
    %200 = vector.extract_strided_slice %196 {offsets = [0, 0], sizes = [1, 256], strides = [1, 1]} : vector<4x256xf32> to vector<1x256xf32>
    %201 = vector.broadcast %199 : vector<4x1xf32> to vector<4x256xf32>
    %202 = vector.broadcast %200 : vector<1x256xf32> to vector<4x256xf32>
    %203 = arith.mulf %201, %202 : vector<4x256xf32>
    %204 = arith.addf %193, %203 : vector<4x256xf32>
    %205 = vector.extract_strided_slice %198 {offsets = [0, 1], sizes = [4, 1], strides = [1, 1]} : vector<4x4xf32> to vector<4x1xf32>
    %206 = vector.extract_strided_slice %196 {offsets = [1, 0], sizes = [1, 256], strides = [1, 1]} : vector<4x256xf32> to vector<1x256xf32>
    %207 = vector.broadcast %205 : vector<4x1xf32> to vector<4x256xf32>
    %208 = vector.broadcast %206 : vector<1x256xf32> to vector<4x256xf32>
    %209 = arith.mulf %207, %208 : vector<4x256xf32>
    %210 = arith.addf %204, %209 : vector<4x256xf32>
    %211 = vector.extract_strided_slice %198 {offsets = [0, 2], sizes = [4, 1], strides = [1, 1]} : vector<4x4xf32> to vector<4x1xf32>
    %212 = vector.extract_strided_slice %196 {offsets = [2, 0], sizes = [1, 256], strides = [1, 1]} : vector<4x256xf32> to vector<1x256xf32>
    %213 = vector.broadcast %211 : vector<4x1xf32> to vector<4x256xf32>
    %214 = vector.broadcast %212 : vector<1x256xf32> to vector<4x256xf32>
    %215 = arith.mulf %213, %214 : vector<4x256xf32>
    %216 = arith.addf %210, %215 : vector<4x256xf32>
    %217 = vector.extract_strided_slice %198 {offsets = [0, 3], sizes = [4, 1], strides = [1, 1]} : vector<4x4xf32> to vector<4x1xf32>
    %218 = vector.extract_strided_slice %196 {offsets = [3, 0], sizes = [1, 256], strides = [1, 1]} : vector<4x256xf32> to vector<1x256xf32>
    %219 = vector.broadcast %217 : vector<4x1xf32> to vector<4x256xf32>
    %220 = vector.broadcast %218 : vector<1x256xf32> to vector<4x256xf32>
    %221 = arith.mulf %219, %220 : vector<4x256xf32>
    %222 = arith.addf %216, %221 : vector<4x256xf32>
    %c240_i32 = arith.constant 240 : i32
    %223 = tpu.dynamic_rotate %21 by %c240_i32 dim 1 : vector<4x256xf32>, i32 -> vector<4x256xf32>
    %224 = vector.broadcast %13 : vector<1x256xf32> to vector<4x256xf32>
    %225 = arith.mulf %223, %224 : vector<4x256xf32>
    %c0_52 = arith.constant 0 : index
    %c7_53 = arith.constant 7 : index
    %c0_54 = arith.constant 0 : index
    %c0_55 = arith.constant 0 : index
    %226 = vector.load %arg1[%c0_52, %c7_53, %c0_54, %c0_55] : memref<2x9x4x4xf32, #tpu.memory_space<vmem>>, vector<1x1x4x4xf32>
    %227 = vector.shape_cast %226 : vector<1x1x4x4xf32> to vector<4x4xf32>
    %228 = vector.extract_strided_slice %227 {offsets = [0, 0], sizes = [4, 1], strides = [1, 1]} : vector<4x4xf32> to vector<4x1xf32>
    %229 = vector.extract_strided_slice %225 {offsets = [0, 0], sizes = [1, 256], strides = [1, 1]} : vector<4x256xf32> to vector<1x256xf32>
    %230 = vector.broadcast %228 : vector<4x1xf32> to vector<4x256xf32>
    %231 = vector.broadcast %229 : vector<1x256xf32> to vector<4x256xf32>
    %232 = arith.mulf %230, %231 : vector<4x256xf32>
    %233 = arith.addf %222, %232 : vector<4x256xf32>
    %234 = vector.extract_strided_slice %227 {offsets = [0, 1], sizes = [4, 1], strides = [1, 1]} : vector<4x4xf32> to vector<4x1xf32>
    %235 = vector.extract_strided_slice %225 {offsets = [1, 0], sizes = [1, 256], strides = [1, 1]} : vector<4x256xf32> to vector<1x256xf32>
    %236 = vector.broadcast %234 : vector<4x1xf32> to vector<4x256xf32>
    %237 = vector.broadcast %235 : vector<1x256xf32> to vector<4x256xf32>
    %238 = arith.mulf %236, %237 : vector<4x256xf32>
    %239 = arith.addf %233, %238 : vector<4x256xf32>
    %240 = vector.extract_strided_slice %227 {offsets = [0, 2], sizes = [4, 1], strides = [1, 1]} : vector<4x4xf32> to vector<4x1xf32>
    %241 = vector.extract_strided_slice %225 {offsets = [2, 0], sizes = [1, 256], strides = [1, 1]} : vector<4x256xf32> to vector<1x256xf32>
    %242 = vector.broadcast %240 : vector<4x1xf32> to vector<4x256xf32>
    %243 = vector.broadcast %241 : vector<1x256xf32> to vector<4x256xf32>
    %244 = arith.mulf %242, %243 : vector<4x256xf32>
    %245 = arith.addf %239, %244 : vector<4x256xf32>
    %246 = vector.extract_strided_slice %227 {offsets = [0, 3], sizes = [4, 1], strides = [1, 1]} : vector<4x4xf32> to vector<4x1xf32>
    %247 = vector.extract_strided_slice %225 {offsets = [3, 0], sizes = [1, 256], strides = [1, 1]} : vector<4x256xf32> to vector<1x256xf32>
    %248 = vector.broadcast %246 : vector<4x1xf32> to vector<4x256xf32>
    %249 = vector.broadcast %247 : vector<1x256xf32> to vector<4x256xf32>
    %250 = arith.mulf %248, %249 : vector<4x256xf32>
    %251 = arith.addf %245, %250 : vector<4x256xf32>
    %c239_i32 = arith.constant 239 : i32
    %252 = tpu.dynamic_rotate %21 by %c239_i32 dim 1 : vector<4x256xf32>, i32 -> vector<4x256xf32>
    %253 = vector.broadcast %15 : vector<1x256xf32> to vector<4x256xf32>
    %254 = arith.mulf %252, %253 : vector<4x256xf32>
    %c0_56 = arith.constant 0 : index
    %c8_57 = arith.constant 8 : index
    %c0_58 = arith.constant 0 : index
    %c0_59 = arith.constant 0 : index
    %255 = vector.load %arg1[%c0_56, %c8_57, %c0_58, %c0_59] : memref<2x9x4x4xf32, #tpu.memory_space<vmem>>, vector<1x1x4x4xf32>
    %256 = vector.shape_cast %255 : vector<1x1x4x4xf32> to vector<4x4xf32>
    %257 = vector.extract_strided_slice %256 {offsets = [0, 0], sizes = [4, 1], strides = [1, 1]} : vector<4x4xf32> to vector<4x1xf32>
    %258 = vector.extract_strided_slice %254 {offsets = [0, 0], sizes = [1, 256], strides = [1, 1]} : vector<4x256xf32> to vector<1x256xf32>
    %259 = vector.broadcast %257 : vector<4x1xf32> to vector<4x256xf32>
    %260 = vector.broadcast %258 : vector<1x256xf32> to vector<4x256xf32>
    %261 = arith.mulf %259, %260 : vector<4x256xf32>
    %262 = arith.addf %251, %261 : vector<4x256xf32>
    %263 = vector.extract_strided_slice %256 {offsets = [0, 1], sizes = [4, 1], strides = [1, 1]} : vector<4x4xf32> to vector<4x1xf32>
    %264 = vector.extract_strided_slice %254 {offsets = [1, 0], sizes = [1, 256], strides = [1, 1]} : vector<4x256xf32> to vector<1x256xf32>
    %265 = vector.broadcast %263 : vector<4x1xf32> to vector<4x256xf32>
    %266 = vector.broadcast %264 : vector<1x256xf32> to vector<4x256xf32>
    %267 = arith.mulf %265, %266 : vector<4x256xf32>
    %268 = arith.addf %262, %267 : vector<4x256xf32>
    %269 = vector.extract_strided_slice %256 {offsets = [0, 2], sizes = [4, 1], strides = [1, 1]} : vector<4x4xf32> to vector<4x1xf32>
    %270 = vector.extract_strided_slice %254 {offsets = [2, 0], sizes = [1, 256], strides = [1, 1]} : vector<4x256xf32> to vector<1x256xf32>
    %271 = vector.broadcast %269 : vector<4x1xf32> to vector<4x256xf32>
    %272 = vector.broadcast %270 : vector<1x256xf32> to vector<4x256xf32>
    %273 = arith.mulf %271, %272 : vector<4x256xf32>
    %274 = arith.addf %268, %273 : vector<4x256xf32>
    %275 = vector.extract_strided_slice %256 {offsets = [0, 3], sizes = [4, 1], strides = [1, 1]} : vector<4x4xf32> to vector<4x1xf32>
    %276 = vector.extract_strided_slice %254 {offsets = [3, 0], sizes = [1, 256], strides = [1, 1]} : vector<4x256xf32> to vector<1x256xf32>
    %277 = vector.broadcast %275 : vector<4x1xf32> to vector<4x256xf32>
    %278 = vector.broadcast %276 : vector<1x256xf32> to vector<4x256xf32>
    %279 = arith.mulf %277, %278 : vector<4x256xf32>
    %280 = arith.addf %274, %279 : vector<4x256xf32>
    %c0_60 = arith.constant 0 : index
    %c0_61 = arith.constant 0 : index
    %c0_62 = arith.constant 0 : index
    %281 = vector.load %arg8[%c0_60, %c0_61, %c0_62] : memref<2x1x256xf32, #tpu.memory_space<vmem>>, vector<1x1x256xf32>
    %282 = vector.shape_cast %281 : vector<1x1x256xf32> to vector<1x256xf32>
    %283 = vector.broadcast %18 : f32 to vector<1x256xf32>
    %284 = arith.mulf %283, %282 : vector<1x256xf32>
    %285 = vector.broadcast %284 : vector<1x256xf32> to vector<4x256xf32>
    %286 = arith.addf %280, %285 : vector<4x256xf32>
    %287 = vector.broadcast %16 : vector<4x1xf32> to vector<4x256xf32>
    %288 = arith.addf %286, %287 : vector<4x256xf32>
    %cst_63 = arith.constant 0.000000e+00 : f32
    %289 = vector.broadcast %cst_63 : f32 to vector<4x256xf32>
    %290 = arith.cmpf oge, %288, %289 : vector<4x256xf32>
    %cst_64 = arith.constant 2.000000e-01 : f32
    %291 = vector.broadcast %cst_64 : f32 to vector<4x256xf32>
    %292 = arith.mulf %291, %288 : vector<4x256xf32>
    %293 = arith.select %290, %288, %292 : vector<4x256xi1>, vector<4x256xf32>
    %cst_65 = arith.constant 1.41421354 : f32
    %294 = vector.broadcast %cst_65 : f32 to vector<4x256xf32>
    %295 = arith.mulf %293, %294 : vector<4x256xf32>
    %cst_66 = arith.constant 0.000000e+00 : f32
    %296 = vector.broadcast %cst_66 : f32 to vector<4x256xf32>
    %c17_i32_67 = arith.constant 17 : i32
    %297 = tpu.dynamic_rotate %295 by %c17_i32_67 dim 1 : vector<4x256xf32>, i32 -> vector<4x256xf32>
    %298 = vector.broadcast %1 : vector<1x256xf32> to vector<4x256xf32>
    %299 = arith.mulf %297, %298 : vector<4x256xf32>
    %c0_68 = arith.constant 0 : index
    %c0_69 = arith.constant 0 : index
    %c0_70 = arith.constant 0 : index
    %c0_71 = arith.constant 0 : index
    %300 = vector.load %arg2[%c0_68, %c0_69, %c0_70, %c0_71] : memref<2x9x4x4xf32, #tpu.memory_space<vmem>>, vector<1x1x4x4xf32>
    %301 = vector.shape_cast %300 : vector<1x1x4x4xf32> to vector<4x4xf32>
    %302 = vector.extract_strided_slice %301 {offsets = [0, 0], sizes = [4, 1], strides = [1, 1]} : vector<4x4xf32> to vector<4x1xf32>
    %303 = vector.extract_strided_slice %299 {offsets = [0, 0], sizes = [1, 256], strides = [1, 1]} : vector<4x256xf32> to vector<1x256xf32>
    %304 = vector.broadcast %302 : vector<4x1xf32> to vector<4x256xf32>
    %305 = vector.broadcast %303 : vector<1x256xf32> to vector<4x256xf32>
    %306 = arith.mulf %304, %305 : vector<4x256xf32>
    %307 = arith.addf %296, %306 : vector<4x256xf32>
    %308 = vector.extract_strided_slice %301 {offsets = [0, 1], sizes = [4, 1], strides = [1, 1]} : vector<4x4xf32> to vector<4x1xf32>
    %309 = vector.extract_strided_slice %299 {offsets = [1, 0], sizes = [1, 256], strides = [1, 1]} : vector<4x256xf32> to vector<1x256xf32>
    %310 = vector.broadcast %308 : vector<4x1xf32> to vector<4x256xf32>
    %311 = vector.broadcast %309 : vector<1x256xf32> to vector<4x256xf32>
    %312 = arith.mulf %310, %311 : vector<4x256xf32>
    %313 = arith.addf %307, %312 : vector<4x256xf32>
    %314 = vector.extract_strided_slice %301 {offsets = [0, 2], sizes = [4, 1], strides = [1, 1]} : vector<4x4xf32> to vector<4x1xf32>
    %315 = vector.extract_strided_slice %299 {offsets = [2, 0], sizes = [1, 256], strides = [1, 1]} : vector<4x256xf32> to vector<1x256xf32>
    %316 = vector.broadcast %314 : vector<4x1xf32> to vector<4x256xf32>
    %317 = vector.broadcast %315 : vector<1x256xf32> to vector<4x256xf32>
    %318 = arith.mulf %316, %317 : vector<4x256xf32>
    %319 = arith.addf %313, %318 : vector<4x256xf32>
    %320 = vector.extract_strided_slice %301 {offsets = [0, 3], sizes = [4, 1], strides = [1, 1]} : vector<4x4xf32> to vector<4x1xf32>
    %321 = vector.extract_strided_slice %299 {offsets = [3, 0], sizes = [1, 256], strides = [1, 1]} : vector<4x256xf32> to vector<1x256xf32>
    %322 = vector.broadcast %320 : vector<4x1xf32> to vector<4x256xf32>
    %323 = vector.broadcast %321 : vector<1x256xf32> to vector<4x256xf32>
    %324 = arith.mulf %322, %323 : vector<4x256xf32>
    %325 = arith.addf %319, %324 : vector<4x256xf32>
    %c16_i32_72 = arith.constant 16 : i32
    %326 = tpu.dynamic_rotate %295 by %c16_i32_72 dim 1 : vector<4x256xf32>, i32 -> vector<4x256xf32>
    %327 = vector.broadcast %3 : vector<1x256xf32> to vector<4x256xf32>
    %328 = arith.mulf %326, %327 : vector<4x256xf32>
    %c0_73 = arith.constant 0 : index
    %c1_74 = arith.constant 1 : index
    %c0_75 = arith.constant 0 : index
    %c0_76 = arith.constant 0 : index
    %329 = vector.load %arg2[%c0_73, %c1_74, %c0_75, %c0_76] : memref<2x9x4x4xf32, #tpu.memory_space<vmem>>, vector<1x1x4x4xf32>
    %330 = vector.shape_cast %329 : vector<1x1x4x4xf32> to vector<4x4xf32>
    %331 = vector.extract_strided_slice %330 {offsets = [0, 0], sizes = [4, 1], strides = [1, 1]} : vector<4x4xf32> to vector<4x1xf32>
    %332 = vector.extract_strided_slice %328 {offsets = [0, 0], sizes = [1, 256], strides = [1, 1]} : vector<4x256xf32> to vector<1x256xf32>
    %333 = vector.broadcast %331 : vector<4x1xf32> to vector<4x256xf32>
    %334 = vector.broadcast %332 : vector<1x256xf32> to vector<4x256xf32>
    %335 = arith.mulf %333, %334 : vector<4x256xf32>
    %336 = arith.addf %325, %335 : vector<4x256xf32>
    %337 = vector.extract_strided_slice %330 {offsets = [0, 1], sizes = [4, 1], strides = [1, 1]} : vector<4x4xf32> to vector<4x1xf32>
    %338 = vector.extract_strided_slice %328 {offsets = [1, 0], sizes = [1, 256], strides = [1, 1]} : vector<4x256xf32> to vector<1x256xf32>
    %339 = vector.broadcast %337 : vector<4x1xf32> to vector<4x256xf32>
    %340 = vector.broadcast %338 : vector<1x256xf32> to vector<4x256xf32>
    %341 = arith.mulf %339, %340 : vector<4x256xf32>
    %342 = arith.addf %336, %341 : vector<4x256xf32>
    %343 = vector.extract_strided_slice %330 {offsets = [0, 2], sizes = [4, 1], strides = [1, 1]} : vector<4x4xf32> to vector<4x1xf32>
    %344 = vector.extract_strided_slice %328 {offsets = [2, 0], sizes = [1, 256], strides = [1, 1]} : vector<4x256xf32> to vector<1x256xf32>
    %345 = vector.broadcast %343 : vector<4x1xf32> to vector<4x256xf32>
    %346 = vector.broadcast %344 : vector<1x256xf32> to vector<4x256xf32>
    %347 = arith.mulf %345, %346 : vector<4x256xf32>
    %348 = arith.addf %342, %347 : vector<4x256xf32>
    %349 = vector.extract_strided_slice %330 {offsets = [0, 3], sizes = [4, 1], strides = [1, 1]} : vector<4x4xf32> to vector<4x1xf32>
    %350 = vector.extract_strided_slice %328 {offsets = [3, 0], sizes = [1, 256], strides = [1, 1]} : vector<4x256xf32> to vector<1x256xf32>
    %351 = vector.broadcast %349 : vector<4x1xf32> to vector<4x256xf32>
    %352 = vector.broadcast %350 : vector<1x256xf32> to vector<4x256xf32>
    %353 = arith.mulf %351, %352 : vector<4x256xf32>
    %354 = arith.addf %348, %353 : vector<4x256xf32>
    %c15_i32_77 = arith.constant 15 : i32
    %355 = tpu.dynamic_rotate %295 by %c15_i32_77 dim 1 : vector<4x256xf32>, i32 -> vector<4x256xf32>
    %356 = vector.broadcast %5 : vector<1x256xf32> to vector<4x256xf32>
    %357 = arith.mulf %355, %356 : vector<4x256xf32>
    %c0_78 = arith.constant 0 : index
    %c2_79 = arith.constant 2 : index
    %c0_80 = arith.constant 0 : index
    %c0_81 = arith.constant 0 : index
    %358 = vector.load %arg2[%c0_78, %c2_79, %c0_80, %c0_81] : memref<2x9x4x4xf32, #tpu.memory_space<vmem>>, vector<1x1x4x4xf32>
    %359 = vector.shape_cast %358 : vector<1x1x4x4xf32> to vector<4x4xf32>
    %360 = vector.extract_strided_slice %359 {offsets = [0, 0], sizes = [4, 1], strides = [1, 1]} : vector<4x4xf32> to vector<4x1xf32>
    %361 = vector.extract_strided_slice %357 {offsets = [0, 0], sizes = [1, 256], strides = [1, 1]} : vector<4x256xf32> to vector<1x256xf32>
    %362 = vector.broadcast %360 : vector<4x1xf32> to vector<4x256xf32>
    %363 = vector.broadcast %361 : vector<1x256xf32> to vector<4x256xf32>
    %364 = arith.mulf %362, %363 : vector<4x256xf32>
    %365 = arith.addf %354, %364 : vector<4x256xf32>
    %366 = vector.extract_strided_slice %359 {offsets = [0, 1], sizes = [4, 1], strides = [1, 1]} : vector<4x4xf32> to vector<4x1xf32>
    %367 = vector.extract_strided_slice %357 {offsets = [1, 0], sizes = [1, 256], strides = [1, 1]} : vector<4x256xf32> to vector<1x256xf32>
    %368 = vector.broadcast %366 : vector<4x1xf32> to vector<4x256xf32>
    %369 = vector.broadcast %367 : vector<1x256xf32> to vector<4x256xf32>
    %370 = arith.mulf %368, %369 : vector<4x256xf32>
    %371 = arith.addf %365, %370 : vector<4x256xf32>
    %372 = vector.extract_strided_slice %359 {offsets = [0, 2], sizes = [4, 1], strides = [1, 1]} : vector<4x4xf32> to vector<4x1xf32>
    %373 = vector.extract_strided_slice %357 {offsets = [2, 0], sizes = [1, 256], strides = [1, 1]} : vector<4x256xf32> to vector<1x256xf32>
    %374 = vector.broadcast %372 : vector<4x1xf32> to vector<4x256xf32>
    %375 = vector.broadcast %373 : vector<1x256xf32> to vector<4x256xf32>
    %376 = arith.mulf %374, %375 : vector<4x256xf32>
    %377 = arith.addf %371, %376 : vector<4x256xf32>
    %378 = vector.extract_strided_slice %359 {offsets = [0, 3], sizes = [4, 1], strides = [1, 1]} : vector<4x4xf32> to vector<4x1xf32>
    %379 = vector.extract_strided_slice %357 {offsets = [3, 0], sizes = [1, 256], strides = [1, 1]} : vector<4x256xf32> to vector<1x256xf32>
    %380 = vector.broadcast %378 : vector<4x1xf32> to vector<4x256xf32>
    %381 = vector.broadcast %379 : vector<1x256xf32> to vector<4x256xf32>
    %382 = arith.mulf %380, %381 : vector<4x256xf32>
    %383 = arith.addf %377, %382 : vector<4x256xf32>
    %c1_i32_82 = arith.constant 1 : i32
    %384 = tpu.dynamic_rotate %295 by %c1_i32_82 dim 1 : vector<4x256xf32>, i32 -> vector<4x256xf32>
    %385 = vector.broadcast %7 : vector<1x256xf32> to vector<4x256xf32>
    %386 = arith.mulf %384, %385 : vector<4x256xf32>
    %c0_83 = arith.constant 0 : index
    %c3_84 = arith.constant 3 : index
    %c0_85 = arith.constant 0 : index
    %c0_86 = arith.constant 0 : index
    %387 = vector.load %arg2[%c0_83, %c3_84, %c0_85, %c0_86] : memref<2x9x4x4xf32, #tpu.memory_space<vmem>>, vector<1x1x4x4xf32>
    %388 = vector.shape_cast %387 : vector<1x1x4x4xf32> to vector<4x4xf32>
    %389 = vector.extract_strided_slice %388 {offsets = [0, 0], sizes = [4, 1], strides = [1, 1]} : vector<4x4xf32> to vector<4x1xf32>
    %390 = vector.extract_strided_slice %386 {offsets = [0, 0], sizes = [1, 256], strides = [1, 1]} : vector<4x256xf32> to vector<1x256xf32>
    %391 = vector.broadcast %389 : vector<4x1xf32> to vector<4x256xf32>
    %392 = vector.broadcast %390 : vector<1x256xf32> to vector<4x256xf32>
    %393 = arith.mulf %391, %392 : vector<4x256xf32>
    %394 = arith.addf %383, %393 : vector<4x256xf32>
    %395 = vector.extract_strided_slice %388 {offsets = [0, 1], sizes = [4, 1], strides = [1, 1]} : vector<4x4xf32> to vector<4x1xf32>
    %396 = vector.extract_strided_slice %386 {offsets = [1, 0], sizes = [1, 256], strides = [1, 1]} : vector<4x256xf32> to vector<1x256xf32>
    %397 = vector.broadcast %395 : vector<4x1xf32> to vector<4x256xf32>
    %398 = vector.broadcast %396 : vector<1x256xf32> to vector<4x256xf32>
    %399 = arith.mulf %397, %398 : vector<4x256xf32>
    %400 = arith.addf %394, %399 : vector<4x256xf32>
    %401 = vector.extract_strided_slice %388 {offsets = [0, 2], sizes = [4, 1], strides = [1, 1]} : vector<4x4xf32> to vector<4x1xf32>
    %402 = vector.extract_strided_slice %386 {offsets = [2, 0], sizes = [1, 256], strides = [1, 1]} : vector<4x256xf32> to vector<1x256xf32>
    %403 = vector.broadcast %401 : vector<4x1xf32> to vector<4x256xf32>
    %404 = vector.broadcast %402 : vector<1x256xf32> to vector<4x256xf32>
    %405 = arith.mulf %403, %404 : vector<4x256xf32>
    %406 = arith.addf %400, %405 : vector<4x256xf32>
    %407 = vector.extract_strided_slice %388 {offsets = [0, 3], sizes = [4, 1], strides = [1, 1]} : vector<4x4xf32> to vector<4x1xf32>
    %408 = vector.extract_strided_slice %386 {offsets = [3, 0], sizes = [1, 256], strides = [1, 1]} : vector<4x256xf32> to vector<1x256xf32>
    %409 = vector.broadcast %407 : vector<4x1xf32> to vector<4x256xf32>
    %410 = vector.broadcast %408 : vector<1x256xf32> to vector<4x256xf32>
    %411 = arith.mulf %409, %410 : vector<4x256xf32>
    %412 = arith.addf %406, %411 : vector<4x256xf32>
    %c0_87 = arith.constant 0 : index
    %c4_88 = arith.constant 4 : index
    %c0_89 = arith.constant 0 : index
    %c0_90 = arith.constant 0 : index
    %413 = vector.load %arg2[%c0_87, %c4_88, %c0_89, %c0_90] : memref<2x9x4x4xf32, #tpu.memory_space<vmem>>, vector<1x1x4x4xf32>
    %414 = vector.shape_cast %413 : vector<1x1x4x4xf32> to vector<4x4xf32>
    %415 = vector.extract_strided_slice %414 {offsets = [0, 0], sizes = [4, 1], strides = [1, 1]} : vector<4x4xf32> to vector<4x1xf32>
    %416 = vector.extract_strided_slice %295 {offsets = [0, 0], sizes = [1, 256], strides = [1, 1]} : vector<4x256xf32> to vector<1x256xf32>
    %417 = vector.broadcast %415 : vector<4x1xf32> to vector<4x256xf32>
    %418 = vector.broadcast %416 : vector<1x256xf32> to vector<4x256xf32>
    %419 = arith.mulf %417, %418 : vector<4x256xf32>
    %420 = arith.addf %412, %419 : vector<4x256xf32>
    %421 = vector.extract_strided_slice %414 {offsets = [0, 1], sizes = [4, 1], strides = [1, 1]} : vector<4x4xf32> to vector<4x1xf32>
    %422 = vector.extract_strided_slice %295 {offsets = [1, 0], sizes = [1, 256], strides = [1, 1]} : vector<4x256xf32> to vector<1x256xf32>
    %423 = vector.broadcast %421 : vector<4x1xf32> to vector<4x256xf32>
    %424 = vector.broadcast %422 : vector<1x256xf32> to vector<4x256xf32>
    %425 = arith.mulf %423, %424 : vector<4x256xf32>
    %426 = arith.addf %420, %425 : vector<4x256xf32>
    %427 = vector.extract_strided_slice %414 {offsets = [0, 2], sizes = [4, 1], strides = [1, 1]} : vector<4x4xf32> to vector<4x1xf32>
    %428 = vector.extract_strided_slice %295 {offsets = [2, 0], sizes = [1, 256], strides = [1, 1]} : vector<4x256xf32> to vector<1x256xf32>
    %429 = vector.broadcast %427 : vector<4x1xf32> to vector<4x256xf32>
    %430 = vector.broadcast %428 : vector<1x256xf32> to vector<4x256xf32>
    %431 = arith.mulf %429, %430 : vector<4x256xf32>
    %432 = arith.addf %426, %431 : vector<4x256xf32>
    %433 = vector.extract_strided_slice %414 {offsets = [0, 3], sizes = [4, 1], strides = [1, 1]} : vector<4x4xf32> to vector<4x1xf32>
    %434 = vector.extract_strided_slice %295 {offsets = [3, 0], sizes = [1, 256], strides = [1, 1]} : vector<4x256xf32> to vector<1x256xf32>
    %435 = vector.broadcast %433 : vector<4x1xf32> to vector<4x256xf32>
    %436 = vector.broadcast %434 : vector<1x256xf32> to vector<4x256xf32>
    %437 = arith.mulf %435, %436 : vector<4x256xf32>
    %438 = arith.addf %432, %437 : vector<4x256xf32>
    %c255_i32_91 = arith.constant 255 : i32
    %439 = tpu.dynamic_rotate %295 by %c255_i32_91 dim 1 : vector<4x256xf32>, i32 -> vector<4x256xf32>
    %440 = vector.broadcast %9 : vector<1x256xf32> to vector<4x256xf32>
    %441 = arith.mulf %439, %440 : vector<4x256xf32>
    %c0_92 = arith.constant 0 : index
    %c5_93 = arith.constant 5 : index
    %c0_94 = arith.constant 0 : index
    %c0_95 = arith.constant 0 : index
    %442 = vector.load %arg2[%c0_92, %c5_93, %c0_94, %c0_95] : memref<2x9x4x4xf32, #tpu.memory_space<vmem>>, vector<1x1x4x4xf32>
    %443 = vector.shape_cast %442 : vector<1x1x4x4xf32> to vector<4x4xf32>
    %444 = vector.extract_strided_slice %443 {offsets = [0, 0], sizes = [4, 1], strides = [1, 1]} : vector<4x4xf32> to vector<4x1xf32>
    %445 = vector.extract_strided_slice %441 {offsets = [0, 0], sizes = [1, 256], strides = [1, 1]} : vector<4x256xf32> to vector<1x256xf32>
    %446 = vector.broadcast %444 : vector<4x1xf32> to vector<4x256xf32>
    %447 = vector.broadcast %445 : vector<1x256xf32> to vector<4x256xf32>
    %448 = arith.mulf %446, %447 : vector<4x256xf32>
    %449 = arith.addf %438, %448 : vector<4x256xf32>
    %450 = vector.extract_strided_slice %443 {offsets = [0, 1], sizes = [4, 1], strides = [1, 1]} : vector<4x4xf32> to vector<4x1xf32>
    %451 = vector.extract_strided_slice %441 {offsets = [1, 0], sizes = [1, 256], strides = [1, 1]} : vector<4x256xf32> to vector<1x256xf32>
    %452 = vector.broadcast %450 : vector<4x1xf32> to vector<4x256xf32>
    %453 = vector.broadcast %451 : vector<1x256xf32> to vector<4x256xf32>
    %454 = arith.mulf %452, %453 : vector<4x256xf32>
    %455 = arith.addf %449, %454 : vector<4x256xf32>
    %456 = vector.extract_strided_slice %443 {offsets = [0, 2], sizes = [4, 1], strides = [1, 1]} : vector<4x4xf32> to vector<4x1xf32>
    %457 = vector.extract_strided_slice %441 {offsets = [2, 0], sizes = [1, 256], strides = [1, 1]} : vector<4x256xf32> to vector<1x256xf32>
    %458 = vector.broadcast %456 : vector<4x1xf32> to vector<4x256xf32>
    %459 = vector.broadcast %457 : vector<1x256xf32> to vector<4x256xf32>
    %460 = arith.mulf %458, %459 : vector<4x256xf32>
    %461 = arith.addf %455, %460 : vector<4x256xf32>
    %462 = vector.extract_strided_slice %443 {offsets = [0, 3], sizes = [4, 1], strides = [1, 1]} : vector<4x4xf32> to vector<4x1xf32>
    %463 = vector.extract_strided_slice %441 {offsets = [3, 0], sizes = [1, 256], strides = [1, 1]} : vector<4x256xf32> to vector<1x256xf32>
    %464 = vector.broadcast %462 : vector<4x1xf32> to vector<4x256xf32>
    %465 = vector.broadcast %463 : vector<1x256xf32> to vector<4x256xf32>
    %466 = arith.mulf %464, %465 : vector<4x256xf32>
    %467 = arith.addf %461, %466 : vector<4x256xf32>
    %c241_i32_96 = arith.constant 241 : i32
    %468 = tpu.dynamic_rotate %295 by %c241_i32_96 dim 1 : vector<4x256xf32>, i32 -> vector<4x256xf32>
    %469 = vector.broadcast %11 : vector<1x256xf32> to vector<4x256xf32>
    %470 = arith.mulf %468, %469 : vector<4x256xf32>
    %c0_97 = arith.constant 0 : index
    %c6_98 = arith.constant 6 : index
    %c0_99 = arith.constant 0 : index
    %c0_100 = arith.constant 0 : index
    %471 = vector.load %arg2[%c0_97, %c6_98, %c0_99, %c0_100] : memref<2x9x4x4xf32, #tpu.memory_space<vmem>>, vector<1x1x4x4xf32>
    %472 = vector.shape_cast %471 : vector<1x1x4x4xf32> to vector<4x4xf32>
    %473 = vector.extract_strided_slice %472 {offsets = [0, 0], sizes = [4, 1], strides = [1, 1]} : vector<4x4xf32> to vector<4x1xf32>
    %474 = vector.extract_strided_slice %470 {offsets = [0, 0], sizes = [1, 256], strides = [1, 1]} : vector<4x256xf32> to vector<1x256xf32>
    %475 = vector.broadcast %473 : vector<4x1xf32> to vector<4x256xf32>
    %476 = vector.broadcast %474 : vector<1x256xf32> to vector<4x256xf32>
    %477 = arith.mulf %475, %476 : vector<4x256xf32>
    %478 = arith.addf %467, %477 : vector<4x256xf32>
    %479 = vector.extract_strided_slice %472 {offsets = [0, 1], sizes = [4, 1], strides = [1, 1]} : vector<4x4xf32> to vector<4x1xf32>
    %480 = vector.extract_strided_slice %470 {offsets = [1, 0], sizes = [1, 256], strides = [1, 1]} : vector<4x256xf32> to vector<1x256xf32>
    %481 = vector.broadcast %479 : vector<4x1xf32> to vector<4x256xf32>
    %482 = vector.broadcast %480 : vector<1x256xf32> to vector<4x256xf32>
    %483 = arith.mulf %481, %482 : vector<4x256xf32>
    %484 = arith.addf %478, %483 : vector<4x256xf32>
    %485 = vector.extract_strided_slice %472 {offsets = [0, 2], sizes = [4, 1], strides = [1, 1]} : vector<4x4xf32> to vector<4x1xf32>
    %486 = vector.extract_strided_slice %470 {offsets = [2, 0], sizes = [1, 256], strides = [1, 1]} : vector<4x256xf32> to vector<1x256xf32>
    %487 = vector.broadcast %485 : vector<4x1xf32> to vector<4x256xf32>
    %488 = vector.broadcast %486 : vector<1x256xf32> to vector<4x256xf32>
    %489 = arith.mulf %487, %488 : vector<4x256xf32>
    %490 = arith.addf %484, %489 : vector<4x256xf32>
    %491 = vector.extract_strided_slice %472 {offsets = [0, 3], sizes = [4, 1], strides = [1, 1]} : vector<4x4xf32> to vector<4x1xf32>
    %492 = vector.extract_strided_slice %470 {offsets = [3, 0], sizes = [1, 256], strides = [1, 1]} : vector<4x256xf32> to vector<1x256xf32>
    %493 = vector.broadcast %491 : vector<4x1xf32> to vector<4x256xf32>
    %494 = vector.broadcast %492 : vector<1x256xf32> to vector<4x256xf32>
    %495 = arith.mulf %493, %494 : vector<4x256xf32>
    %496 = arith.addf %490, %495 : vector<4x256xf32>
    %c240_i32_101 = arith.constant 240 : i32
    %497 = tpu.dynamic_rotate %295 by %c240_i32_101 dim 1 : vector<4x256xf32>, i32 -> vector<4x256xf32>
    %498 = vector.broadcast %13 : vector<1x256xf32> to vector<4x256xf32>
    %499 = arith.mulf %497, %498 : vector<4x256xf32>
    %c0_102 = arith.constant 0 : index
    %c7_103 = arith.constant 7 : index
    %c0_104 = arith.constant 0 : index
    %c0_105 = arith.constant 0 : index
    %500 = vector.load %arg2[%c0_102, %c7_103, %c0_104, %c0_105] : memref<2x9x4x4xf32, #tpu.memory_space<vmem>>, vector<1x1x4x4xf32>
    %501 = vector.shape_cast %500 : vector<1x1x4x4xf32> to vector<4x4xf32>
    %502 = vector.extract_strided_slice %501 {offsets = [0, 0], sizes = [4, 1], strides = [1, 1]} : vector<4x4xf32> to vector<4x1xf32>
    %503 = vector.extract_strided_slice %499 {offsets = [0, 0], sizes = [1, 256], strides = [1, 1]} : vector<4x256xf32> to vector<1x256xf32>
    %504 = vector.broadcast %502 : vector<4x1xf32> to vector<4x256xf32>
    %505 = vector.broadcast %503 : vector<1x256xf32> to vector<4x256xf32>
    %506 = arith.mulf %504, %505 : vector<4x256xf32>
    %507 = arith.addf %496, %506 : vector<4x256xf32>
    %508 = vector.extract_strided_slice %501 {offsets = [0, 1], sizes = [4, 1], strides = [1, 1]} : vector<4x4xf32> to vector<4x1xf32>
    %509 = vector.extract_strided_slice %499 {offsets = [1, 0], sizes = [1, 256], strides = [1, 1]} : vector<4x256xf32> to vector<1x256xf32>
    %510 = vector.broadcast %508 : vector<4x1xf32> to vector<4x256xf32>
    %511 = vector.broadcast %509 : vector<1x256xf32> to vector<4x256xf32>
    %512 = arith.mulf %510, %511 : vector<4x256xf32>
    %513 = arith.addf %507, %512 : vector<4x256xf32>
    %514 = vector.extract_strided_slice %501 {offsets = [0, 2], sizes = [4, 1], strides = [1, 1]} : vector<4x4xf32> to vector<4x1xf32>
    %515 = vector.extract_strided_slice %499 {offsets = [2, 0], sizes = [1, 256], strides = [1, 1]} : vector<4x256xf32> to vector<1x256xf32>
    %516 = vector.broadcast %514 : vector<4x1xf32> to vector<4x256xf32>
    %517 = vector.broadcast %515 : vector<1x256xf32> to vector<4x256xf32>
    %518 = arith.mulf %516, %517 : vector<4x256xf32>
    %519 = arith.addf %513, %518 : vector<4x256xf32>
    %520 = vector.extract_strided_slice %501 {offsets = [0, 3], sizes = [4, 1], strides = [1, 1]} : vector<4x4xf32> to vector<4x1xf32>
    %521 = vector.extract_strided_slice %499 {offsets = [3, 0], sizes = [1, 256], strides = [1, 1]} : vector<4x256xf32> to vector<1x256xf32>
    %522 = vector.broadcast %520 : vector<4x1xf32> to vector<4x256xf32>
    %523 = vector.broadcast %521 : vector<1x256xf32> to vector<4x256xf32>
    %524 = arith.mulf %522, %523 : vector<4x256xf32>
    %525 = arith.addf %519, %524 : vector<4x256xf32>
    %c239_i32_106 = arith.constant 239 : i32
    %526 = tpu.dynamic_rotate %295 by %c239_i32_106 dim 1 : vector<4x256xf32>, i32 -> vector<4x256xf32>
    %527 = vector.broadcast %15 : vector<1x256xf32> to vector<4x256xf32>
    %528 = arith.mulf %526, %527 : vector<4x256xf32>
    %c0_107 = arith.constant 0 : index
    %c8_108 = arith.constant 8 : index
    %c0_109 = arith.constant 0 : index
    %c0_110 = arith.constant 0 : index
    %529 = vector.load %arg2[%c0_107, %c8_108, %c0_109, %c0_110] : memref<2x9x4x4xf32, #tpu.memory_space<vmem>>, vector<1x1x4x4xf32>
    %530 = vector.shape_cast %529 : vector<1x1x4x4xf32> to vector<4x4xf32>
    %531 = vector.extract_strided_slice %530 {offsets = [0, 0], sizes = [4, 1], strides = [1, 1]} : vector<4x4xf32> to vector<4x1xf32>
    %532 = vector.extract_strided_slice %528 {offsets = [0, 0], sizes = [1, 256], strides = [1, 1]} : vector<4x256xf32> to vector<1x256xf32>
    %533 = vector.broadcast %531 : vector<4x1xf32> to vector<4x256xf32>
    %534 = vector.broadcast %532 : vector<1x256xf32> to vector<4x256xf32>
    %535 = arith.mulf %533, %534 : vector<4x256xf32>
    %536 = arith.addf %525, %535 : vector<4x256xf32>
    %537 = vector.extract_strided_slice %530 {offsets = [0, 1], sizes = [4, 1], strides = [1, 1]} : vector<4x4xf32> to vector<4x1xf32>
    %538 = vector.extract_strided_slice %528 {offsets = [1, 0], sizes = [1, 256], strides = [1, 1]} : vector<4x256xf32> to vector<1x256xf32>
    %539 = vector.broadcast %537 : vector<4x1xf32> to vector<4x256xf32>
    %540 = vector.broadcast %538 : vector<1x256xf32> to vector<4x256xf32>
    %541 = arith.mulf %539, %540 : vector<4x256xf32>
    %542 = arith.addf %536, %541 : vector<4x256xf32>
    %543 = vector.extract_strided_slice %530 {offsets = [0, 2], sizes = [4, 1], strides = [1, 1]} : vector<4x4xf32> to vector<4x1xf32>
    %544 = vector.extract_strided_slice %528 {offsets = [2, 0], sizes = [1, 256], strides = [1, 1]} : vector<4x256xf32> to vector<1x256xf32>
    %545 = vector.broadcast %543 : vector<4x1xf32> to vector<4x256xf32>
    %546 = vector.broadcast %544 : vector<1x256xf32> to vector<4x256xf32>
    %547 = arith.mulf %545, %546 : vector<4x256xf32>
    %548 = arith.addf %542, %547 : vector<4x256xf32>
    %549 = vector.extract_strided_slice %530 {offsets = [0, 3], sizes = [4, 1], strides = [1, 1]} : vector<4x4xf32> to vector<4x1xf32>
    %550 = vector.extract_strided_slice %528 {offsets = [3, 0], sizes = [1, 256], strides = [1, 1]} : vector<4x256xf32> to vector<1x256xf32>
    %551 = vector.broadcast %549 : vector<4x1xf32> to vector<4x256xf32>
    %552 = vector.broadcast %550 : vector<1x256xf32> to vector<4x256xf32>
    %553 = arith.mulf %551, %552 : vector<4x256xf32>
    %554 = arith.addf %548, %553 : vector<4x256xf32>
    %c0_111 = arith.constant 0 : index
    %c0_112 = arith.constant 0 : index
    %c0_113 = arith.constant 0 : index
    %555 = vector.load %arg9[%c0_111, %c0_112, %c0_113] : memref<2x1x256xf32, #tpu.memory_space<vmem>>, vector<1x1x256xf32>
    %556 = vector.shape_cast %555 : vector<1x1x256xf32> to vector<1x256xf32>
    %557 = vector.broadcast %19 : f32 to vector<1x256xf32>
    %558 = arith.mulf %557, %556 : vector<1x256xf32>
    %559 = vector.broadcast %558 : vector<1x256xf32> to vector<4x256xf32>
    %560 = arith.addf %554, %559 : vector<4x256xf32>
    %561 = vector.broadcast %17 : vector<4x1xf32> to vector<4x256xf32>
    %562 = arith.addf %560, %561 : vector<4x256xf32>
    %cst_114 = arith.constant 0.000000e+00 : f32
    %563 = vector.broadcast %cst_114 : f32 to vector<4x256xf32>
    %564 = arith.cmpf oge, %562, %563 : vector<4x256xf32>
    %cst_115 = arith.constant 2.000000e-01 : f32
    %565 = vector.broadcast %cst_115 : f32 to vector<4x256xf32>
    %566 = arith.mulf %565, %562 : vector<4x256xf32>
    %567 = arith.select %564, %562, %566 : vector<4x256xi1>, vector<4x256xf32>
    %cst_116 = arith.constant 1.41421354 : f32
    %568 = vector.broadcast %cst_116 : f32 to vector<4x256xf32>
    %569 = arith.mulf %567, %568 : vector<4x256xf32>
    %c0_117 = arith.constant 0 : index
    %c0_118 = arith.constant 0 : index
    %c0_119 = arith.constant 0 : index
    %570 = vector.load %arg3[%c0_117, %c0_118, %c0_119] : memref<2x1x4xf32, #tpu.memory_space<vmem>>, vector<1x1x4xf32>
    %571 = vector.shape_cast %570 : vector<1x1x4xf32> to vector<1x4xf32>
    %cst_120 = arith.constant 0.000000e+00 : f32
    %572 = vector.broadcast %cst_120 : f32 to vector<1x256xf32>
    %573 = vector.extract_strided_slice %571 {offsets = [0, 0], sizes = [1, 1], strides = [1, 1]} : vector<1x4xf32> to vector<1x1xf32>
    %574 = vector.extract_strided_slice %569 {offsets = [0, 0], sizes = [1, 256], strides = [1, 1]} : vector<4x256xf32> to vector<1x256xf32>
    %575 = vector.broadcast %573 : vector<1x1xf32> to vector<1x256xf32>
    %576 = arith.mulf %575, %574 : vector<1x256xf32>
    %577 = arith.addf %572, %576 : vector<1x256xf32>
    %578 = vector.extract_strided_slice %571 {offsets = [0, 1], sizes = [1, 1], strides = [1, 1]} : vector<1x4xf32> to vector<1x1xf32>
    %579 = vector.extract_strided_slice %569 {offsets = [1, 0], sizes = [1, 256], strides = [1, 1]} : vector<4x256xf32> to vector<1x256xf32>
    %580 = vector.broadcast %578 : vector<1x1xf32> to vector<1x256xf32>
    %581 = arith.mulf %580, %579 : vector<1x256xf32>
    %582 = arith.addf %577, %581 : vector<1x256xf32>
    %583 = vector.extract_strided_slice %571 {offsets = [0, 2], sizes = [1, 1], strides = [1, 1]} : vector<1x4xf32> to vector<1x1xf32>
    %584 = vector.extract_strided_slice %569 {offsets = [2, 0], sizes = [1, 256], strides = [1, 1]} : vector<4x256xf32> to vector<1x256xf32>
    %585 = vector.broadcast %583 : vector<1x1xf32> to vector<1x256xf32>
    %586 = arith.mulf %585, %584 : vector<1x256xf32>
    %587 = arith.addf %582, %586 : vector<1x256xf32>
    %588 = vector.extract_strided_slice %571 {offsets = [0, 3], sizes = [1, 1], strides = [1, 1]} : vector<1x4xf32> to vector<1x1xf32>
    %589 = vector.extract_strided_slice %569 {offsets = [3, 0], sizes = [1, 256], strides = [1, 1]} : vector<4x256xf32> to vector<1x256xf32>
    %590 = vector.broadcast %588 : vector<1x1xf32> to vector<1x256xf32>
    %591 = arith.mulf %590, %589 : vector<1x256xf32>
    %592 = arith.addf %587, %591 : vector<1x256xf32>
    %c0_121 = arith.constant 0 : index
    %c0_122 = arith.constant 0 : index
    %c0_123 = arith.constant 0 : index
    %593 = vector.load %arg10[%c0_121, %c0_122, %c0_123] : memref<2x1x256xf32, #tpu.memory_space<vmem>>, vector<1x1x256xf32>
    %594 = vector.shape_cast %593 : vector<1x1x256xf32> to vector<1x256xf32>
    %595 = vector.shape_cast %592 : vector<1x256xf32> to vector<1x1x256xf32>
    tpu.vector_store %arg10[%c0_121, %c0_122, %c0_123], %595 {strides = array<i32>} : memref<2x1x256xf32, #tpu.memory_space<vmem>>, vector<1x1x256xf32>,
    %c1_124 = arith.constant 1 : index
    %c0_125 = arith.constant 0 : index
    %c0_126 = arith.constant 0 : index
    %596 = vector.load %arg7[%c1_124, %c0_125, %c0_126] : memref<2x4x256xf32, #tpu.memory_space<vmem>>, vector<1x4x256xf32>
    %597 = vector.shape_cast %596 : vector<1x4x256xf32> to vector<4x256xf32>
    %cst_127 = arith.constant 0.000000e+00 : f32
    %598 = vector.broadcast %cst_127 : f32 to vector<4x256xf32>
    %c17_i32_128 = arith.constant 17 : i32
    %599 = tpu.dynamic_rotate %597 by %c17_i32_128 dim 1 : vector<4x256xf32>, i32 -> vector<4x256xf32>
    %600 = vector.broadcast %1 : vector<1x256xf32> to vector<4x256xf32>
    %601 = arith.mulf %599, %600 : vector<4x256xf32>
    %c1_129 = arith.constant 1 : index
    %c0_130 = arith.constant 0 : index
    %c0_131 = arith.constant 0 : index
    %c0_132 = arith.constant 0 : index
    %602 = vector.load %arg1[%c1_129, %c0_130, %c0_131, %c0_132] : memref<2x9x4x4xf32, #tpu.memory_space<vmem>>, vector<1x1x4x4xf32>
    %603 = vector.shape_cast %602 : vector<1x1x4x4xf32> to vector<4x4xf32>
    %604 = vector.extract_strided_slice %603 {offsets = [0, 0], sizes = [4, 1], strides = [1, 1]} : vector<4x4xf32> to vector<4x1xf32>
    %605 = vector.extract_strided_slice %601 {offsets = [0, 0], sizes = [1, 256], strides = [1, 1]} : vector<4x256xf32> to vector<1x256xf32>
    %606 = vector.broadcast %604 : vector<4x1xf32> to vector<4x256xf32>
    %607 = vector.broadcast %605 : vector<1x256xf32> to vector<4x256xf32>
    %608 = arith.mulf %606, %607 : vector<4x256xf32>
    %609 = arith.addf %598, %608 : vector<4x256xf32>
    %610 = vector.extract_strided_slice %603 {offsets = [0, 1], sizes = [4, 1], strides = [1, 1]} : vector<4x4xf32> to vector<4x1xf32>
    %611 = vector.extract_strided_slice %601 {offsets = [1, 0], sizes = [1, 256], strides = [1, 1]} : vector<4x256xf32> to vector<1x256xf32>
    %612 = vector.broadcast %610 : vector<4x1xf32> to vector<4x256xf32>
    %613 = vector.broadcast %611 : vector<1x256xf32> to vector<4x256xf32>
    %614 = arith.mulf %612, %613 : vector<4x256xf32>
    %615 = arith.addf %609, %614 : vector<4x256xf32>
    %616 = vector.extract_strided_slice %603 {offsets = [0, 2], sizes = [4, 1], strides = [1, 1]} : vector<4x4xf32> to vector<4x1xf32>
    %617 = vector.extract_strided_slice %601 {offsets = [2, 0], sizes = [1, 256], strides = [1, 1]} : vector<4x256xf32> to vector<1x256xf32>
    %618 = vector.broadcast %616 : vector<4x1xf32> to vector<4x256xf32>
    %619 = vector.broadcast %617 : vector<1x256xf32> to vector<4x256xf32>
    %620 = arith.mulf %618, %619 : vector<4x256xf32>
    %621 = arith.addf %615, %620 : vector<4x256xf32>
    %622 = vector.extract_strided_slice %603 {offsets = [0, 3], sizes = [4, 1], strides = [1, 1]} : vector<4x4xf32> to vector<4x1xf32>
    %623 = vector.extract_strided_slice %601 {offsets = [3, 0], sizes = [1, 256], strides = [1, 1]} : vector<4x256xf32> to vector<1x256xf32>
    %624 = vector.broadcast %622 : vector<4x1xf32> to vector<4x256xf32>
    %625 = vector.broadcast %623 : vector<1x256xf32> to vector<4x256xf32>
    %626 = arith.mulf %624, %625 : vector<4x256xf32>
    %627 = arith.addf %621, %626 : vector<4x256xf32>
    %c16_i32_133 = arith.constant 16 : i32
    %628 = tpu.dynamic_rotate %597 by %c16_i32_133 dim 1 : vector<4x256xf32>, i32 -> vector<4x256xf32>
    %629 = vector.broadcast %3 : vector<1x256xf32> to vector<4x256xf32>
    %630 = arith.mulf %628, %629 : vector<4x256xf32>
    %c1_134 = arith.constant 1 : index
    %c1_135 = arith.constant 1 : index
    %c0_136 = arith.constant 0 : index
    %c0_137 = arith.constant 0 : index
    %631 = vector.load %arg1[%c1_134, %c1_135, %c0_136, %c0_137] : memref<2x9x4x4xf32, #tpu.memory_space<vmem>>, vector<1x1x4x4xf32>
    %632 = vector.shape_cast %631 : vector<1x1x4x4xf32> to vector<4x4xf32>
    %633 = vector.extract_strided_slice %632 {offsets = [0, 0], sizes = [4, 1], strides = [1, 1]} : vector<4x4xf32> to vector<4x1xf32>
    %634 = vector.extract_strided_slice %630 {offsets = [0, 0], sizes = [1, 256], strides = [1, 1]} : vector<4x256xf32> to vector<1x256xf32>
    %635 = vector.broadcast %633 : vector<4x1xf32> to vector<4x256xf32>
    %636 = vector.broadcast %634 : vector<1x256xf32> to vector<4x256xf32>
    %637 = arith.mulf %635, %636 : vector<4x256xf32>
    %638 = arith.addf %627, %637 : vector<4x256xf32>
    %639 = vector.extract_strided_slice %632 {offsets = [0, 1], sizes = [4, 1], strides = [1, 1]} : vector<4x4xf32> to vector<4x1xf32>
    %640 = vector.extract_strided_slice %630 {offsets = [1, 0], sizes = [1, 256], strides = [1, 1]} : vector<4x256xf32> to vector<1x256xf32>
    %641 = vector.broadcast %639 : vector<4x1xf32> to vector<4x256xf32>
    %642 = vector.broadcast %640 : vector<1x256xf32> to vector<4x256xf32>
    %643 = arith.mulf %641, %642 : vector<4x256xf32>
    %644 = arith.addf %638, %643 : vector<4x256xf32>
    %645 = vector.extract_strided_slice %632 {offsets = [0, 2], sizes = [4, 1], strides = [1, 1]} : vector<4x4xf32> to vector<4x1xf32>
    %646 = vector.extract_strided_slice %630 {offsets = [2, 0], sizes = [1, 256], strides = [1, 1]} : vector<4x256xf32> to vector<1x256xf32>
    %647 = vector.broadcast %645 : vector<4x1xf32> to vector<4x256xf32>
    %648 = vector.broadcast %646 : vector<1x256xf32> to vector<4x256xf32>
    %649 = arith.mulf %647, %648 : vector<4x256xf32>
    %650 = arith.addf %644, %649 : vector<4x256xf32>
    %651 = vector.extract_strided_slice %632 {offsets = [0, 3], sizes = [4, 1], strides = [1, 1]} : vector<4x4xf32> to vector<4x1xf32>
    %652 = vector.extract_strided_slice %630 {offsets = [3, 0], sizes = [1, 256], strides = [1, 1]} : vector<4x256xf32> to vector<1x256xf32>
    %653 = vector.broadcast %651 : vector<4x1xf32> to vector<4x256xf32>
    %654 = vector.broadcast %652 : vector<1x256xf32> to vector<4x256xf32>
    %655 = arith.mulf %653, %654 : vector<4x256xf32>
    %656 = arith.addf %650, %655 : vector<4x256xf32>
    %c15_i32_138 = arith.constant 15 : i32
    %657 = tpu.dynamic_rotate %597 by %c15_i32_138 dim 1 : vector<4x256xf32>, i32 -> vector<4x256xf32>
    %658 = vector.broadcast %5 : vector<1x256xf32> to vector<4x256xf32>
    %659 = arith.mulf %657, %658 : vector<4x256xf32>
    %c1_139 = arith.constant 1 : index
    %c2_140 = arith.constant 2 : index
    %c0_141 = arith.constant 0 : index
    %c0_142 = arith.constant 0 : index
    %660 = vector.load %arg1[%c1_139, %c2_140, %c0_141, %c0_142] : memref<2x9x4x4xf32, #tpu.memory_space<vmem>>, vector<1x1x4x4xf32>
    %661 = vector.shape_cast %660 : vector<1x1x4x4xf32> to vector<4x4xf32>
    %662 = vector.extract_strided_slice %661 {offsets = [0, 0], sizes = [4, 1], strides = [1, 1]} : vector<4x4xf32> to vector<4x1xf32>
    %663 = vector.extract_strided_slice %659 {offsets = [0, 0], sizes = [1, 256], strides = [1, 1]} : vector<4x256xf32> to vector<1x256xf32>
    %664 = vector.broadcast %662 : vector<4x1xf32> to vector<4x256xf32>
    %665 = vector.broadcast %663 : vector<1x256xf32> to vector<4x256xf32>
    %666 = arith.mulf %664, %665 : vector<4x256xf32>
    %667 = arith.addf %656, %666 : vector<4x256xf32>
    %668 = vector.extract_strided_slice %661 {offsets = [0, 1], sizes = [4, 1], strides = [1, 1]} : vector<4x4xf32> to vector<4x1xf32>
    %669 = vector.extract_strided_slice %659 {offsets = [1, 0], sizes = [1, 256], strides = [1, 1]} : vector<4x256xf32> to vector<1x256xf32>
    %670 = vector.broadcast %668 : vector<4x1xf32> to vector<4x256xf32>
    %671 = vector.broadcast %669 : vector<1x256xf32> to vector<4x256xf32>
    %672 = arith.mulf %670, %671 : vector<4x256xf32>
    %673 = arith.addf %667, %672 : vector<4x256xf32>
    %674 = vector.extract_strided_slice %661 {offsets = [0, 2], sizes = [4, 1], strides = [1, 1]} : vector<4x4xf32> to vector<4x1xf32>
    %675 = vector.extract_strided_slice %659 {offsets = [2, 0], sizes = [1, 256], strides = [1, 1]} : vector<4x256xf32> to vector<1x256xf32>
    %676 = vector.broadcast %674 : vector<4x1xf32> to vector<4x256xf32>
    %677 = vector.broadcast %675 : vector<1x256xf32> to vector<4x256xf32>
    %678 = arith.mulf %676, %677 : vector<4x256xf32>
    %679 = arith.addf %673, %678 : vector<4x256xf32>
    %680 = vector.extract_strided_slice %661 {offsets = [0, 3], sizes = [4, 1], strides = [1, 1]} : vector<4x4xf32> to vector<4x1xf32>
    %681 = vector.extract_strided_slice %659 {offsets = [3, 0], sizes = [1, 256], strides = [1, 1]} : vector<4x256xf32> to vector<1x256xf32>
    %682 = vector.broadcast %680 : vector<4x1xf32> to vector<4x256xf32>
    %683 = vector.broadcast %681 : vector<1x256xf32> to vector<4x256xf32>
    %684 = arith.mulf %682, %683 : vector<4x256xf32>
    %685 = arith.addf %679, %684 : vector<4x256xf32>
    %c1_i32_143 = arith.constant 1 : i32
    %686 = tpu.dynamic_rotate %597 by %c1_i32_143 dim 1 : vector<4x256xf32>, i32 -> vector<4x256xf32>
    %687 = vector.broadcast %7 : vector<1x256xf32> to vector<4x256xf32>
    %688 = arith.mulf %686, %687 : vector<4x256xf32>
    %c1_144 = arith.constant 1 : index
    %c3_145 = arith.constant 3 : index
    %c0_146 = arith.constant 0 : index
    %c0_147 = arith.constant 0 : index
    %689 = vector.load %arg1[%c1_144, %c3_145, %c0_146, %c0_147] : memref<2x9x4x4xf32, #tpu.memory_space<vmem>>, vector<1x1x4x4xf32>
    %690 = vector.shape_cast %689 : vector<1x1x4x4xf32> to vector<4x4xf32>
    %691 = vector.extract_strided_slice %690 {offsets = [0, 0], sizes = [4, 1], strides = [1, 1]} : vector<4x4xf32> to vector<4x1xf32>
    %692 = vector.extract_strided_slice %688 {offsets = [0, 0], sizes = [1, 256], strides = [1, 1]} : vector<4x256xf32> to vector<1x256xf32>
    %693 = vector.broadcast %691 : vector<4x1xf32> to vector<4x256xf32>
    %694 = vector.broadcast %692 : vector<1x256xf32> to vector<4x256xf32>
    %695 = arith.mulf %693, %694 : vector<4x256xf32>
    %696 = arith.addf %685, %695 : vector<4x256xf32>
    %697 = vector.extract_strided_slice %690 {offsets = [0, 1], sizes = [4, 1], strides = [1, 1]} : vector<4x4xf32> to vector<4x1xf32>
    %698 = vector.extract_strided_slice %688 {offsets = [1, 0], sizes = [1, 256], strides = [1, 1]} : vector<4x256xf32> to vector<1x256xf32>
    %699 = vector.broadcast %697 : vector<4x1xf32> to vector<4x256xf32>
    %700 = vector.broadcast %698 : vector<1x256xf32> to vector<4x256xf32>
    %701 = arith.mulf %699, %700 : vector<4x256xf32>
    %702 = arith.addf %696, %701 : vector<4x256xf32>
    %703 = vector.extract_strided_slice %690 {offsets = [0, 2], sizes = [4, 1], strides = [1, 1]} : vector<4x4xf32> to vector<4x1xf32>
    %704 = vector.extract_strided_slice %688 {offsets = [2, 0], sizes = [1, 256], strides = [1, 1]} : vector<4x256xf32> to vector<1x256xf32>
    %705 = vector.broadcast %703 : vector<4x1xf32> to vector<4x256xf32>
    %706 = vector.broadcast %704 : vector<1x256xf32> to vector<4x256xf32>
    %707 = arith.mulf %705, %706 : vector<4x256xf32>
    %708 = arith.addf %702, %707 : vector<4x256xf32>
    %709 = vector.extract_strided_slice %690 {offsets = [0, 3], sizes = [4, 1], strides = [1, 1]} : vector<4x4xf32> to vector<4x1xf32>
    %710 = vector.extract_strided_slice %688 {offsets = [3, 0], sizes = [1, 256], strides = [1, 1]} : vector<4x256xf32> to vector<1x256xf32>
    %711 = vector.broadcast %709 : vector<4x1xf32> to vector<4x256xf32>
    %712 = vector.broadcast %710 : vector<1x256xf32> to vector<4x256xf32>
    %713 = arith.mulf %711, %712 : vector<4x256xf32>
    %714 = arith.addf %708, %713 : vector<4x256xf32>
    %c1_148 = arith.constant 1 : index
    %c4_149 = arith.constant 4 : index
    %c0_150 = arith.constant 0 : index
    %c0_151 = arith.constant 0 : index
    %715 = vector.load %arg1[%c1_148, %c4_149, %c0_150, %c0_151] : memref<2x9x4x4xf32, #tpu.memory_space<vmem>>, vector<1x1x4x4xf32>
    %716 = vector.shape_cast %715 : vector<1x1x4x4xf32> to vector<4x4xf32>
    %717 = vector.extract_strided_slice %716 {offsets = [0, 0], sizes = [4, 1], strides = [1, 1]} : vector<4x4xf32> to vector<4x1xf32>
    %718 = vector.extract_strided_slice %597 {offsets = [0, 0], sizes = [1, 256], strides = [1, 1]} : vector<4x256xf32> to vector<1x256xf32>
    %719 = vector.broadcast %717 : vector<4x1xf32> to vector<4x256xf32>
    %720 = vector.broadcast %718 : vector<1x256xf32> to vector<4x256xf32>
    %721 = arith.mulf %719, %720 : vector<4x256xf32>
    %722 = arith.addf %714, %721 : vector<4x256xf32>
    %723 = vector.extract_strided_slice %716 {offsets = [0, 1], sizes = [4, 1], strides = [1, 1]} : vector<4x4xf32> to vector<4x1xf32>
    %724 = vector.extract_strided_slice %597 {offsets = [1, 0], sizes = [1, 256], strides = [1, 1]} : vector<4x256xf32> to vector<1x256xf32>
    %725 = vector.broadcast %723 : vector<4x1xf32> to vector<4x256xf32>
    %726 = vector.broadcast %724 : vector<1x256xf32> to vector<4x256xf32>
    %727 = arith.mulf %725, %726 : vector<4x256xf32>
    %728 = arith.addf %722, %727 : vector<4x256xf32>
    %729 = vector.extract_strided_slice %716 {offsets = [0, 2], sizes = [4, 1], strides = [1, 1]} : vector<4x4xf32> to vector<4x1xf32>
    %730 = vector.extract_strided_slice %597 {offsets = [2, 0], sizes = [1, 256], strides = [1, 1]} : vector<4x256xf32> to vector<1x256xf32>
    %731 = vector.broadcast %729 : vector<4x1xf32> to vector<4x256xf32>
    %732 = vector.broadcast %730 : vector<1x256xf32> to vector<4x256xf32>
    %733 = arith.mulf %731, %732 : vector<4x256xf32>
    %734 = arith.addf %728, %733 : vector<4x256xf32>
    %735 = vector.extract_strided_slice %716 {offsets = [0, 3], sizes = [4, 1], strides = [1, 1]} : vector<4x4xf32> to vector<4x1xf32>
    %736 = vector.extract_strided_slice %597 {offsets = [3, 0], sizes = [1, 256], strides = [1, 1]} : vector<4x256xf32> to vector<1x256xf32>
    %737 = vector.broadcast %735 : vector<4x1xf32> to vector<4x256xf32>
    %738 = vector.broadcast %736 : vector<1x256xf32> to vector<4x256xf32>
    %739 = arith.mulf %737, %738 : vector<4x256xf32>
    %740 = arith.addf %734, %739 : vector<4x256xf32>
    %c255_i32_152 = arith.constant 255 : i32
    %741 = tpu.dynamic_rotate %597 by %c255_i32_152 dim 1 : vector<4x256xf32>, i32 -> vector<4x256xf32>
    %742 = vector.broadcast %9 : vector<1x256xf32> to vector<4x256xf32>
    %743 = arith.mulf %741, %742 : vector<4x256xf32>
    %c1_153 = arith.constant 1 : index
    %c5_154 = arith.constant 5 : index
    %c0_155 = arith.constant 0 : index
    %c0_156 = arith.constant 0 : index
    %744 = vector.load %arg1[%c1_153, %c5_154, %c0_155, %c0_156] : memref<2x9x4x4xf32, #tpu.memory_space<vmem>>, vector<1x1x4x4xf32>
    %745 = vector.shape_cast %744 : vector<1x1x4x4xf32> to vector<4x4xf32>
    %746 = vector.extract_strided_slice %745 {offsets = [0, 0], sizes = [4, 1], strides = [1, 1]} : vector<4x4xf32> to vector<4x1xf32>
    %747 = vector.extract_strided_slice %743 {offsets = [0, 0], sizes = [1, 256], strides = [1, 1]} : vector<4x256xf32> to vector<1x256xf32>
    %748 = vector.broadcast %746 : vector<4x1xf32> to vector<4x256xf32>
    %749 = vector.broadcast %747 : vector<1x256xf32> to vector<4x256xf32>
    %750 = arith.mulf %748, %749 : vector<4x256xf32>
    %751 = arith.addf %740, %750 : vector<4x256xf32>
    %752 = vector.extract_strided_slice %745 {offsets = [0, 1], sizes = [4, 1], strides = [1, 1]} : vector<4x4xf32> to vector<4x1xf32>
    %753 = vector.extract_strided_slice %743 {offsets = [1, 0], sizes = [1, 256], strides = [1, 1]} : vector<4x256xf32> to vector<1x256xf32>
    %754 = vector.broadcast %752 : vector<4x1xf32> to vector<4x256xf32>
    %755 = vector.broadcast %753 : vector<1x256xf32> to vector<4x256xf32>
    %756 = arith.mulf %754, %755 : vector<4x256xf32>
    %757 = arith.addf %751, %756 : vector<4x256xf32>
    %758 = vector.extract_strided_slice %745 {offsets = [0, 2], sizes = [4, 1], strides = [1, 1]} : vector<4x4xf32> to vector<4x1xf32>
    %759 = vector.extract_strided_slice %743 {offsets = [2, 0], sizes = [1, 256], strides = [1, 1]} : vector<4x256xf32> to vector<1x256xf32>
    %760 = vector.broadcast %758 : vector<4x1xf32> to vector<4x256xf32>
    %761 = vector.broadcast %759 : vector<1x256xf32> to vector<4x256xf32>
    %762 = arith.mulf %760, %761 : vector<4x256xf32>
    %763 = arith.addf %757, %762 : vector<4x256xf32>
    %764 = vector.extract_strided_slice %745 {offsets = [0, 3], sizes = [4, 1], strides = [1, 1]} : vector<4x4xf32> to vector<4x1xf32>
    %765 = vector.extract_strided_slice %743 {offsets = [3, 0], sizes = [1, 256], strides = [1, 1]} : vector<4x256xf32> to vector<1x256xf32>
    %766 = vector.broadcast %764 : vector<4x1xf32> to vector<4x256xf32>
    %767 = vector.broadcast %765 : vector<1x256xf32> to vector<4x256xf32>
    %768 = arith.mulf %766, %767 : vector<4x256xf32>
    %769 = arith.addf %763, %768 : vector<4x256xf32>
    %c241_i32_157 = arith.constant 241 : i32
    %770 = tpu.dynamic_rotate %597 by %c241_i32_157 dim 1 : vector<4x256xf32>, i32 -> vector<4x256xf32>
    %771 = vector.broadcast %11 : vector<1x256xf32> to vector<4x256xf32>
    %772 = arith.mulf %770, %771 : vector<4x256xf32>
    %c1_158 = arith.constant 1 : index
    %c6_159 = arith.constant 6 : index
    %c0_160 = arith.constant 0 : index
    %c0_161 = arith.constant 0 : index
    %773 = vector.load %arg1[%c1_158, %c6_159, %c0_160, %c0_161] : memref<2x9x4x4xf32, #tpu.memory_space<vmem>>, vector<1x1x4x4xf32>
    %774 = vector.shape_cast %773 : vector<1x1x4x4xf32> to vector<4x4xf32>
    %775 = vector.extract_strided_slice %774 {offsets = [0, 0], sizes = [4, 1], strides = [1, 1]} : vector<4x4xf32> to vector<4x1xf32>
    %776 = vector.extract_strided_slice %772 {offsets = [0, 0], sizes = [1, 256], strides = [1, 1]} : vector<4x256xf32> to vector<1x256xf32>
    %777 = vector.broadcast %775 : vector<4x1xf32> to vector<4x256xf32>
    %778 = vector.broadcast %776 : vector<1x256xf32> to vector<4x256xf32>
    %779 = arith.mulf %777, %778 : vector<4x256xf32>
    %780 = arith.addf %769, %779 : vector<4x256xf32>
    %781 = vector.extract_strided_slice %774 {offsets = [0, 1], sizes = [4, 1], strides = [1, 1]} : vector<4x4xf32> to vector<4x1xf32>
    %782 = vector.extract_strided_slice %772 {offsets = [1, 0], sizes = [1, 256], strides = [1, 1]} : vector<4x256xf32> to vector<1x256xf32>
    %783 = vector.broadcast %781 : vector<4x1xf32> to vector<4x256xf32>
    %784 = vector.broadcast %782 : vector<1x256xf32> to vector<4x256xf32>
    %785 = arith.mulf %783, %784 : vector<4x256xf32>
    %786 = arith.addf %780, %785 : vector<4x256xf32>
    %787 = vector.extract_strided_slice %774 {offsets = [0, 2], sizes = [4, 1], strides = [1, 1]} : vector<4x4xf32> to vector<4x1xf32>
    %788 = vector.extract_strided_slice %772 {offsets = [2, 0], sizes = [1, 256], strides = [1, 1]} : vector<4x256xf32> to vector<1x256xf32>
    %789 = vector.broadcast %787 : vector<4x1xf32> to vector<4x256xf32>
    %790 = vector.broadcast %788 : vector<1x256xf32> to vector<4x256xf32>
    %791 = arith.mulf %789, %790 : vector<4x256xf32>
    %792 = arith.addf %786, %791 : vector<4x256xf32>
    %793 = vector.extract_strided_slice %774 {offsets = [0, 3], sizes = [4, 1], strides = [1, 1]} : vector<4x4xf32> to vector<4x1xf32>
    %794 = vector.extract_strided_slice %772 {offsets = [3, 0], sizes = [1, 256], strides = [1, 1]} : vector<4x256xf32> to vector<1x256xf32>
    %795 = vector.broadcast %793 : vector<4x1xf32> to vector<4x256xf32>
    %796 = vector.broadcast %794 : vector<1x256xf32> to vector<4x256xf32>
    %797 = arith.mulf %795, %796 : vector<4x256xf32>
    %798 = arith.addf %792, %797 : vector<4x256xf32>
    %c240_i32_162 = arith.constant 240 : i32
    %799 = tpu.dynamic_rotate %597 by %c240_i32_162 dim 1 : vector<4x256xf32>, i32 -> vector<4x256xf32>
    %800 = vector.broadcast %13 : vector<1x256xf32> to vector<4x256xf32>
    %801 = arith.mulf %799, %800 : vector<4x256xf32>
    %c1_163 = arith.constant 1 : index
    %c7_164 = arith.constant 7 : index
    %c0_165 = arith.constant 0 : index
    %c0_166 = arith.constant 0 : index
    %802 = vector.load %arg1[%c1_163, %c7_164, %c0_165, %c0_166] : memref<2x9x4x4xf32, #tpu.memory_space<vmem>>, vector<1x1x4x4xf32>
    %803 = vector.shape_cast %802 : vector<1x1x4x4xf32> to vector<4x4xf32>
    %804 = vector.extract_strided_slice %803 {offsets = [0, 0], sizes = [4, 1], strides = [1, 1]} : vector<4x4xf32> to vector<4x1xf32>
    %805 = vector.extract_strided_slice %801 {offsets = [0, 0], sizes = [1, 256], strides = [1, 1]} : vector<4x256xf32> to vector<1x256xf32>
    %806 = vector.broadcast %804 : vector<4x1xf32> to vector<4x256xf32>
    %807 = vector.broadcast %805 : vector<1x256xf32> to vector<4x256xf32>
    %808 = arith.mulf %806, %807 : vector<4x256xf32>
    %809 = arith.addf %798, %808 : vector<4x256xf32>
    %810 = vector.extract_strided_slice %803 {offsets = [0, 1], sizes = [4, 1], strides = [1, 1]} : vector<4x4xf32> to vector<4x1xf32>
    %811 = vector.extract_strided_slice %801 {offsets = [1, 0], sizes = [1, 256], strides = [1, 1]} : vector<4x256xf32> to vector<1x256xf32>
    %812 = vector.broadcast %810 : vector<4x1xf32> to vector<4x256xf32>
    %813 = vector.broadcast %811 : vector<1x256xf32> to vector<4x256xf32>
    %814 = arith.mulf %812, %813 : vector<4x256xf32>
    %815 = arith.addf %809, %814 : vector<4x256xf32>
    %816 = vector.extract_strided_slice %803 {offsets = [0, 2], sizes = [4, 1], strides = [1, 1]} : vector<4x4xf32> to vector<4x1xf32>
    %817 = vector.extract_strided_slice %801 {offsets = [2, 0], sizes = [1, 256], strides = [1, 1]} : vector<4x256xf32> to vector<1x256xf32>
    %818 = vector.broadcast %816 : vector<4x1xf32> to vector<4x256xf32>
    %819 = vector.broadcast %817 : vector<1x256xf32> to vector<4x256xf32>
    %820 = arith.mulf %818, %819 : vector<4x256xf32>
    %821 = arith.addf %815, %820 : vector<4x256xf32>
    %822 = vector.extract_strided_slice %803 {offsets = [0, 3], sizes = [4, 1], strides = [1, 1]} : vector<4x4xf32> to vector<4x1xf32>
    %823 = vector.extract_strided_slice %801 {offsets = [3, 0], sizes = [1, 256], strides = [1, 1]} : vector<4x256xf32> to vector<1x256xf32>
    %824 = vector.broadcast %822 : vector<4x1xf32> to vector<4x256xf32>
    %825 = vector.broadcast %823 : vector<1x256xf32> to vector<4x256xf32>
    %826 = arith.mulf %824, %825 : vector<4x256xf32>
    %827 = arith.addf %821, %826 : vector<4x256xf32>
    %c239_i32_167 = arith.constant 239 : i32
    %828 = tpu.dynamic_rotate %597 by %c239_i32_167 dim 1 : vector<4x256xf32>, i32 -> vector<4x256xf32>
    %829 = vector.broadcast %15 : vector<1x256xf32> to vector<4x256xf32>
    %830 = arith.mulf %828, %829 : vector<4x256xf32>
    %c1_168 = arith.constant 1 : index
    %c8_169 = arith.constant 8 : index
    %c0_170 = arith.constant 0 : index
    %c0_171 = arith.constant 0 : index
    %831 = vector.load %arg1[%c1_168, %c8_169, %c0_170, %c0_171] : memref<2x9x4x4xf32, #tpu.memory_space<vmem>>, vector<1x1x4x4xf32>
    %832 = vector.shape_cast %831 : vector<1x1x4x4xf32> to vector<4x4xf32>
    %833 = vector.extract_strided_slice %832 {offsets = [0, 0], sizes = [4, 1], strides = [1, 1]} : vector<4x4xf32> to vector<4x1xf32>
    %834 = vector.extract_strided_slice %830 {offsets = [0, 0], sizes = [1, 256], strides = [1, 1]} : vector<4x256xf32> to vector<1x256xf32>
    %835 = vector.broadcast %833 : vector<4x1xf32> to vector<4x256xf32>
    %836 = vector.broadcast %834 : vector<1x256xf32> to vector<4x256xf32>
    %837 = arith.mulf %835, %836 : vector<4x256xf32>
    %838 = arith.addf %827, %837 : vector<4x256xf32>
    %839 = vector.extract_strided_slice %832 {offsets = [0, 1], sizes = [4, 1], strides = [1, 1]} : vector<4x4xf32> to vector<4x1xf32>
    %840 = vector.extract_strided_slice %830 {offsets = [1, 0], sizes = [1, 256], strides = [1, 1]} : vector<4x256xf32> to vector<1x256xf32>
    %841 = vector.broadcast %839 : vector<4x1xf32> to vector<4x256xf32>
    %842 = vector.broadcast %840 : vector<1x256xf32> to vector<4x256xf32>
    %843 = arith.mulf %841, %842 : vector<4x256xf32>
    %844 = arith.addf %838, %843 : vector<4x256xf32>
    %845 = vector.extract_strided_slice %832 {offsets = [0, 2], sizes = [4, 1], strides = [1, 1]} : vector<4x4xf32> to vector<4x1xf32>
    %846 = vector.extract_strided_slice %830 {offsets = [2, 0], sizes = [1, 256], strides = [1, 1]} : vector<4x256xf32> to vector<1x256xf32>
    %847 = vector.broadcast %845 : vector<4x1xf32> to vector<4x256xf32>
    %848 = vector.broadcast %846 : vector<1x256xf32> to vector<4x256xf32>
    %849 = arith.mulf %847, %848 : vector<4x256xf32>
    %850 = arith.addf %844, %849 : vector<4x256xf32>
    %851 = vector.extract_strided_slice %832 {offsets = [0, 3], sizes = [4, 1], strides = [1, 1]} : vector<4x4xf32> to vector<4x1xf32>
    %852 = vector.extract_strided_slice %830 {offsets = [3, 0], sizes = [1, 256], strides = [1, 1]} : vector<4x256xf32> to vector<1x256xf32>
    %853 = vector.broadcast %851 : vector<4x1xf32> to vector<4x256xf32>
    %854 = vector.broadcast %852 : vector<1x256xf32> to vector<4x256xf32>
    %855 = arith.mulf %853, %854 : vector<4x256xf32>
    %856 = arith.addf %850, %855 : vector<4x256xf32>
    %c1_172 = arith.constant 1 : index
    %c0_173 = arith.constant 0 : index
    %c0_174 = arith.constant 0 : index
    %857 = vector.load %arg8[%c1_172, %c0_173, %c0_174] : memref<2x1x256xf32, #tpu.memory_space<vmem>>, vector<1x1x256xf32>
    %858 = vector.shape_cast %857 : vector<1x1x256xf32> to vector<1x256xf32>
    %859 = vector.broadcast %18 : f32 to vector<1x256xf32>
    %860 = arith.mulf %859, %858 : vector<1x256xf32>
    %861 = vector.broadcast %860 : vector<1x256xf32> to vector<4x256xf32>
    %862 = arith.addf %856, %861 : vector<4x256xf32>
    %863 = vector.broadcast %16 : vector<4x1xf32> to vector<4x256xf32>
    %864 = arith.addf %862, %863 : vector<4x256xf32>
    %cst_175 = arith.constant 0.000000e+00 : f32
    %865 = vector.broadcast %cst_175 : f32 to vector<4x256xf32>
    %866 = arith.cmpf oge, %864, %865 : vector<4x256xf32>
    %cst_176 = arith.constant 2.000000e-01 : f32
    %867 = vector.broadcast %cst_176 : f32 to vector<4x256xf32>
    %868 = arith.mulf %867, %864 : vector<4x256xf32>
    %869 = arith.select %866, %864, %868 : vector<4x256xi1>, vector<4x256xf32>
    %cst_177 = arith.constant 1.41421354 : f32
    %870 = vector.broadcast %cst_177 : f32 to vector<4x256xf32>
    %871 = arith.mulf %869, %870 : vector<4x256xf32>
    %cst_178 = arith.constant 0.000000e+00 : f32
    %872 = vector.broadcast %cst_178 : f32 to vector<4x256xf32>
    %c17_i32_179 = arith.constant 17 : i32
    %873 = tpu.dynamic_rotate %871 by %c17_i32_179 dim 1 : vector<4x256xf32>, i32 -> vector<4x256xf32>
    %874 = vector.broadcast %1 : vector<1x256xf32> to vector<4x256xf32>
    %875 = arith.mulf %873, %874 : vector<4x256xf32>
    %c1_180 = arith.constant 1 : index
    %c0_181 = arith.constant 0 : index
    %c0_182 = arith.constant 0 : index
    %c0_183 = arith.constant 0 : index
    %876 = vector.load %arg2[%c1_180, %c0_181, %c0_182, %c0_183] : memref<2x9x4x4xf32, #tpu.memory_space<vmem>>, vector<1x1x4x4xf32>
    %877 = vector.shape_cast %876 : vector<1x1x4x4xf32> to vector<4x4xf32>
    %878 = vector.extract_strided_slice %877 {offsets = [0, 0], sizes = [4, 1], strides = [1, 1]} : vector<4x4xf32> to vector<4x1xf32>
    %879 = vector.extract_strided_slice %875 {offsets = [0, 0], sizes = [1, 256], strides = [1, 1]} : vector<4x256xf32> to vector<1x256xf32>
    %880 = vector.broadcast %878 : vector<4x1xf32> to vector<4x256xf32>
    %881 = vector.broadcast %879 : vector<1x256xf32> to vector<4x256xf32>
    %882 = arith.mulf %880, %881 : vector<4x256xf32>
    %883 = arith.addf %872, %882 : vector<4x256xf32>
    %884 = vector.extract_strided_slice %877 {offsets = [0, 1], sizes = [4, 1], strides = [1, 1]} : vector<4x4xf32> to vector<4x1xf32>
    %885 = vector.extract_strided_slice %875 {offsets = [1, 0], sizes = [1, 256], strides = [1, 1]} : vector<4x256xf32> to vector<1x256xf32>
    %886 = vector.broadcast %884 : vector<4x1xf32> to vector<4x256xf32>
    %887 = vector.broadcast %885 : vector<1x256xf32> to vector<4x256xf32>
    %888 = arith.mulf %886, %887 : vector<4x256xf32>
    %889 = arith.addf %883, %888 : vector<4x256xf32>
    %890 = vector.extract_strided_slice %877 {offsets = [0, 2], sizes = [4, 1], strides = [1, 1]} : vector<4x4xf32> to vector<4x1xf32>
    %891 = vector.extract_strided_slice %875 {offsets = [2, 0], sizes = [1, 256], strides = [1, 1]} : vector<4x256xf32> to vector<1x256xf32>
    %892 = vector.broadcast %890 : vector<4x1xf32> to vector<4x256xf32>
    %893 = vector.broadcast %891 : vector<1x256xf32> to vector<4x256xf32>
    %894 = arith.mulf %892, %893 : vector<4x256xf32>
    %895 = arith.addf %889, %894 : vector<4x256xf32>
    %896 = vector.extract_strided_slice %877 {offsets = [0, 3], sizes = [4, 1], strides = [1, 1]} : vector<4x4xf32> to vector<4x1xf32>
    %897 = vector.extract_strided_slice %875 {offsets = [3, 0], sizes = [1, 256], strides = [1, 1]} : vector<4x256xf32> to vector<1x256xf32>
    %898 = vector.broadcast %896 : vector<4x1xf32> to vector<4x256xf32>
    %899 = vector.broadcast %897 : vector<1x256xf32> to vector<4x256xf32>
    %900 = arith.mulf %898, %899 : vector<4x256xf32>
    %901 = arith.addf %895, %900 : vector<4x256xf32>
    %c16_i32_184 = arith.constant 16 : i32
    %902 = tpu.dynamic_rotate %871 by %c16_i32_184 dim 1 : vector<4x256xf32>, i32 -> vector<4x256xf32>
    %903 = vector.broadcast %3 : vector<1x256xf32> to vector<4x256xf32>
    %904 = arith.mulf %902, %903 : vector<4x256xf32>
    %c1_185 = arith.constant 1 : index
    %c1_186 = arith.constant 1 : index
    %c0_187 = arith.constant 0 : index
    %c0_188 = arith.constant 0 : index
    %905 = vector.load %arg2[%c1_185, %c1_186, %c0_187, %c0_188] : memref<2x9x4x4xf32, #tpu.memory_space<vmem>>, vector<1x1x4x4xf32>
    %906 = vector.shape_cast %905 : vector<1x1x4x4xf32> to vector<4x4xf32>
    %907 = vector.extract_strided_slice %906 {offsets = [0, 0], sizes = [4, 1], strides = [1, 1]} : vector<4x4xf32> to vector<4x1xf32>
    %908 = vector.extract_strided_slice %904 {offsets = [0, 0], sizes = [1, 256], strides = [1, 1]} : vector<4x256xf32> to vector<1x256xf32>
    %909 = vector.broadcast %907 : vector<4x1xf32> to vector<4x256xf32>
    %910 = vector.broadcast %908 : vector<1x256xf32> to vector<4x256xf32>
    %911 = arith.mulf %909, %910 : vector<4x256xf32>
    %912 = arith.addf %901, %911 : vector<4x256xf32>
    %913 = vector.extract_strided_slice %906 {offsets = [0, 1], sizes = [4, 1], strides = [1, 1]} : vector<4x4xf32> to vector<4x1xf32>
    %914 = vector.extract_strided_slice %904 {offsets = [1, 0], sizes = [1, 256], strides = [1, 1]} : vector<4x256xf32> to vector<1x256xf32>
    %915 = vector.broadcast %913 : vector<4x1xf32> to vector<4x256xf32>
    %916 = vector.broadcast %914 : vector<1x256xf32> to vector<4x256xf32>
    %917 = arith.mulf %915, %916 : vector<4x256xf32>
    %918 = arith.addf %912, %917 : vector<4x256xf32>
    %919 = vector.extract_strided_slice %906 {offsets = [0, 2], sizes = [4, 1], strides = [1, 1]} : vector<4x4xf32> to vector<4x1xf32>
    %920 = vector.extract_strided_slice %904 {offsets = [2, 0], sizes = [1, 256], strides = [1, 1]} : vector<4x256xf32> to vector<1x256xf32>
    %921 = vector.broadcast %919 : vector<4x1xf32> to vector<4x256xf32>
    %922 = vector.broadcast %920 : vector<1x256xf32> to vector<4x256xf32>
    %923 = arith.mulf %921, %922 : vector<4x256xf32>
    %924 = arith.addf %918, %923 : vector<4x256xf32>
    %925 = vector.extract_strided_slice %906 {offsets = [0, 3], sizes = [4, 1], strides = [1, 1]} : vector<4x4xf32> to vector<4x1xf32>
    %926 = vector.extract_strided_slice %904 {offsets = [3, 0], sizes = [1, 256], strides = [1, 1]} : vector<4x256xf32> to vector<1x256xf32>
    %927 = vector.broadcast %925 : vector<4x1xf32> to vector<4x256xf32>
    %928 = vector.broadcast %926 : vector<1x256xf32> to vector<4x256xf32>
    %929 = arith.mulf %927, %928 : vector<4x256xf32>
    %930 = arith.addf %924, %929 : vector<4x256xf32>
    %c15_i32_189 = arith.constant 15 : i32
    %931 = tpu.dynamic_rotate %871 by %c15_i32_189 dim 1 : vector<4x256xf32>, i32 -> vector<4x256xf32>
    %932 = vector.broadcast %5 : vector<1x256xf32> to vector<4x256xf32>
    %933 = arith.mulf %931, %932 : vector<4x256xf32>
    %c1_190 = arith.constant 1 : index
    %c2_191 = arith.constant 2 : index
    %c0_192 = arith.constant 0 : index
    %c0_193 = arith.constant 0 : index
    %934 = vector.load %arg2[%c1_190, %c2_191, %c0_192, %c0_193] : memref<2x9x4x4xf32, #tpu.memory_space<vmem>>, vector<1x1x4x4xf32>
    %935 = vector.shape_cast %934 : vector<1x1x4x4xf32> to vector<4x4xf32>
    %936 = vector.extract_strided_slice %935 {offsets = [0, 0], sizes = [4, 1], strides = [1, 1]} : vector<4x4xf32> to vector<4x1xf32>
    %937 = vector.extract_strided_slice %933 {offsets = [0, 0], sizes = [1, 256], strides = [1, 1]} : vector<4x256xf32> to vector<1x256xf32>
    %938 = vector.broadcast %936 : vector<4x1xf32> to vector<4x256xf32>
    %939 = vector.broadcast %937 : vector<1x256xf32> to vector<4x256xf32>
    %940 = arith.mulf %938, %939 : vector<4x256xf32>
    %941 = arith.addf %930, %940 : vector<4x256xf32>
    %942 = vector.extract_strided_slice %935 {offsets = [0, 1], sizes = [4, 1], strides = [1, 1]} : vector<4x4xf32> to vector<4x1xf32>
    %943 = vector.extract_strided_slice %933 {offsets = [1, 0], sizes = [1, 256], strides = [1, 1]} : vector<4x256xf32> to vector<1x256xf32>
    %944 = vector.broadcast %942 : vector<4x1xf32> to vector<4x256xf32>
    %945 = vector.broadcast %943 : vector<1x256xf32> to vector<4x256xf32>
    %946 = arith.mulf %944, %945 : vector<4x256xf32>
    %947 = arith.addf %941, %946 : vector<4x256xf32>
    %948 = vector.extract_strided_slice %935 {offsets = [0, 2], sizes = [4, 1], strides = [1, 1]} : vector<4x4xf32> to vector<4x1xf32>
    %949 = vector.extract_strided_slice %933 {offsets = [2, 0], sizes = [1, 256], strides = [1, 1]} : vector<4x256xf32> to vector<1x256xf32>
    %950 = vector.broadcast %948 : vector<4x1xf32> to vector<4x256xf32>
    %951 = vector.broadcast %949 : vector<1x256xf32> to vector<4x256xf32>
    %952 = arith.mulf %950, %951 : vector<4x256xf32>
    %953 = arith.addf %947, %952 : vector<4x256xf32>
    %954 = vector.extract_strided_slice %935 {offsets = [0, 3], sizes = [4, 1], strides = [1, 1]} : vector<4x4xf32> to vector<4x1xf32>
    %955 = vector.extract_strided_slice %933 {offsets = [3, 0], sizes = [1, 256], strides = [1, 1]} : vector<4x256xf32> to vector<1x256xf32>
    %956 = vector.broadcast %954 : vector<4x1xf32> to vector<4x256xf32>
    %957 = vector.broadcast %955 : vector<1x256xf32> to vector<4x256xf32>
    %958 = arith.mulf %956, %957 : vector<4x256xf32>
    %959 = arith.addf %953, %958 : vector<4x256xf32>
    %c1_i32_194 = arith.constant 1 : i32
    %960 = tpu.dynamic_rotate %871 by %c1_i32_194 dim 1 : vector<4x256xf32>, i32 -> vector<4x256xf32>
    %961 = vector.broadcast %7 : vector<1x256xf32> to vector<4x256xf32>
    %962 = arith.mulf %960, %961 : vector<4x256xf32>
    %c1_195 = arith.constant 1 : index
    %c3_196 = arith.constant 3 : index
    %c0_197 = arith.constant 0 : index
    %c0_198 = arith.constant 0 : index
    %963 = vector.load %arg2[%c1_195, %c3_196, %c0_197, %c0_198] : memref<2x9x4x4xf32, #tpu.memory_space<vmem>>, vector<1x1x4x4xf32>
    %964 = vector.shape_cast %963 : vector<1x1x4x4xf32> to vector<4x4xf32>
    %965 = vector.extract_strided_slice %964 {offsets = [0, 0], sizes = [4, 1], strides = [1, 1]} : vector<4x4xf32> to vector<4x1xf32>
    %966 = vector.extract_strided_slice %962 {offsets = [0, 0], sizes = [1, 256], strides = [1, 1]} : vector<4x256xf32> to vector<1x256xf32>
    %967 = vector.broadcast %965 : vector<4x1xf32> to vector<4x256xf32>
    %968 = vector.broadcast %966 : vector<1x256xf32> to vector<4x256xf32>
    %969 = arith.mulf %967, %968 : vector<4x256xf32>
    %970 = arith.addf %959, %969 : vector<4x256xf32>
    %971 = vector.extract_strided_slice %964 {offsets = [0, 1], sizes = [4, 1], strides = [1, 1]} : vector<4x4xf32> to vector<4x1xf32>
    %972 = vector.extract_strided_slice %962 {offsets = [1, 0], sizes = [1, 256], strides = [1, 1]} : vector<4x256xf32> to vector<1x256xf32>
    %973 = vector.broadcast %971 : vector<4x1xf32> to vector<4x256xf32>
    %974 = vector.broadcast %972 : vector<1x256xf32> to vector<4x256xf32>
    %975 = arith.mulf %973, %974 : vector<4x256xf32>
    %976 = arith.addf %970, %975 : vector<4x256xf32>
    %977 = vector.extract_strided_slice %964 {offsets = [0, 2], sizes = [4, 1], strides = [1, 1]} : vector<4x4xf32> to vector<4x1xf32>
    %978 = vector.extract_strided_slice %962 {offsets = [2, 0], sizes = [1, 256], strides = [1, 1]} : vector<4x256xf32> to vector<1x256xf32>
    %979 = vector.broadcast %977 : vector<4x1xf32> to vector<4x256xf32>
    %980 = vector.broadcast %978 : vector<1x256xf32> to vector<4x256xf32>
    %981 = arith.mulf %979, %980 : vector<4x256xf32>
    %982 = arith.addf %976, %981 : vector<4x256xf32>
    %983 = vector.extract_strided_slice %964 {offsets = [0, 3], sizes = [4, 1], strides = [1, 1]} : vector<4x4xf32> to vector<4x1xf32>
    %984 = vector.extract_strided_slice %962 {offsets = [3, 0], sizes = [1, 256], strides = [1, 1]} : vector<4x256xf32> to vector<1x256xf32>
    %985 = vector.broadcast %983 : vector<4x1xf32> to vector<4x256xf32>
    %986 = vector.broadcast %984 : vector<1x256xf32> to vector<4x256xf32>
    %987 = arith.mulf %985, %986 : vector<4x256xf32>
    %988 = arith.addf %982, %987 : vector<4x256xf32>
    %c1_199 = arith.constant 1 : index
    %c4_200 = arith.constant 4 : index
    %c0_201 = arith.constant 0 : index
    %c0_202 = arith.constant 0 : index
    %989 = vector.load %arg2[%c1_199, %c4_200, %c0_201, %c0_202] : memref<2x9x4x4xf32, #tpu.memory_space<vmem>>, vector<1x1x4x4xf32>
    %990 = vector.shape_cast %989 : vector<1x1x4x4xf32> to vector<4x4xf32>
    %991 = vector.extract_strided_slice %990 {offsets = [0, 0], sizes = [4, 1], strides = [1, 1]} : vector<4x4xf32> to vector<4x1xf32>
    %992 = vector.extract_strided_slice %871 {offsets = [0, 0], sizes = [1, 256], strides = [1, 1]} : vector<4x256xf32> to vector<1x256xf32>
    %993 = vector.broadcast %991 : vector<4x1xf32> to vector<4x256xf32>
    %994 = vector.broadcast %992 : vector<1x256xf32> to vector<4x256xf32>
    %995 = arith.mulf %993, %994 : vector<4x256xf32>
    %996 = arith.addf %988, %995 : vector<4x256xf32>
    %997 = vector.extract_strided_slice %990 {offsets = [0, 1], sizes = [4, 1], strides = [1, 1]} : vector<4x4xf32> to vector<4x1xf32>
    %998 = vector.extract_strided_slice %871 {offsets = [1, 0], sizes = [1, 256], strides = [1, 1]} : vector<4x256xf32> to vector<1x256xf32>
    %999 = vector.broadcast %997 : vector<4x1xf32> to vector<4x256xf32>
    %1000 = vector.broadcast %998 : vector<1x256xf32> to vector<4x256xf32>
    %1001 = arith.mulf %999, %1000 : vector<4x256xf32>
    %1002 = arith.addf %996, %1001 : vector<4x256xf32>
    %1003 = vector.extract_strided_slice %990 {offsets = [0, 2], sizes = [4, 1], strides = [1, 1]} : vector<4x4xf32> to vector<4x1xf32>
    %1004 = vector.extract_strided_slice %871 {offsets = [2, 0], sizes = [1, 256], strides = [1, 1]} : vector<4x256xf32> to vector<1x256xf32>
    %1005 = vector.broadcast %1003 : vector<4x1xf32> to vector<4x256xf32>
    %1006 = vector.broadcast %1004 : vector<1x256xf32> to vector<4x256xf32>
    %1007 = arith.mulf %1005, %1006 : vector<4x256xf32>
    %1008 = arith.addf %1002, %1007 : vector<4x256xf32>
    %1009 = vector.extract_strided_slice %990 {offsets = [0, 3], sizes = [4, 1], strides = [1, 1]} : vector<4x4xf32> to vector<4x1xf32>
    %1010 = vector.extract_strided_slice %871 {offsets = [3, 0], sizes = [1, 256], strides = [1, 1]} : vector<4x256xf32> to vector<1x256xf32>
    %1011 = vector.broadcast %1009 : vector<4x1xf32> to vector<4x256xf32>
    %1012 = vector.broadcast %1010 : vector<1x256xf32> to vector<4x256xf32>
    %1013 = arith.mulf %1011, %1012 : vector<4x256xf32>
    %1014 = arith.addf %1008, %1013 : vector<4x256xf32>
    %c255_i32_203 = arith.constant 255 : i32
    %1015 = tpu.dynamic_rotate %871 by %c255_i32_203 dim 1 : vector<4x256xf32>, i32 -> vector<4x256xf32>
    %1016 = vector.broadcast %9 : vector<1x256xf32> to vector<4x256xf32>
    %1017 = arith.mulf %1015, %1016 : vector<4x256xf32>
    %c1_204 = arith.constant 1 : index
    %c5_205 = arith.constant 5 : index
    %c0_206 = arith.constant 0 : index
    %c0_207 = arith.constant 0 : index
    %1018 = vector.load %arg2[%c1_204, %c5_205, %c0_206, %c0_207] : memref<2x9x4x4xf32, #tpu.memory_space<vmem>>, vector<1x1x4x4xf32>
    %1019 = vector.shape_cast %1018 : vector<1x1x4x4xf32> to vector<4x4xf32>
    %1020 = vector.extract_strided_slice %1019 {offsets = [0, 0], sizes = [4, 1], strides = [1, 1]} : vector<4x4xf32> to vector<4x1xf32>
    %1021 = vector.extract_strided_slice %1017 {offsets = [0, 0], sizes = [1, 256], strides = [1, 1]} : vector<4x256xf32> to vector<1x256xf32>
    %1022 = vector.broadcast %1020 : vector<4x1xf32> to vector<4x256xf32>
    %1023 = vector.broadcast %1021 : vector<1x256xf32> to vector<4x256xf32>
    %1024 = arith.mulf %1022, %1023 : vector<4x256xf32>
    %1025 = arith.addf %1014, %1024 : vector<4x256xf32>
    %1026 = vector.extract_strided_slice %1019 {offsets = [0, 1], sizes = [4, 1], strides = [1, 1]} : vector<4x4xf32> to vector<4x1xf32>
    %1027 = vector.extract_strided_slice %1017 {offsets = [1, 0], sizes = [1, 256], strides = [1, 1]} : vector<4x256xf32> to vector<1x256xf32>
    %1028 = vector.broadcast %1026 : vector<4x1xf32> to vector<4x256xf32>
    %1029 = vector.broadcast %1027 : vector<1x256xf32> to vector<4x256xf32>
    %1030 = arith.mulf %1028, %1029 : vector<4x256xf32>
    %1031 = arith.addf %1025, %1030 : vector<4x256xf32>
    %1032 = vector.extract_strided_slice %1019 {offsets = [0, 2], sizes = [4, 1], strides = [1, 1]} : vector<4x4xf32> to vector<4x1xf32>
    %1033 = vector.extract_strided_slice %1017 {offsets = [2, 0], sizes = [1, 256], strides = [1, 1]} : vector<4x256xf32> to vector<1x256xf32>
    %1034 = vector.broadcast %1032 : vector<4x1xf32> to vector<4x256xf32>
    %1035 = vector.broadcast %1033 : vector<1x256xf32> to vector<4x256xf32>
    %1036 = arith.mulf %1034, %1035 : vector<4x256xf32>
    %1037 = arith.addf %1031, %1036 : vector<4x256xf32>
    %1038 = vector.extract_strided_slice %1019 {offsets = [0, 3], sizes = [4, 1], strides = [1, 1]} : vector<4x4xf32> to vector<4x1xf32>
    %1039 = vector.extract_strided_slice %1017 {offsets = [3, 0], sizes = [1, 256], strides = [1, 1]} : vector<4x256xf32> to vector<1x256xf32>
    %1040 = vector.broadcast %1038 : vector<4x1xf32> to vector<4x256xf32>
    %1041 = vector.broadcast %1039 : vector<1x256xf32> to vector<4x256xf32>
    %1042 = arith.mulf %1040, %1041 : vector<4x256xf32>
    %1043 = arith.addf %1037, %1042 : vector<4x256xf32>
    %c241_i32_208 = arith.constant 241 : i32
    %1044 = tpu.dynamic_rotate %871 by %c241_i32_208 dim 1 : vector<4x256xf32>, i32 -> vector<4x256xf32>
    %1045 = vector.broadcast %11 : vector<1x256xf32> to vector<4x256xf32>
    %1046 = arith.mulf %1044, %1045 : vector<4x256xf32>
    %c1_209 = arith.constant 1 : index
    %c6_210 = arith.constant 6 : index
    %c0_211 = arith.constant 0 : index
    %c0_212 = arith.constant 0 : index
    %1047 = vector.load %arg2[%c1_209, %c6_210, %c0_211, %c0_212] : memref<2x9x4x4xf32, #tpu.memory_space<vmem>>, vector<1x1x4x4xf32>
    %1048 = vector.shape_cast %1047 : vector<1x1x4x4xf32> to vector<4x4xf32>
    %1049 = vector.extract_strided_slice %1048 {offsets = [0, 0], sizes = [4, 1], strides = [1, 1]} : vector<4x4xf32> to vector<4x1xf32>
    %1050 = vector.extract_strided_slice %1046 {offsets = [0, 0], sizes = [1, 256], strides = [1, 1]} : vector<4x256xf32> to vector<1x256xf32>
    %1051 = vector.broadcast %1049 : vector<4x1xf32> to vector<4x256xf32>
    %1052 = vector.broadcast %1050 : vector<1x256xf32> to vector<4x256xf32>
    %1053 = arith.mulf %1051, %1052 : vector<4x256xf32>
    %1054 = arith.addf %1043, %1053 : vector<4x256xf32>
    %1055 = vector.extract_strided_slice %1048 {offsets = [0, 1], sizes = [4, 1], strides = [1, 1]} : vector<4x4xf32> to vector<4x1xf32>
    %1056 = vector.extract_strided_slice %1046 {offsets = [1, 0], sizes = [1, 256], strides = [1, 1]} : vector<4x256xf32> to vector<1x256xf32>
    %1057 = vector.broadcast %1055 : vector<4x1xf32> to vector<4x256xf32>
    %1058 = vector.broadcast %1056 : vector<1x256xf32> to vector<4x256xf32>
    %1059 = arith.mulf %1057, %1058 : vector<4x256xf32>
    %1060 = arith.addf %1054, %1059 : vector<4x256xf32>
    %1061 = vector.extract_strided_slice %1048 {offsets = [0, 2], sizes = [4, 1], strides = [1, 1]} : vector<4x4xf32> to vector<4x1xf32>
    %1062 = vector.extract_strided_slice %1046 {offsets = [2, 0], sizes = [1, 256], strides = [1, 1]} : vector<4x256xf32> to vector<1x256xf32>
    %1063 = vector.broadcast %1061 : vector<4x1xf32> to vector<4x256xf32>
    %1064 = vector.broadcast %1062 : vector<1x256xf32> to vector<4x256xf32>
    %1065 = arith.mulf %1063, %1064 : vector<4x256xf32>
    %1066 = arith.addf %1060, %1065 : vector<4x256xf32>
    %1067 = vector.extract_strided_slice %1048 {offsets = [0, 3], sizes = [4, 1], strides = [1, 1]} : vector<4x4xf32> to vector<4x1xf32>
    %1068 = vector.extract_strided_slice %1046 {offsets = [3, 0], sizes = [1, 256], strides = [1, 1]} : vector<4x256xf32> to vector<1x256xf32>
    %1069 = vector.broadcast %1067 : vector<4x1xf32> to vector<4x256xf32>
    %1070 = vector.broadcast %1068 : vector<1x256xf32> to vector<4x256xf32>
    %1071 = arith.mulf %1069, %1070 : vector<4x256xf32>
    %1072 = arith.addf %1066, %1071 : vector<4x256xf32>
    %c240_i32_213 = arith.constant 240 : i32
    %1073 = tpu.dynamic_rotate %871 by %c240_i32_213 dim 1 : vector<4x256xf32>, i32 -> vector<4x256xf32>
    %1074 = vector.broadcast %13 : vector<1x256xf32> to vector<4x256xf32>
    %1075 = arith.mulf %1073, %1074 : vector<4x256xf32>
    %c1_214 = arith.constant 1 : index
    %c7_215 = arith.constant 7 : index
    %c0_216 = arith.constant 0 : index
    %c0_217 = arith.constant 0 : index
    %1076 = vector.load %arg2[%c1_214, %c7_215, %c0_216, %c0_217] : memref<2x9x4x4xf32, #tpu.memory_space<vmem>>, vector<1x1x4x4xf32>
    %1077 = vector.shape_cast %1076 : vector<1x1x4x4xf32> to vector<4x4xf32>
    %1078 = vector.extract_strided_slice %1077 {offsets = [0, 0], sizes = [4, 1], strides = [1, 1]} : vector<4x4xf32> to vector<4x1xf32>
    %1079 = vector.extract_strided_slice %1075 {offsets = [0, 0], sizes = [1, 256], strides = [1, 1]} : vector<4x256xf32> to vector<1x256xf32>
    %1080 = vector.broadcast %1078 : vector<4x1xf32> to vector<4x256xf32>
    %1081 = vector.broadcast %1079 : vector<1x256xf32> to vector<4x256xf32>
    %1082 = arith.mulf %1080, %1081 : vector<4x256xf32>
    %1083 = arith.addf %1072, %1082 : vector<4x256xf32>
    %1084 = vector.extract_strided_slice %1077 {offsets = [0, 1], sizes = [4, 1], strides = [1, 1]} : vector<4x4xf32> to vector<4x1xf32>
    %1085 = vector.extract_strided_slice %1075 {offsets = [1, 0], sizes = [1, 256], strides = [1, 1]} : vector<4x256xf32> to vector<1x256xf32>
    %1086 = vector.broadcast %1084 : vector<4x1xf32> to vector<4x256xf32>
    %1087 = vector.broadcast %1085 : vector<1x256xf32> to vector<4x256xf32>
    %1088 = arith.mulf %1086, %1087 : vector<4x256xf32>
    %1089 = arith.addf %1083, %1088 : vector<4x256xf32>
    %1090 = vector.extract_strided_slice %1077 {offsets = [0, 2], sizes = [4, 1], strides = [1, 1]} : vector<4x4xf32> to vector<4x1xf32>
    %1091 = vector.extract_strided_slice %1075 {offsets = [2, 0], sizes = [1, 256], strides = [1, 1]} : vector<4x256xf32> to vector<1x256xf32>
    %1092 = vector.broadcast %1090 : vector<4x1xf32> to vector<4x256xf32>
    %1093 = vector.broadcast %1091 : vector<1x256xf32> to vector<4x256xf32>
    %1094 = arith.mulf %1092, %1093 : vector<4x256xf32>
    %1095 = arith.addf %1089, %1094 : vector<4x256xf32>
    %1096 = vector.extract_strided_slice %1077 {offsets = [0, 3], sizes = [4, 1], strides = [1, 1]} : vector<4x4xf32> to vector<4x1xf32>
    %1097 = vector.extract_strided_slice %1075 {offsets = [3, 0], sizes = [1, 256], strides = [1, 1]} : vector<4x256xf32> to vector<1x256xf32>
    %1098 = vector.broadcast %1096 : vector<4x1xf32> to vector<4x256xf32>
    %1099 = vector.broadcast %1097 : vector<1x256xf32> to vector<4x256xf32>
    %1100 = arith.mulf %1098, %1099 : vector<4x256xf32>
    %1101 = arith.addf %1095, %1100 : vector<4x256xf32>
    %c239_i32_218 = arith.constant 239 : i32
    %1102 = tpu.dynamic_rotate %871 by %c239_i32_218 dim 1 : vector<4x256xf32>, i32 -> vector<4x256xf32>
    %1103 = vector.broadcast %15 : vector<1x256xf32> to vector<4x256xf32>
    %1104 = arith.mulf %1102, %1103 : vector<4x256xf32>
    %c1_219 = arith.constant 1 : index
    %c8_220 = arith.constant 8 : index
    %c0_221 = arith.constant 0 : index
    %c0_222 = arith.constant 0 : index
    %1105 = vector.load %arg2[%c1_219, %c8_220, %c0_221, %c0_222] : memref<2x9x4x4xf32, #tpu.memory_space<vmem>>, vector<1x1x4x4xf32>
    %1106 = vector.shape_cast %1105 : vector<1x1x4x4xf32> to vector<4x4xf32>
    %1107 = vector.extract_strided_slice %1106 {offsets = [0, 0], sizes = [4, 1], strides = [1, 1]} : vector<4x4xf32> to vector<4x1xf32>
    %1108 = vector.extract_strided_slice %1104 {offsets = [0, 0], sizes = [1, 256], strides = [1, 1]} : vector<4x256xf32> to vector<1x256xf32>
    %1109 = vector.broadcast %1107 : vector<4x1xf32> to vector<4x256xf32>
    %1110 = vector.broadcast %1108 : vector<1x256xf32> to vector<4x256xf32>
    %1111 = arith.mulf %1109, %1110 : vector<4x256xf32>
    %1112 = arith.addf %1101, %1111 : vector<4x256xf32>
    %1113 = vector.extract_strided_slice %1106 {offsets = [0, 1], sizes = [4, 1], strides = [1, 1]} : vector<4x4xf32> to vector<4x1xf32>
    %1114 = vector.extract_strided_slice %1104 {offsets = [1, 0], sizes = [1, 256], strides = [1, 1]} : vector<4x256xf32> to vector<1x256xf32>
    %1115 = vector.broadcast %1113 : vector<4x1xf32> to vector<4x256xf32>
    %1116 = vector.broadcast %1114 : vector<1x256xf32> to vector<4x256xf32>
    %1117 = arith.mulf %1115, %1116 : vector<4x256xf32>
    %1118 = arith.addf %1112, %1117 : vector<4x256xf32>
    %1119 = vector.extract_strided_slice %1106 {offsets = [0, 2], sizes = [4, 1], strides = [1, 1]} : vector<4x4xf32> to vector<4x1xf32>
    %1120 = vector.extract_strided_slice %1104 {offsets = [2, 0], sizes = [1, 256], strides = [1, 1]} : vector<4x256xf32> to vector<1x256xf32>
    %1121 = vector.broadcast %1119 : vector<4x1xf32> to vector<4x256xf32>
    %1122 = vector.broadcast %1120 : vector<1x256xf32> to vector<4x256xf32>
    %1123 = arith.mulf %1121, %1122 : vector<4x256xf32>
    %1124 = arith.addf %1118, %1123 : vector<4x256xf32>
    %1125 = vector.extract_strided_slice %1106 {offsets = [0, 3], sizes = [4, 1], strides = [1, 1]} : vector<4x4xf32> to vector<4x1xf32>
    %1126 = vector.extract_strided_slice %1104 {offsets = [3, 0], sizes = [1, 256], strides = [1, 1]} : vector<4x256xf32> to vector<1x256xf32>
    %1127 = vector.broadcast %1125 : vector<4x1xf32> to vector<4x256xf32>
    %1128 = vector.broadcast %1126 : vector<1x256xf32> to vector<4x256xf32>
    %1129 = arith.mulf %1127, %1128 : vector<4x256xf32>
    %1130 = arith.addf %1124, %1129 : vector<4x256xf32>
    %c1_223 = arith.constant 1 : index
    %c0_224 = arith.constant 0 : index
    %c0_225 = arith.constant 0 : index
    %1131 = vector.load %arg9[%c1_223, %c0_224, %c0_225] : memref<2x1x256xf32, #tpu.memory_space<vmem>>, vector<1x1x256xf32>
    %1132 = vector.shape_cast %1131 : vector<1x1x256xf32> to vector<1x256xf32>
    %1133 = vector.broadcast %19 : f32 to vector<1x256xf32>
    %1134 = arith.mulf %1133, %1132 : vector<1x256xf32>
    %1135 = vector.broadcast %1134 : vector<1x256xf32> to vector<4x256xf32>
    %1136 = arith.addf %1130, %1135 : vector<4x256xf32>
    %1137 = vector.broadcast %17 : vector<4x1xf32> to vector<4x256xf32>
    %1138 = arith.addf %1136, %1137 : vector<4x256xf32>
    %cst_226 = arith.constant 0.000000e+00 : f32
    %1139 = vector.broadcast %cst_226 : f32 to vector<4x256xf32>
    %1140 = arith.cmpf oge, %1138, %1139 : vector<4x256xf32>
    %cst_227 = arith.constant 2.000000e-01 : f32
    %1141 = vector.broadcast %cst_227 : f32 to vector<4x256xf32>
    %1142 = arith.mulf %1141, %1138 : vector<4x256xf32>
    %1143 = arith.select %1140, %1138, %1142 : vector<4x256xi1>, vector<4x256xf32>
    %cst_228 = arith.constant 1.41421354 : f32
    %1144 = vector.broadcast %cst_228 : f32 to vector<4x256xf32>
    %1145 = arith.mulf %1143, %1144 : vector<4x256xf32>
    %c1_229 = arith.constant 1 : index
    %c0_230 = arith.constant 0 : index
    %c0_231 = arith.constant 0 : index
    %1146 = vector.load %arg3[%c1_229, %c0_230, %c0_231] : memref<2x1x4xf32, #tpu.memory_space<vmem>>, vector<1x1x4xf32>
    %1147 = vector.shape_cast %1146 : vector<1x1x4xf32> to vector<1x4xf32>
    %cst_232 = arith.constant 0.000000e+00 : f32
    %1148 = vector.broadcast %cst_232 : f32 to vector<1x256xf32>
    %1149 = vector.extract_strided_slice %1147 {offsets = [0, 0], sizes = [1, 1], strides = [1, 1]} : vector<1x4xf32> to vector<1x1xf32>
    %1150 = vector.extract_strided_slice %1145 {offsets = [0, 0], sizes = [1, 256], strides = [1, 1]} : vector<4x256xf32> to vector<1x256xf32>
    %1151 = vector.broadcast %1149 : vector<1x1xf32> to vector<1x256xf32>
    %1152 = arith.mulf %1151, %1150 : vector<1x256xf32>
    %1153 = arith.addf %1148, %1152 : vector<1x256xf32>
    %1154 = vector.extract_strided_slice %1147 {offsets = [0, 1], sizes = [1, 1], strides = [1, 1]} : vector<1x4xf32> to vector<1x1xf32>
    %1155 = vector.extract_strided_slice %1145 {offsets = [1, 0], sizes = [1, 256], strides = [1, 1]} : vector<4x256xf32> to vector<1x256xf32>
    %1156 = vector.broadcast %1154 : vector<1x1xf32> to vector<1x256xf32>
    %1157 = arith.mulf %1156, %1155 : vector<1x256xf32>
    %1158 = arith.addf %1153, %1157 : vector<1x256xf32>
    %1159 = vector.extract_strided_slice %1147 {offsets = [0, 2], sizes = [1, 1], strides = [1, 1]} : vector<1x4xf32> to vector<1x1xf32>
    %1160 = vector.extract_strided_slice %1145 {offsets = [2, 0], sizes = [1, 256], strides = [1, 1]} : vector<4x256xf32> to vector<1x256xf32>
    %1161 = vector.broadcast %1159 : vector<1x1xf32> to vector<1x256xf32>
    %1162 = arith.mulf %1161, %1160 : vector<1x256xf32>
    %1163 = arith.addf %1158, %1162 : vector<1x256xf32>
    %1164 = vector.extract_strided_slice %1147 {offsets = [0, 3], sizes = [1, 1], strides = [1, 1]} : vector<1x4xf32> to vector<1x1xf32>
    %1165 = vector.extract_strided_slice %1145 {offsets = [3, 0], sizes = [1, 256], strides = [1, 1]} : vector<4x256xf32> to vector<1x256xf32>
    %1166 = vector.broadcast %1164 : vector<1x1xf32> to vector<1x256xf32>
    %1167 = arith.mulf %1166, %1165 : vector<1x256xf32>
    %1168 = arith.addf %1163, %1167 : vector<1x256xf32>
    %c1_233 = arith.constant 1 : index
    %c0_234 = arith.constant 0 : index
    %c0_235 = arith.constant 0 : index
    %1169 = vector.load %arg10[%c1_233, %c0_234, %c0_235] : memref<2x1x256xf32, #tpu.memory_space<vmem>>, vector<1x1x256xf32>
    %1170 = vector.shape_cast %1169 : vector<1x1x256xf32> to vector<1x256xf32>
    %1171 = vector.shape_cast %1168 : vector<1x256xf32> to vector<1x1x256xf32>
    tpu.vector_store %arg10[%c1_233, %c0_234, %c0_235], %1171 {strides = array<i32>} : memref<2x1x256xf32, #tpu.memory_space<vmem>>, vector<1x1x256xf32>,
    return
  }
}

</mosaic_0001>

<llo_original>
// kernel: _lambda_.1
$region0: #{_lambda_.1}
  #allocation0 [shape = 'u32[]', space=smem, size = 0x4, offset = 0x4, fixed_abs, tag = 'smem constant byte address 0x4 - core index']
  #allocation1 [shape = 'u32[144,128]{1,0:T(1,128)}', space=vmem, size = 0x12000, scoped, tag = 'internal scratch']
  %s0 = inlined_call_operand.vmem [shape: f32[2], index: 0, kind: input, shape index: {}]
  %s1 = inlined_call_operand.vmem [shape: f32[2,9,4,4], index: 1, kind: input, shape index: {}]
  %s2 = inlined_call_operand.vmem [shape: f32[2,9,4,4], index: 2, kind: input, shape index: {}]
  %s3 = inlined_call_operand.vmem [shape: f32[2,1,4], index: 3, kind: input, shape index: {}]
  %s4 = inlined_call_operand.vmem [shape: f32[4,1], index: 4, kind: input, shape index: {}, may-alias: {4,5}]
  %s5 = inlined_call_operand.vmem [shape: f32[4,1], index: 5, kind: input, shape index: {}, may-alias: {4,5}]
  %s6 = inlined_call_operand.vmem [shape: f32[9,1,256], index: 6, kind: input, shape index: {}]
  %s7 = inlined_call_operand.vmem [shape: f32[2,4,256], index: 7, kind: input, shape index: {}]
  %s8 = inlined_call_operand.vmem [shape: f32[2,1,256], index: 8, kind: input, shape index: {}]
  %s9 = inlined_call_operand.vmem [shape: f32[2,1,256], index: 9, kind: input, shape index: {}]
  %s10 = inlined_call_operand.vmem [shape: f32[2,1,256], index: 10, kind: output, shape index: {}]
  %s11 = sld [smem:[#allocation0]]
  $region54: #{_lambda_.1} parent=0
    _
  %s13 = ssub.s32 1, %s11
  %s14 = scalar_select 0, %s13, %s11
  $region1: #{_lambda_.1} parent=0
    #allocation2 [shape = 'u8[512]{0}', space=smem, size = 0x200, scoped, tag = 'input window, operand 0, single buffered']
    #allocation3 [shape = 's32[1]{0}', space=sflag, size = 0x4, scoped, tag = 'scoped memory for _lambda_.1']
    %15 = vsyncpa [#allocation3], 0
    // Predicated region
    $region2: #{_lambda_.1} parent=1 // pred_check
      _
    $region3: #{_lambda_.1} parent=1 // pred_check_branch
      %17 = sbr.rel (0) target = $region5
    $region4: #{_lambda_.1} parent=1 // pred_region
      %s19 = ssub.s32 16, 16
      %20 = vsyncadd [#allocation3], %s19
      %s22 = sshll.u32 %s0, 4
      %s23 = int_to_ptr.vmem [resolvable:$true] %s22
      %25 = dma.vmem_to_smem %s23, 16, [#allocation2], [#allocation3]
    $region5: #{_lambda_.1} parent=1 // pred_fallthru
      _
    // Predicated region
    $region6: #{_lambda_.1} parent=1 // pred_check
      _
    $region7: #{_lambda_.1} parent=1 // pred_check_branch
      %27 = sbr.rel (0) target = $region9
    $region8: #{_lambda_.1} parent=1 // pred_region
      _
    $region9: #{_lambda_.1} parent=1 // pred_fallthru
      _
    // Predicated region
    $region10: #{_lambda_.1} parent=1 // pred_check
      _
    $region11: #{_lambda_.1} parent=1 // pred_check_branch
      %29 = sbr.rel (0) target = $region13
    $region12: #{_lambda_.1} parent=1 // pred_region
      _
    $region13: #{_lambda_.1} parent=1 // pred_fallthru
      _
    // Predicated region
    $region14: #{_lambda_.1} parent=1 // pred_check
      _
    $region15: #{_lambda_.1} parent=1 // pred_check_branch
      %31 = sbr.rel (0) target = $region17
    $region16: #{_lambda_.1} parent=1 // pred_region
      _
    $region17: #{_lambda_.1} parent=1 // pred_fallthru
      _
    // Predicated region
    $region18: #{_lambda_.1} parent=1 // pred_check
      _
    $region19: #{_lambda_.1} parent=1 // pred_check_branch
      %33 = sbr.rel (0) target = $region21
    $region20: #{_lambda_.1} parent=1 // pred_region
      _
    $region21: #{_lambda_.1} parent=1 // pred_fallthru
      _
    // Predicated region
    $region22: #{_lambda_.1} parent=1 // pred_check
      _
    $region23: #{_lambda_.1} parent=1 // pred_check_branch
      %35 = sbr.rel (0) target = $region25
    $region24: #{_lambda_.1} parent=1 // pred_region
      _
    $region25: #{_lambda_.1} parent=1 // pred_fallthru
      _
    // Predicated region
    $region26: #{_lambda_.1} parent=1 // pred_check
      _
    $region27: #{_lambda_.1} parent=1 // pred_check_branch
      %37 = sbr.rel (0) target = $region29
    $region28: #{_lambda_.1} parent=1 // pred_region
      _
    $region29: #{_lambda_.1} parent=1 // pred_fallthru
      _
    // Predicated region
    $region30: #{_lambda_.1} parent=1 // pred_check
      _
    $region31: #{_lambda_.1} parent=1 // pred_check_branch
      %39 = sbr.rel (0) target = $region33
    $region32: #{_lambda_.1} parent=1 // pred_region
      _
    $region33: #{_lambda_.1} parent=1 // pred_fallthru
      _
    // Predicated region
    $region34: #{_lambda_.1} parent=1 // pred_check
      _
    $region35: #{_lambda_.1} parent=1 // pred_check_branch
      %41 = sbr.rel (0) target = $region37
    $region36: #{_lambda_.1} parent=1 // pred_region
      _
    $region37: #{_lambda_.1} parent=1 // pred_fallthru
      _
    // Predicated region
    $region38: #{_lambda_.1} parent=1 // pred_check
      _
    $region39: #{_lambda_.1} parent=1 // pred_check_branch
      %43 = sbr.rel (0) target = $region41
    $region40: #{_lambda_.1} parent=1 // pred_region
      _
    $region41: #{_lambda_.1} parent=1 // pred_fallthru
      _
    // Predicated region
    $region42: #{_lambda_.1} parent=1 // pred_check
      _
    $region43: #{_lambda_.1} parent=1 // pred_check_branch
      %45 = sbr.rel (0) target = $region45
    $region44: #{_lambda_.1} parent=1 // pred_region
      %46 = dma.done [#allocation3], 16
    $region45: #{_lambda_.1} parent=1 // pred_fallthru
      _
    %47 = sfence
    %v48 = vld [vmem:[%s6] sm:$0x3]
    %s49 = scalar_lea.vmem %s6, 2
    %v50 = vld [vmem:[%s49] sm:$0x3]
    %s51 = scalar_lea.vmem %s6, 4
    %v52 = vld [vmem:[%s51] sm:$0x3]
    %s53 = scalar_lea.vmem %s6, 6
    %v54 = vld [vmem:[%s53] sm:$0x3]
    %s55 = scalar_lea.vmem %s6, 10
    %v56 = vld [vmem:[%s55] sm:$0x3]
    %s57 = scalar_lea.vmem %s6, 12
    %v58 = vld [vmem:[%s57] sm:$0x3]
    %s59 = scalar_lea.vmem %s6, 14
    %v60 = vld [vmem:[%s59] sm:$0x3]
    %s61 = scalar_lea.vmem %s6, 16
    %v62 = vld [vmem:[%s61] sm:$0x3]
    %v63 = vld [vmem:[%s4] sm:$0xf]
    %v64 = vld [vmem:[%s5] sm:$0xf]
    %s65 = sld [smem:[#allocation2]]
    %s66 = sld [smem:[#allocation2 + $0x1]]
    %v67 = vld [vmem:[%s7] sm:$0xff]
    %v69 = vcombine.high %v67, %v67
    %71 = vrot.lane.b32.xlu0 %v67, 17
    %v72 = vpop.permute.xlu0 %71
    %73 = vrot.lane.b32.xlu0 %v69, 17
    %v74 = vpop.permute.xlu0 %73
    %v75 = vlaneseq
    %v76 = vand.u32 %v75, 127
    %vm77 = vcmp.lt.s32.totalorder %v76, 17
    %v78 = vsel %vm77, %v72, %v74
    %v79 = vsel %vm77, %v74, %v72
    %v81 = vlaneseq
    %v82 = vshrl.u32 %v81, 7
    %v83 = vsub.s32 0, %v82
    %v84 = vrot.slane %v48, %v83
    %v85 = vlaneseq
    %v86 = vshrl.u32 %v85, 7
    %v87 = vsub.s32 1, %v86
    %v88 = vrot.slane %v48, %v87
    %v91 = vmul.f32 %v79, %v84
    %v92 = vmul.f32 %v78, %v88
    %v93 = vld [vmem:[%s1] sm:$0xf]
    %95 = vset.pattern.permute.xlu0 0
    %96 = vperm.xlu0 %95, %v93
    %v97 = vpop.permute.xlu0 %96
    %v99 = vlaneseq
    %v100 = vshrl.u32 %v99, 7
    %v101 = vsub.s32 0, %v100
    %v102 = vrot.slane %v91, %v101
    %v103 = vlaneseq
    %v104 = vshrl.u32 %v103, 7
    %v105 = vsub.s32 0, %v104
    %v106 = vrot.slane %v92, %v105
    %v107 = vmul.f32 %v97, %v102
    %v108 = vmul.f32 %v97, %v106
    %v109 = vadd.f32 %v107, 0.0
    %v110 = vadd.f32 %v108, 0.0
    %111 = vset.pattern.permute.xlu0 1
    %112 = vperm.xlu0 %111, %v93
    %v113 = vpop.permute.xlu0 %112
    %v115 = vlaneseq
    %v116 = vshrl.u32 %v115, 7
    %v117 = vsub.s32 1, %v116
    %v118 = vrot.slane %v91, %v117
    %v119 = vlaneseq
    %v120 = vshrl.u32 %v119, 7
    %v121 = vsub.s32 1, %v120
    %v122 = vrot.slane %v92, %v121
    %v123 = vmul.f32 %v113, %v118
    %v124 = vmul.f32 %v113, %v122
    %v125 = vadd.f32 %v109, %v123
    %v126 = vadd.f32 %v110, %v124
    %127 = vset.pattern.permute.xlu0 2
    %128 = vperm.xlu0 %127, %v93
    %v129 = vpop.permute.xlu0 %128
    %v131 = vlaneseq
    %v132 = vshrl.u32 %v131, 7
    %v133 = vsub.s32 2, %v132
    %v134 = vrot.slane %v91, %v133
    %v135 = vlaneseq
    %v136 = vshrl.u32 %v135, 7
    %v137 = vsub.s32 2, %v136
    %v138 = vrot.slane %v92, %v137
    %v139 = vmul.f32 %v129, %v134
    %v140 = vmul.f32 %v129, %v138
    %v141 = vadd.f32 %v125, %v139
    %v142 = vadd.f32 %v126, %v140
    %143 = vset.pattern.permute.xlu0 3
    %144 = vperm.xlu0 %143, %v93
    %v145 = vpop.permute.xlu0 %144
    %v147 = vlaneseq
    %v148 = vshrl.u32 %v147, 7
    %v149 = vsub.s32 3, %v148
    %v150 = vrot.slane %v91, %v149
    %v151 = vlaneseq
    %v152 = vshrl.u32 %v151, 7
    %v153 = vsub.s32 3, %v152
    %v154 = vrot.slane %v92, %v153
    %v155 = vmul.f32 %v145, %v150
    %v156 = vmul.f32 %v145, %v154
    %v157 = vadd.f32 %v141, %v155
    %v158 = vadd.f32 %v142, %v156
    %159 = vrot.lane.b32.xlu0 %v67, 16
    %v160 = vpop.permute.xlu0 %159
    %161 = vrot.lane.b32.xlu0 %v69, 16
    %v162 = vpop.permute.xlu0 %161
    %vm163 = vcmp.lt.s32.totalorder %v76, 16
    %v164 = vsel %vm163, %v160, %v162
    %v165 = vsel %vm163, %v162, %v160
    %v167 = vlaneseq
    %v168 = vshrl.u32 %v167, 7
    %v169 = vsub.s32 0, %v168
    %v170 = vrot.slane %v50, %v169
    %v171 = vlaneseq
    %v172 = vshrl.u32 %v171, 7
    %v173 = vsub.s32 1, %v172
    %v174 = vrot.slane %v50, %v173
    %v177 = vmul.f32 %v165, %v170
    %v178 = vmul.f32 %v164, %v174
    %s179 = scalar_lea.vmem %s1, 4
    %v180 = vld [vmem:[%s179] sm:$0xf]
    %182 = vset.pattern.permute.xlu0 0
    %183 = vperm.xlu0 %182, %v180
    %v184 = vpop.permute.xlu0 %183
    %v186 = vlaneseq
    %v187 = vshrl.u32 %v186, 7
    %v188 = vsub.s32 0, %v187
    %v189 = vrot.slane %v177, %v188
    %v190 = vlaneseq
    %v191 = vshrl.u32 %v190, 7
    %v192 = vsub.s32 0, %v191
    %v193 = vrot.slane %v178, %v192
    %v194 = vmul.f32 %v184, %v189
    %v195 = vmul.f32 %v184, %v193
    %v196 = vadd.f32 %v157, %v194
    %v197 = vadd.f32 %v158, %v195
    %198 = vset.pattern.permute.xlu0 1
    %199 = vperm.xlu0 %198, %v180
    %v200 = vpop.permute.xlu0 %199
    %v202 = vlaneseq
    %v203 = vshrl.u32 %v202, 7
    %v204 = vsub.s32 1, %v203
    %v205 = vrot.slane %v177, %v204
    %v206 = vlaneseq
    %v207 = vshrl.u32 %v206, 7
    %v208 = vsub.s32 1, %v207
    %v209 = vrot.slane %v178, %v208
    %v210 = vmul.f32 %v200, %v205
    %v211 = vmul.f32 %v200, %v209
    %v212 = vadd.f32 %v196, %v210
    %v213 = vadd.f32 %v197, %v211
    %214 = vset.pattern.permute.xlu0 2
    %215 = vperm.xlu0 %214, %v180
    %v216 = vpop.permute.xlu0 %215
    %v218 = vlaneseq
    %v219 = vshrl.u32 %v218, 7
    %v220 = vsub.s32 2, %v219
    %v221 = vrot.slane %v177, %v220
    %v222 = vlaneseq
    %v223 = vshrl.u32 %v222, 7
    %v224 = vsub.s32 2, %v223
    %v225 = vrot.slane %v178, %v224
    %v226 = vmul.f32 %v216, %v221
    %v227 = vmul.f32 %v216, %v225
    %v228 = vadd.f32 %v212, %v226
    %v229 = vadd.f32 %v213, %v227
    %230 = vset.pattern.permute.xlu0 3
    %231 = vperm.xlu0 %230, %v180
    %v232 = vpop.permute.xlu0 %231
    %v234 = vlaneseq
    %v235 = vshrl.u32 %v234, 7
    %v236 = vsub.s32 3, %v235
    %v237 = vrot.slane %v177, %v236
    %v238 = vlaneseq
    %v239 = vshrl.u32 %v238, 7
    %v240 = vsub.s32 3, %v239
    %v241 = vrot.slane %v178, %v240
    %v242 = vmul.f32 %v232, %v237
    %v243 = vmul.f32 %v232, %v241
    %v244 = vadd.f32 %v228, %v242
    %v245 = vadd.f32 %v229, %v243
    %246 = vrot.lane.b32.xlu0 %v67, 15
    %v247 = vpop.permute.xlu0 %246
    %248 = vrot.lane.b32.xlu0 %v69, 15
    %v249 = vpop.permute.xlu0 %248
    %vm250 = vcmp.lt.s32.totalorder %v76, 15
    %v251 = vsel %vm250, %v247, %v249
    %v252 = vsel %vm250, %v249, %v247
    %v254 = vlaneseq
    %v255 = vshrl.u32 %v254, 7
    %v256 = vsub.s32 0, %v255
    %v257 = vrot.slane %v52, %v256
    %v258 = vlaneseq
    %v259 = vshrl.u32 %v258, 7
    %v260 = vsub.s32 1, %v259
    %v261 = vrot.slane %v52, %v260
    %v264 = vmul.f32 %v252, %v257
    %v265 = vmul.f32 %v251, %v261
    %s266 = scalar_lea.vmem %s1, 8
    %v267 = vld [vmem:[%s266] sm:$0xf]
    %269 = vset.pattern.permute.xlu0 0
    %270 = vperm.xlu0 %269, %v267
    %v271 = vpop.permute.xlu0 %270
    %v273 = vlaneseq
    %v274 = vshrl.u32 %v273, 7
    %v275 = vsub.s32 0, %v274
    %v276 = vrot.slane %v264, %v275
    %v277 = vlaneseq
    %v278 = vshrl.u32 %v277, 7
    %v279 = vsub.s32 0, %v278
    %v280 = vrot.slane %v265, %v279
    %v281 = vmul.f32 %v271, %v276
    %v282 = vmul.f32 %v271, %v280
    %v283 = vadd.f32 %v244, %v281
    %v284 = vadd.f32 %v245, %v282
    %285 = vset.pattern.permute.xlu0 1
    %286 = vperm.xlu0 %285, %v267
    %v287 = vpop.permute.xlu0 %286
    %v289 = vlaneseq
    %v290 = vshrl.u32 %v289, 7
    %v291 = vsub.s32 1, %v290
    %v292 = vrot.slane %v264, %v291
    %v293 = vlaneseq
    %v294 = vshrl.u32 %v293, 7
    %v295 = vsub.s32 1, %v294
    %v296 = vrot.slane %v265, %v295
    %v297 = vmul.f32 %v287, %v292
    %v298 = vmul.f32 %v287, %v296
    %v299 = vadd.f32 %v283, %v297
    %v300 = vadd.f32 %v284, %v298
    %301 = vset.pattern.permute.xlu0 2
    %302 = vperm.xlu0 %301, %v267
    %v303 = vpop.permute.xlu0 %302
    %v305 = vlaneseq
    %v306 = vshrl.u32 %v305, 7
    %v307 = vsub.s32 2, %v306
    %v308 = vrot.slane %v264, %v307
    %v309 = vlaneseq
    %v310 = vshrl.u32 %v309, 7
    %v311 = vsub.s32 2, %v310
    %v312 = vrot.slane %v265, %v311
    %v313 = vmul.f32 %v303, %v308
    %v314 = vmul.f32 %v303, %v312
    %v315 = vadd.f32 %v299, %v313
    %v316 = vadd.f32 %v300, %v314
    %317 = vset.pattern.permute.xlu0 3
    %318 = vperm.xlu0 %317, %v267
    %v319 = vpop.permute.xlu0 %318
    %v321 = vlaneseq
    %v322 = vshrl.u32 %v321, 7
    %v323 = vsub.s32 3, %v322
    %v324 = vrot.slane %v264, %v323
    %v325 = vlaneseq
    %v326 = vshrl.u32 %v325, 7
    %v327 = vsub.s32 3, %v326
    %v328 = vrot.slane %v265, %v327
    %v329 = vmul.f32 %v319, %v324
    %v330 = vmul.f32 %v319, %v328
    %v331 = vadd.f32 %v315, %v329
    %v332 = vadd.f32 %v316, %v330
    %333 = vrot.lane.b32.xlu0 %v67, 1
    %v334 = vpop.permute.xlu0 %333
    %335 = vrot.lane.b32.xlu0 %v69, 1
    %v336 = vpop.permute.xlu0 %335
    %vm337 = vcmp.lt.s32.totalorder %v76, 1
    %v338 = vsel %vm337, %v334, %v336
    %v339 = vsel %vm337, %v336, %v334
    %v341 = vlaneseq
    %v342 = vshrl.u32 %v341, 7
    %v343 = vsub.s32 0, %v342
    %v344 = vrot.slane %v54, %v343
    %v345 = vlaneseq
    %v346 = vshrl.u32 %v345, 7
    %v347 = vsub.s32 1, %v346
    %v348 = vrot.slane %v54, %v347
    %v351 = vmul.f32 %v339, %v344
    %v352 = vmul.f32 %v338, %v348
    %s353 = scalar_lea.vmem %s1, 12
    %v354 = vld [vmem:[%s353] sm:$0xf]
    %356 = vset.pattern.permute.xlu0 0
    %357 = vperm.xlu0 %356, %v354
    %v358 = vpop.permute.xlu0 %357
    %v360 = vlaneseq
    %v361 = vshrl.u32 %v360, 7
    %v362 = vsub.s32 0, %v361
    %v363 = vrot.slane %v351, %v362
    %v364 = vlaneseq
    %v365 = vshrl.u32 %v364, 7
    %v366 = vsub.s32 0, %v365
    %v367 = vrot.slane %v352, %v366
    %v368 = vmul.f32 %v358, %v363
    %v369 = vmul.f32 %v358, %v367
    %v370 = vadd.f32 %v331, %v368
    %v371 = vadd.f32 %v332, %v369
    %372 = vset.pattern.permute.xlu0 1
    %373 = vperm.xlu0 %372, %v354
    %v374 = vpop.permute.xlu0 %373
    %v376 = vlaneseq
    %v377 = vshrl.u32 %v376, 7
    %v378 = vsub.s32 1, %v377
    %v379 = vrot.slane %v351, %v378
    %v380 = vlaneseq
    %v381 = vshrl.u32 %v380, 7
    %v382 = vsub.s32 1, %v381
    %v383 = vrot.slane %v352, %v382
    %v384 = vmul.f32 %v374, %v379
    %v385 = vmul.f32 %v374, %v383
    %v386 = vadd.f32 %v370, %v384
    %v387 = vadd.f32 %v371, %v385
    %388 = vset.pattern.permute.xlu0 2
    %389 = vperm.xlu0 %388, %v354
    %v390 = vpop.permute.xlu0 %389
    %v392 = vlaneseq
    %v393 = vshrl.u32 %v392, 7
    %v394 = vsub.s32 2, %v393
    %v395 = vrot.slane %v351, %v394
    %v396 = vlaneseq
    %v397 = vshrl.u32 %v396, 7
    %v398 = vsub.s32 2, %v397
    %v399 = vrot.slane %v352, %v398
    %v400 = vmul.f32 %v390, %v395
    %v401 = vmul.f32 %v390, %v399
    %v402 = vadd.f32 %v386, %v400
    %v403 = vadd.f32 %v387, %v401
    %404 = vset.pattern.permute.xlu0 3
    %405 = vperm.xlu0 %404, %v354
    %v406 = vpop.permute.xlu0 %405
    %v408 = vlaneseq
    %v409 = vshrl.u32 %v408, 7
    %v410 = vsub.s32 3, %v409
    %v411 = vrot.slane %v351, %v410
    %v412 = vlaneseq
    %v413 = vshrl.u32 %v412, 7
    %v414 = vsub.s32 3, %v413
    %v415 = vrot.slane %v352, %v414
    %v416 = vmul.f32 %v406, %v411
    %v417 = vmul.f32 %v406, %v415
    %v418 = vadd.f32 %v402, %v416
    %v419 = vadd.f32 %v403, %v417
    %s420 = scalar_lea.vmem %s1, 16
    %v421 = vld [vmem:[%s420] sm:$0xf]
    %423 = vset.pattern.permute.xlu0 0
    %424 = vperm.xlu0 %423, %v421
    %v425 = vpop.permute.xlu0 %424
    %v427 = vlaneseq
    %v428 = vshrl.u32 %v427, 7
    %v429 = vsub.s32 0, %v428
    %v430 = vrot.slane %v67, %v429
    %v431 = vlaneseq
    %v432 = vshrl.u32 %v431, 7
    %v433 = vsub.s32 4, %v432
    %v434 = vrot.slane %v67, %v433
    %v437 = vlaneseq
    %v438 = vshrl.u32 %v437, 7
    %v439 = vsub.s32 0, %v438
    %v440 = vrot.slane %v430, %v439
    %v441 = vlaneseq
    %v442 = vshrl.u32 %v441, 7
    %v443 = vsub.s32 0, %v442
    %v444 = vrot.slane %v434, %v443
    %v445 = vmul.f32 %v425, %v440
    %v446 = vmul.f32 %v425, %v444
    %v447 = vadd.f32 %v418, %v445
    %v448 = vadd.f32 %v419, %v446
    %449 = vset.pattern.permute.xlu0 1
    %450 = vperm.xlu0 %449, %v421
    %v451 = vpop.permute.xlu0 %450
    %v453 = vlaneseq
    %v454 = vshrl.u32 %v453, 7
    %v455 = vsub.s32 1, %v454
    %v456 = vrot.slane %v67, %v455
    %v457 = vlaneseq
    %v458 = vshrl.u32 %v457, 7
    %v459 = vsub.s32 5, %v458
    %v460 = vrot.slane %v67, %v459
    %v463 = vlaneseq
    %v464 = vshrl.u32 %v463, 7
    %v465 = vsub.s32 1, %v464
    %v466 = vrot.slane %v456, %v465
    %v467 = vlaneseq
    %v468 = vshrl.u32 %v467, 7
    %v469 = vsub.s32 1, %v468
    %v470 = vrot.slane %v460, %v469
    %v471 = vmul.f32 %v451, %v466
    %v472 = vmul.f32 %v451, %v470
    %v473 = vadd.f32 %v447, %v471
    %v474 = vadd.f32 %v448, %v472
    %475 = vset.pattern.permute.xlu0 2
    %476 = vperm.xlu0 %475, %v421
    %v477 = vpop.permute.xlu0 %476
    %v479 = vlaneseq
    %v480 = vshrl.u32 %v479, 7
    %v481 = vsub.s32 2, %v480
    %v482 = vrot.slane %v67, %v481
    %v483 = vlaneseq
    %v484 = vshrl.u32 %v483, 7
    %v485 = vsub.s32 6, %v484
    %v486 = vrot.slane %v67, %v485
    %v489 = vlaneseq
    %v490 = vshrl.u32 %v489, 7
    %v491 = vsub.s32 2, %v490
    %v492 = vrot.slane %v482, %v491
    %v493 = vlaneseq
    %v494 = vshrl.u32 %v493, 7
    %v495 = vsub.s32 2, %v494
    %v496 = vrot.slane %v486, %v495
    %v497 = vmul.f32 %v477, %v492
    %v498 = vmul.f32 %v477, %v496
    %v499 = vadd.f32 %v473, %v497
    %v500 = vadd.f32 %v474, %v498
    %501 = vset.pattern.permute.xlu0 3
    %502 = vperm.xlu0 %501, %v421
    %v503 = vpop.permute.xlu0 %502
    %v505 = vlaneseq
    %v506 = vshrl.u32 %v505, 7
    %v507 = vsub.s32 3, %v506
    %v508 = vrot.slane %v67, %v507
    %v509 = vlaneseq
    %v510 = vshrl.u32 %v509, 7
    %v511 = vsub.s32 7, %v510
    %v512 = vrot.slane %v67, %v511
    %v515 = vlaneseq
    %v516 = vshrl.u32 %v515, 7
    %v517 = vsub.s32 3, %v516
    %v518 = vrot.slane %v508, %v517
    %v519 = vlaneseq
    %v520 = vshrl.u32 %v519, 7
    %v521 = vsub.s32 3, %v520
    %v522 = vrot.slane %v512, %v521
    %v523 = vmul.f32 %v503, %v518
    %v524 = vmul.f32 %v503, %v522
    %v525 = vadd.f32 %v499, %v523
    %v526 = vadd.f32 %v500, %v524
    %527 = vrot.lane.b32.xlu0 %v67, 127
    %v528 = vpop.permute.xlu0 %527
    %529 = vrot.lane.b32.xlu0 %v69, 127
    %v530 = vpop.permute.xlu0 %529
    %vm531 = vcmp.lt.s32.totalorder %v76, 127
    %v532 = vsel %vm531, %v528, %v530
    %v533 = vsel %vm531, %v530, %v528
    %v535 = vlaneseq
    %v536 = vshrl.u32 %v535, 7
    %v537 = vsub.s32 0, %v536
    %v538 = vrot.slane %v56, %v537
    %v539 = vlaneseq
    %v540 = vshrl.u32 %v539, 7
    %v541 = vsub.s32 1, %v540
    %v542 = vrot.slane %v56, %v541
    %v545 = vmul.f32 %v532, %v538
    %v546 = vmul.f32 %v533, %v542
    %s547 = scalar_lea.vmem %s1, 20
    %v548 = vld [vmem:[%s547] sm:$0xf]
    %550 = vset.pattern.permute.xlu0 0
    %551 = vperm.xlu0 %550, %v548
    %v552 = vpop.permute.xlu0 %551
    %v554 = vlaneseq
    %v555 = vshrl.u32 %v554, 7
    %v556 = vsub.s32 0, %v555
    %v557 = vrot.slane %v545, %v556
    %v558 = vlaneseq
    %v559 = vshrl.u32 %v558, 7
    %v560 = vsub.s32 0, %v559
    %v561 = vrot.slane %v546, %v560
    %v562 = vmul.f32 %v552, %v557
    %v563 = vmul.f32 %v552, %v561
    %v564 = vadd.f32 %v525, %v562
    %v565 = vadd.f32 %v526, %v563
    %566 = vset.pattern.permute.xlu0 1
    %567 = vperm.xlu0 %566, %v548
    %v568 = vpop.permute.xlu0 %567
    %v570 = vlaneseq
    %v571 = vshrl.u32 %v570, 7
    %v572 = vsub.s32 1, %v571
    %v573 = vrot.slane %v545, %v572
    %v574 = vlaneseq
    %v575 = vshrl.u32 %v574, 7
    %v576 = vsub.s32 1, %v575
    %v577 = vrot.slane %v546, %v576
    %v578 = vmul.f32 %v568, %v573
    %v579 = vmul.f32 %v568, %v577
    %v580 = vadd.f32 %v564, %v578
    %v581 = vadd.f32 %v565, %v579
    %582 = vset.pattern.permute.xlu0 2
    %583 = vperm.xlu0 %582, %v548
    %v584 = vpop.permute.xlu0 %583
    %v586 = vlaneseq
    %v587 = vshrl.u32 %v586, 7
    %v588 = vsub.s32 2, %v587
    %v589 = vrot.slane %v545, %v588
    %v590 = vlaneseq
    %v591 = vshrl.u32 %v590, 7
    %v592 = vsub.s32 2, %v591
    %v593 = vrot.slane %v546, %v592
    %v594 = vmul.f32 %v584, %v589
    %v595 = vmul.f32 %v584, %v593
    %v596 = vadd.f32 %v580, %v594
    %v597 = vadd.f32 %v581, %v595
    %598 = vset.pattern.permute.xlu0 3
    %599 = vperm.xlu0 %598, %v548
    %v600 = vpop.permute.xlu0 %599
    %v602 = vlaneseq
    %v603 = vshrl.u32 %v602, 7
    %v604 = vsub.s32 3, %v603
    %v605 = vrot.slane %v545, %v604
    %v606 = vlaneseq
    %v607 = vshrl.u32 %v606, 7
    %v608 = vsub.s32 3, %v607
    %v609 = vrot.slane %v546, %v608
    %v610 = vmul.f32 %v600, %v605
    %v611 = vmul.f32 %v600, %v609
    %v612 = vadd.f32 %v596, %v610
    %v613 = vadd.f32 %v597, %v611
    %614 = vrot.lane.b32.xlu0 %v67, 113
    %v615 = vpop.permute.xlu0 %614
    %616 = vrot.lane.b32.xlu0 %v69, 113
    %v617 = vpop.permute.xlu0 %616
    %vm618 = vcmp.lt.s32.totalorder %v76, 113
    %v619 = vsel %vm618, %v615, %v617
    %v620 = vsel %vm618, %v617, %v615
    %v622 = vlaneseq
    %v623 = vshrl.u32 %v622, 7
    %v624 = vsub.s32 0, %v623
    %v625 = vrot.slane %v58, %v624
    %v626 = vlaneseq
    %v627 = vshrl.u32 %v626, 7
    %v628 = vsub.s32 1, %v627
    %v629 = vrot.slane %v58, %v628
    %v632 = vmul.f32 %v619, %v625
    %v633 = vmul.f32 %v620, %v629
    %s634 = scalar_lea.vmem %s1, 24
    %v635 = vld [vmem:[%s634] sm:$0xf]
    %637 = vset.pattern.permute.xlu0 0
    %638 = vperm.xlu0 %637, %v635
    %v639 = vpop.permute.xlu0 %638
    %v641 = vlaneseq
    %v642 = vshrl.u32 %v641, 7
    %v643 = vsub.s32 0, %v642
    %v644 = vrot.slane %v632, %v643
    %v645 = vlaneseq
    %v646 = vshrl.u32 %v645, 7
    %v647 = vsub.s32 0, %v646
    %v648 = vrot.slane %v633, %v647
    %v649 = vmul.f32 %v639, %v644
    %v650 = vmul.f32 %v639, %v648
    %v651 = vadd.f32 %v612, %v649
    %v652 = vadd.f32 %v613, %v650
    %653 = vset.pattern.permute.xlu0 1
    %654 = vperm.xlu0 %653, %v635
    %v655 = vpop.permute.xlu0 %654
    %v657 = vlaneseq
    %v658 = vshrl.u32 %v657, 7
    %v659 = vsub.s32 1, %v658
    %v660 = vrot.slane %v632, %v659
    %v661 = vlaneseq
    %v662 = vshrl.u32 %v661, 7
    %v663 = vsub.s32 1, %v662
    %v664 = vrot.slane %v633, %v663
    %v665 = vmul.f32 %v655, %v660
    %v666 = vmul.f32 %v655, %v664
    %v667 = vadd.f32 %v651, %v665
    %v668 = vadd.f32 %v652, %v666
    %669 = vset.pattern.permute.xlu0 2
    %670 = vperm.xlu0 %669, %v635
    %v671 = vpop.permute.xlu0 %670
    %v673 = vlaneseq
    %v674 = vshrl.u32 %v673, 7
    %v675 = vsub.s32 2, %v674
    %v676 = vrot.slane %v632, %v675
    %v677 = vlaneseq
    %v678 = vshrl.u32 %v677, 7
    %v679 = vsub.s32 2, %v678
    %v680 = vrot.slane %v633, %v679
    %v681 = vmul.f32 %v671, %v676
    %v682 = vmul.f32 %v671, %v680
    %v683 = vadd.f32 %v667, %v681
    %v684 = vadd.f32 %v668, %v682
    %685 = vset.pattern.permute.xlu0 3
    %686 = vperm.xlu0 %685, %v635
    %v687 = vpop.permute.xlu0 %686
    %v689 = vlaneseq
    %v690 = vshrl.u32 %v689, 7
    %v691 = vsub.s32 3, %v690
    %v692 = vrot.slane %v632, %v691
    %v693 = vlaneseq
    %v694 = vshrl.u32 %v693, 7
    %v695 = vsub.s32 3, %v694
    %v696 = vrot.slane %v633, %v695
    %v697 = vmul.f32 %v687, %v692
    %v698 = vmul.f32 %v687, %v696
    %v699 = vadd.f32 %v683, %v697
    %v700 = vadd.f32 %v684, %v698
    %701 = vrot.lane.b32.xlu0 %v67, 112
    %v702 = vpop.permute.xlu0 %701
    %703 = vrot.lane.b32.xlu0 %v69, 112
    %v704 = vpop.permute.xlu0 %703
    %vm705 = vcmp.lt.s32.totalorder %v76, 112
    %v706 = vsel %vm705, %v702, %v704
    %v707 = vsel %vm705, %v704, %v702
    %v709 = vlaneseq
    %v710 = vshrl.u32 %v709, 7
    %v711 = vsub.s32 0, %v710
    %v712 = vrot.slane %v60, %v711
    %v713 = vlaneseq
    %v714 = vshrl.u32 %v713, 7
    %v715 = vsub.s32 1, %v714
    %v716 = vrot.slane %v60, %v715
    %v719 = vmul.f32 %v706, %v712
    %v720 = vmul.f32 %v707, %v716
    %s721 = scalar_lea.vmem %s1, 28
    %v722 = vld [vmem:[%s721] sm:$0xf]
    %724 = vset.pattern.permute.xlu0 0
    %725 = vperm.xlu0 %724, %v722
    %v726 = vpop.permute.xlu0 %725
    %v728 = vlaneseq
    %v729 = vshrl.u32 %v728, 7
    %v730 = vsub.s32 0, %v729
    %v731 = vrot.slane %v719, %v730
    %v732 = vlaneseq
    %v733 = vshrl.u32 %v732, 7
    %v734 = vsub.s32 0, %v733
    %v735 = vrot.slane %v720, %v734
    %v736 = vmul.f32 %v726, %v731
    %v737 = vmul.f32 %v726, %v735
    %v738 = vadd.f32 %v699, %v736
    %v739 = vadd.f32 %v700, %v737
    %740 = vset.pattern.permute.xlu0 1
    %741 = vperm.xlu0 %740, %v722
    %v742 = vpop.permute.xlu0 %741
    %v744 = vlaneseq
    %v745 = vshrl.u32 %v744, 7
    %v746 = vsub.s32 1, %v745
    %v747 = vrot.slane %v719, %v746
    %v748 = vlaneseq
    %v749 = vshrl.u32 %v748, 7
    %v750 = vsub.s32 1, %v749
    %v751 = vrot.slane %v720, %v750
    %v752 = vmul.f32 %v742, %v747
    %v753 = vmul.f32 %v742, %v751
    %v754 = vadd.f32 %v738, %v752
    %v755 = vadd.f32 %v739, %v753
    %756 = vset.pattern.permute.xlu0 2
    %757 = vperm.xlu0 %756, %v722
    %v758 = vpop.permute.xlu0 %757
    %v760 = vlaneseq
    %v761 = vshrl.u32 %v760, 7
    %v762 = vsub.s32 2, %v761
    %v763 = vrot.slane %v719, %v762
    %v764 = vlaneseq
    %v765 = vshrl.u32 %v764, 7
    %v766 = vsub.s32 2, %v765
    %v767 = vrot.slane %v720, %v766
    %v768 = vmul.f32 %v758, %v763
    %v769 = vmul.f32 %v758, %v767
    %v770 = vadd.f32 %v754, %v768
    %v771 = vadd.f32 %v755, %v769
    %772 = vset.pattern.permute.xlu0 3
    %773 = vperm.xlu0 %772, %v722
    %v774 = vpop.permute.xlu0 %773
    %v776 = vlaneseq
    %v777 = vshrl.u32 %v776, 7
    %v778 = vsub.s32 3, %v777
    %v779 = vrot.slane %v719, %v778
    %v780 = vlaneseq
    %v781 = vshrl.u32 %v780, 7
    %v782 = vsub.s32 3, %v781
    %v783 = vrot.slane %v720, %v782
    %v784 = vmul.f32 %v774, %v779
    %v785 = vmul.f32 %v774, %v783
    %v786 = vadd.f32 %v770, %v784
    %v787 = vadd.f32 %v771, %v785
    %788 = vrot.lane.b32.xlu0 %v67, 111
    %v789 = vpop.permute.xlu0 %788
    %790 = vrot.lane.b32.xlu0 %v69, 111
    %v791 = vpop.permute.xlu0 %790
    %vm792 = vcmp.lt.s32.totalorder %v76, 111
    %v793 = vsel %vm792, %v789, %v791
    %v794 = vsel %vm792, %v791, %v789
    %v796 = vlaneseq
    %v797 = vshrl.u32 %v796, 7
    %v798 = vsub.s32 0, %v797
    %v799 = vrot.slane %v62, %v798
    %v800 = vlaneseq
    %v801 = vshrl.u32 %v800, 7
    %v802 = vsub.s32 1, %v801
    %v803 = vrot.slane %v62, %v802
    %v806 = vmul.f32 %v793, %v799
    %v807 = vmul.f32 %v794, %v803
    %s808 = scalar_lea.vmem %s1, 32
    %v809 = vld [vmem:[%s808] sm:$0xf]
    %811 = vset.pattern.permute.xlu0 0
    %812 = vperm.xlu0 %811, %v809
    %v813 = vpop.permute.xlu0 %812
    %v815 = vlaneseq
    %v816 = vshrl.u32 %v815, 7
    %v817 = vsub.s32 0, %v816
    %v818 = vrot.slane %v806, %v817
    %v819 = vlaneseq
    %v820 = vshrl.u32 %v819, 7
    %v821 = vsub.s32 0, %v820
    %v822 = vrot.slane %v807, %v821
    %v823 = vmul.f32 %v813, %v818
    %v824 = vmul.f32 %v813, %v822
    %v825 = vadd.f32 %v786, %v823
    %v826 = vadd.f32 %v787, %v824
    %827 = vset.pattern.permute.xlu0 1
    %828 = vperm.xlu0 %827, %v809
    %v829 = vpop.permute.xlu0 %828
    %v831 = vlaneseq
    %v832 = vshrl.u32 %v831, 7
    %v833 = vsub.s32 1, %v832
    %v834 = vrot.slane %v806, %v833
    %v835 = vlaneseq
    %v836 = vshrl.u32 %v835, 7
    %v837 = vsub.s32 1, %v836
    %v838 = vrot.slane %v807, %v837
    %v839 = vmul.f32 %v829, %v834
    %v840 = vmul.f32 %v829, %v838
    %v841 = vadd.f32 %v825, %v839
    %v842 = vadd.f32 %v826, %v840
    %843 = vset.pattern.permute.xlu0 2
    %844 = vperm.xlu0 %843, %v809
    %v845 = vpop.permute.xlu0 %844
    %v847 = vlaneseq
    %v848 = vshrl.u32 %v847, 7
    %v849 = vsub.s32 2, %v848
    %v850 = vrot.slane %v806, %v849
    %v851 = vlaneseq
    %v852 = vshrl.u32 %v851, 7
    %v853 = vsub.s32 2, %v852
    %v854 = vrot.slane %v807, %v853
    %v855 = vmul.f32 %v845, %v850
    %v856 = vmul.f32 %v845, %v854
    %v857 = vadd.f32 %v841, %v855
    %v858 = vadd.f32 %v842, %v856
    %859 = vset.pattern.permute.xlu0 3
    %860 = vperm.xlu0 %859, %v809
    %v861 = vpop.permute.xlu0 %860
    %v863 = vlaneseq
    %v864 = vshrl.u32 %v863, 7
    %v865 = vsub.s32 3, %v864
    %v866 = vrot.slane %v806, %v865
    %v867 = vlaneseq
    %v868 = vshrl.u32 %v867, 7
    %v869 = vsub.s32 3, %v868
    %v870 = vrot.slane %v807, %v869
    %v871 = vmul.f32 %v861, %v866
    %v872 = vmul.f32 %v861, %v870
    %v873 = vadd.f32 %v857, %v871
    %v874 = vadd.f32 %v858, %v872
    %v875 = vld [vmem:[%s8] sm:$0x3]
    %v876 = vstv %s65
    %v877 = vmul.f32 %v876, %v875
    %v879 = vlaneseq
    %v880 = vshrl.u32 %v879, 7
    %v881 = vsub.s32 0, %v880
    %v882 = vrot.slane %v877, %v881
    %v883 = vlaneseq
    %v884 = vshrl.u32 %v883, 7
    %v885 = vsub.s32 1, %v884
    %v886 = vrot.slane %v877, %v885
    %v889 = vadd.f32 %v873, %v882
    %v890 = vadd.f32 %v874, %v886
    %892 = vset.pattern.permute.xlu0 0
    %893 = vperm.xlu0 %892, %v63
    %v894 = vpop.permute.xlu0 %893
    %v896 = vadd.f32 %v889, %v894
    %v897 = vadd.f32 %v890, %v894
    %vm898 = vcmp.ge.f32.partialorder %v896, 0.0
    %vm899 = vcmp.ge.f32.partialorder %v897, 0.0
    %v900 = vmul.f32 %v896, 0.2
    %v901 = vmul.f32 %v897, 0.2
    %v902 = vsel %vm898, %v896, %v900
    %v903 = vsel %vm899, %v897, %v901
    %v904 = vmul.f32 %v902, 1.4142135
    %v905 = vmul.f32 %v903, 1.4142135
    %906 = vrot.lane.b32.xlu0 %v904, 17
    %v907 = vpop.permute.xlu0 %906
    %908 = vrot.lane.b32.xlu0 %v905, 17
    %v909 = vpop.permute.xlu0 %908
    %v910 = vsel %vm77, %v907, %v909
    %v911 = vsel %vm77, %v909, %v907
    %v912 = vmul.f32 %v911, %v84
    %v913 = vmul.f32 %v910, %v88
    %v914 = vld [vmem:[%s2] sm:$0xf]
    %916 = vset.pattern.permute.xlu0 0
    %917 = vperm.xlu0 %916, %v914
    %v918 = vpop.permute.xlu0 %917
    %v920 = vlaneseq
    %v921 = vshrl.u32 %v920, 7
    %v922 = vsub.s32 0, %v921
    %v923 = vrot.slane %v912, %v922
    %v924 = vlaneseq
    %v925 = vshrl.u32 %v924, 7
    %v926 = vsub.s32 0, %v925
    %v927 = vrot.slane %v913, %v926
    %v928 = vmul.f32 %v918, %v923
    %v929 = vmul.f32 %v918, %v927
    %v930 = vadd.f32 %v928, 0.0
    %v931 = vadd.f32 %v929, 0.0
    %932 = vset.pattern.permute.xlu0 1
    %933 = vperm.xlu0 %932, %v914
    %v934 = vpop.permute.xlu0 %933
    %v936 = vlaneseq
    %v937 = vshrl.u32 %v936, 7
    %v938 = vsub.s32 1, %v937
    %v939 = vrot.slane %v912, %v938
    %v940 = vlaneseq
    %v941 = vshrl.u32 %v940, 7
    %v942 = vsub.s32 1, %v941
    %v943 = vrot.slane %v913, %v942
    %v944 = vmul.f32 %v934, %v939
    %v945 = vmul.f32 %v934, %v943
    %v946 = vadd.f32 %v930, %v944
    %v947 = vadd.f32 %v931, %v945
    %948 = vset.pattern.permute.xlu0 2
    %949 = vperm.xlu0 %948, %v914
    %v950 = vpop.permute.xlu0 %949
    %v952 = vlaneseq
    %v953 = vshrl.u32 %v952, 7
    %v954 = vsub.s32 2, %v953
    %v955 = vrot.slane %v912, %v954
    %v956 = vlaneseq
    %v957 = vshrl.u32 %v956, 7
    %v958 = vsub.s32 2, %v957
    %v959 = vrot.slane %v913, %v958
    %v960 = vmul.f32 %v950, %v955
    %v961 = vmul.f32 %v950, %v959
    %v962 = vadd.f32 %v946, %v960
    %v963 = vadd.f32 %v947, %v961
    %964 = vset.pattern.permute.xlu0 3
    %965 = vperm.xlu0 %964, %v914
    %v966 = vpop.permute.xlu0 %965
    %v968 = vlaneseq
    %v969 = vshrl.u32 %v968, 7
    %v970 = vsub.s32 3, %v969
    %v971 = vrot.slane %v912, %v970
    %v972 = vlaneseq
    %v973 = vshrl.u32 %v972, 7
    %v974 = vsub.s32 3, %v973
    %v975 = vrot.slane %v913, %v974
    %v976 = vmul.f32 %v966, %v971
    %v977 = vmul.f32 %v966, %v975
    %v978 = vadd.f32 %v962, %v976
    %v979 = vadd.f32 %v963, %v977
    %980 = vrot.lane.b32.xlu0 %v904, 16
    %v981 = vpop.permute.xlu0 %980
    %982 = vrot.lane.b32.xlu0 %v905, 16
    %v983 = vpop.permute.xlu0 %982
    %v984 = vsel %vm163, %v981, %v983
    %v985 = vsel %vm163, %v983, %v981
    %v986 = vmul.f32 %v985, %v170
    %v987 = vmul.f32 %v984, %v174
    %s988 = scalar_lea.vmem %s2, 4
    %v989 = vld [vmem:[%s988] sm:$0xf]
    %991 = vset.pattern.permute.xlu0 0
    %992 = vperm.xlu0 %991, %v989
    %v993 = vpop.permute.xlu0 %992
    %v995 = vlaneseq
    %v996 = vshrl.u32 %v995, 7
    %v997 = vsub.s32 0, %v996
    %v998 = vrot.slane %v986, %v997
    %v999 = vlaneseq
    %v1000 = vshrl.u32 %v999, 7
    %v1001 = vsub.s32 0, %v1000
    %v1002 = vrot.slane %v987, %v1001
    %v1003 = vmul.f32 %v993, %v998
    %v1004 = vmul.f32 %v993, %v1002
    %v1005 = vadd.f32 %v978, %v1003
    %v1006 = vadd.f32 %v979, %v1004
    %1007 = vset.pattern.permute.xlu0 1
    %1008 = vperm.xlu0 %1007, %v989
    %v1009 = vpop.permute.xlu0 %1008
    %v1011 = vlaneseq
    %v1012 = vshrl.u32 %v1011, 7
    %v1013 = vsub.s32 1, %v1012
    %v1014 = vrot.slane %v986, %v1013
    %v1015 = vlaneseq
    %v1016 = vshrl.u32 %v1015, 7
    %v1017 = vsub.s32 1, %v1016
    %v1018 = vrot.slane %v987, %v1017
    %v1019 = vmul.f32 %v1009, %v1014
    %v1020 = vmul.f32 %v1009, %v1018
    %v1021 = vadd.f32 %v1005, %v1019
    %v1022 = vadd.f32 %v1006, %v1020
    %1023 = vset.pattern.permute.xlu0 2
    %1024 = vperm.xlu0 %1023, %v989
    %v1025 = vpop.permute.xlu0 %1024
    %v1027 = vlaneseq
    %v1028 = vshrl.u32 %v1027, 7
    %v1029 = vsub.s32 2, %v1028
    %v1030 = vrot.slane %v986, %v1029
    %v1031 = vlaneseq
    %v1032 = vshrl.u32 %v1031, 7
    %v1033 = vsub.s32 2, %v1032
    %v1034 = vrot.slane %v987, %v1033
    %v1035 = vmul.f32 %v1025, %v1030
    %v1036 = vmul.f32 %v1025, %v1034
    %v1037 = vadd.f32 %v1021, %v1035
    %v1038 = vadd.f32 %v1022, %v1036
    %1039 = vset.pattern.permute.xlu0 3
    %1040 = vperm.xlu0 %1039, %v989
    %v1041 = vpop.permute.xlu0 %1040
    %v1043 = vlaneseq
    %v1044 = vshrl.u32 %v1043, 7
    %v1045 = vsub.s32 3, %v1044
    %v1046 = vrot.slane %v986, %v1045
    %v1047 = vlaneseq
    %v1048 = vshrl.u32 %v1047, 7
    %v1049 = vsub.s32 3, %v1048
    %v1050 = vrot.slane %v987, %v1049
    %v1051 = vmul.f32 %v1041, %v1046
    %v1052 = vmul.f32 %v1041, %v1050
    %v1053 = vadd.f32 %v1037, %v1051
    %v1054 = vadd.f32 %v1038, %v1052
    %1055 = vrot.lane.b32.xlu0 %v904, 15
    %v1056 = vpop.permute.xlu0 %1055
    %1057 = vrot.lane.b32.xlu0 %v905, 15
    %v1058 = vpop.permute.xlu0 %1057
    %v1059 = vsel %vm250, %v1056, %v1058
    %v1060 = vsel %vm250, %v1058, %v1056
    %v1061 = vmul.f32 %v1060, %v257
    %v1062 = vmul.f32 %v1059, %v261
    %s1063 = scalar_lea.vmem %s2, 8
    %v1064 = vld [vmem:[%s1063] sm:$0xf]
    %1066 = vset.pattern.permute.xlu0 0
    %1067 = vperm.xlu0 %1066, %v1064
    %v1068 = vpop.permute.xlu0 %1067
    %v1070 = vlaneseq
    %v1071 = vshrl.u32 %v1070, 7
    %v1072 = vsub.s32 0, %v1071
    %v1073 = vrot.slane %v1061, %v1072
    %v1074 = vlaneseq
    %v1075 = vshrl.u32 %v1074, 7
    %v1076 = vsub.s32 0, %v1075
    %v1077 = vrot.slane %v1062, %v1076
    %v1078 = vmul.f32 %v1068, %v1073
    %v1079 = vmul.f32 %v1068, %v1077
    %v1080 = vadd.f32 %v1053, %v1078
    %v1081 = vadd.f32 %v1054, %v1079
    %1082 = vset.pattern.permute.xlu0 1
    %1083 = vperm.xlu0 %1082, %v1064
    %v1084 = vpop.permute.xlu0 %1083
    %v1086 = vlaneseq
    %v1087 = vshrl.u32 %v1086, 7
    %v1088 = vsub.s32 1, %v1087
    %v1089 = vrot.slane %v1061, %v1088
    %v1090 = vlaneseq
    %v1091 = vshrl.u32 %v1090, 7
    %v1092 = vsub.s32 1, %v1091
    %v1093 = vrot.slane %v1062, %v1092
    %v1094 = vmul.f32 %v1084, %v1089
    %v1095 = vmul.f32 %v1084, %v1093
    %v1096 = vadd.f32 %v1080, %v1094
    %v1097 = vadd.f32 %v1081, %v1095
    %1098 = vset.pattern.permute.xlu0 2
    %1099 = vperm.xlu0 %1098, %v1064
    %v1100 = vpop.permute.xlu0 %1099
    %v1102 = vlaneseq
    %v1103 = vshrl.u32 %v1102, 7
    %v1104 = vsub.s32 2, %v1103
    %v1105 = vrot.slane %v1061, %v1104
    %v1106 = vlaneseq
    %v1107 = vshrl.u32 %v1106, 7
    %v1108 = vsub.s32 2, %v1107
    %v1109 = vrot.slane %v1062, %v1108
    %v1110 = vmul.f32 %v1100, %v1105
    %v1111 = vmul.f32 %v1100, %v1109
    %v1112 = vadd.f32 %v1096, %v1110
    %v1113 = vadd.f32 %v1097, %v1111
    %1114 = vset.pattern.permute.xlu0 3
    %1115 = vperm.xlu0 %1114, %v1064
    %v1116 = vpop.permute.xlu0 %1115
    %v1118 = vlaneseq
    %v1119 = vshrl.u32 %v1118, 7
    %v1120 = vsub.s32 3, %v1119
    %v1121 = vrot.slane %v1061, %v1120
    %v1122 = vlaneseq
    %v1123 = vshrl.u32 %v1122, 7
    %v1124 = vsub.s32 3, %v1123
    %v1125 = vrot.slane %v1062, %v1124
    %v1126 = vmul.f32 %v1116, %v1121
    %v1127 = vmul.f32 %v1116, %v1125
    %v1128 = vadd.f32 %v1112, %v1126
    %v1129 = vadd.f32 %v1113, %v1127
    %1130 = vrot.lane.b32.xlu0 %v904, 1
    %v1131 = vpop.permute.xlu0 %1130
    %1132 = vrot.lane.b32.xlu0 %v905, 1
    %v1133 = vpop.permute.xlu0 %1132
    %v1134 = vsel %vm337, %v1131, %v1133
    %v1135 = vsel %vm337, %v1133, %v1131
    %v1136 = vmul.f32 %v1135, %v344
    %v1137 = vmul.f32 %v1134, %v348
    %s1138 = scalar_lea.vmem %s2, 12
    %v1139 = vld [vmem:[%s1138] sm:$0xf]
    %1141 = vset.pattern.permute.xlu0 0
    %1142 = vperm.xlu0 %1141, %v1139
    %v1143 = vpop.permute.xlu0 %1142
    %v1145 = vlaneseq
    %v1146 = vshrl.u32 %v1145, 7
    %v1147 = vsub.s32 0, %v1146
    %v1148 = vrot.slane %v1136, %v1147
    %v1149 = vlaneseq
    %v1150 = vshrl.u32 %v1149, 7
    %v1151 = vsub.s32 0, %v1150
    %v1152 = vrot.slane %v1137, %v1151
    %v1153 = vmul.f32 %v1143, %v1148
    %v1154 = vmul.f32 %v1143, %v1152
    %v1155 = vadd.f32 %v1128, %v1153
    %v1156 = vadd.f32 %v1129, %v1154
    %1157 = vset.pattern.permute.xlu0 1
    %1158 = vperm.xlu0 %1157, %v1139
    %v1159 = vpop.permute.xlu0 %1158
    %v1161 = vlaneseq
    %v1162 = vshrl.u32 %v1161, 7
    %v1163 = vsub.s32 1, %v1162
    %v1164 = vrot.slane %v1136, %v1163
    %v1165 = vlaneseq
    %v1166 = vshrl.u32 %v1165, 7
    %v1167 = vsub.s32 1, %v1166
    %v1168 = vrot.slane %v1137, %v1167
    %v1169 = vmul.f32 %v1159, %v1164
    %v1170 = vmul.f32 %v1159, %v1168
    %v1171 = vadd.f32 %v1155, %v1169
    %v1172 = vadd.f32 %v1156, %v1170
    %1173 = vset.pattern.permute.xlu0 2
    %1174 = vperm.xlu0 %1173, %v1139
    %v1175 = vpop.permute.xlu0 %1174
    %v1177 = vlaneseq
    %v1178 = vshrl.u32 %v1177, 7
    %v1179 = vsub.s32 2, %v1178
    %v1180 = vrot.slane %v1136, %v1179
    %v1181 = vlaneseq
    %v1182 = vshrl.u32 %v1181, 7
    %v1183 = vsub.s32 2, %v1182
    %v1184 = vrot.slane %v1137, %v1183
    %v1185 = vmul.f32 %v1175, %v1180
    %v1186 = vmul.f32 %v1175, %v1184
    %v1187 = vadd.f32 %v1171, %v1185
    %v1188 = vadd.f32 %v1172, %v1186
    %1189 = vset.pattern.permute.xlu0 3
    %1190 = vperm.xlu0 %1189, %v1139
    %v1191 = vpop.permute.xlu0 %1190
    %v1193 = vlaneseq
    %v1194 = vshrl.u32 %v1193, 7
    %v1195 = vsub.s32 3, %v1194
    %v1196 = vrot.slane %v1136, %v1195
    %v1197 = vlaneseq
    %v1198 = vshrl.u32 %v1197, 7
    %v1199 = vsub.s32 3, %v1198
    %v1200 = vrot.slane %v1137, %v1199
    %v1201 = vmul.f32 %v1191, %v1196
    %v1202 = vmul.f32 %v1191, %v1200
    %v1203 = vadd.f32 %v1187, %v1201
    %v1204 = vadd.f32 %v1188, %v1202
    %s1205 = scalar_lea.vmem %s2, 16
    %v1206 = vld [vmem:[%s1205] sm:$0xf]
    %1208 = vset.pattern.permute.xlu0 0
    %1209 = vperm.xlu0 %1208, %v1206
    %v1210 = vpop.permute.xlu0 %1209
    %v1212 = vlaneseq
    %v1213 = vshrl.u32 %v1212, 7
    %v1214 = vsub.s32 0, %v1213
    %v1215 = vrot.slane %v904, %v1214
    %v1216 = vlaneseq
    %v1217 = vshrl.u32 %v1216, 7
    %v1218 = vsub.s32 0, %v1217
    %v1219 = vrot.slane %v905, %v1218
    %v1220 = vmul.f32 %v1210, %v1215
    %v1221 = vmul.f32 %v1210, %v1219
    %v1222 = vadd.f32 %v1203, %v1220
    %v1223 = vadd.f32 %v1204, %v1221
    %1224 = vset.pattern.permute.xlu0 1
    %1225 = vperm.xlu0 %1224, %v1206
    %v1226 = vpop.permute.xlu0 %1225
    %v1228 = vlaneseq
    %v1229 = vshrl.u32 %v1228, 7
    %v1230 = vsub.s32 1, %v1229
    %v1231 = vrot.slane %v904, %v1230
    %v1232 = vlaneseq
    %v1233 = vshrl.u32 %v1232, 7
    %v1234 = vsub.s32 1, %v1233
    %v1235 = vrot.slane %v905, %v1234
    %v1236 = vmul.f32 %v1226, %v1231
    %v1237 = vmul.f32 %v1226, %v1235
    %v1238 = vadd.f32 %v1222, %v1236
    %v1239 = vadd.f32 %v1223, %v1237
    %1240 = vset.pattern.permute.xlu0 2
    %1241 = vperm.xlu0 %1240, %v1206
    %v1242 = vpop.permute.xlu0 %1241
    %v1244 = vlaneseq
    %v1245 = vshrl.u32 %v1244, 7
    %v1246 = vsub.s32 2, %v1245
    %v1247 = vrot.slane %v904, %v1246
    %v1248 = vlaneseq
    %v1249 = vshrl.u32 %v1248, 7
    %v1250 = vsub.s32 2, %v1249
    %v1251 = vrot.slane %v905, %v1250
    %v1252 = vmul.f32 %v1242, %v1247
    %v1253 = vmul.f32 %v1242, %v1251
    %v1254 = vadd.f32 %v1238, %v1252
    %v1255 = vadd.f32 %v1239, %v1253
    %1256 = vset.pattern.permute.xlu0 3
    %1257 = vperm.xlu0 %1256, %v1206
    %v1258 = vpop.permute.xlu0 %1257
    %v1260 = vlaneseq
    %v1261 = vshrl.u32 %v1260, 7
    %v1262 = vsub.s32 3, %v1261
    %v1263 = vrot.slane %v904, %v1262
    %v1264 = vlaneseq
    %v1265 = vshrl.u32 %v1264, 7
    %v1266 = vsub.s32 3, %v1265
    %v1267 = vrot.slane %v905, %v1266
    %v1268 = vmul.f32 %v1258, %v1263
    %v1269 = vmul.f32 %v1258, %v1267
    %v1270 = vadd.f32 %v1254, %v1268
    %v1271 = vadd.f32 %v1255, %v1269
    %1272 = vrot.lane.b32.xlu0 %v904, 127
    %v1273 = vpop.permute.xlu0 %1272
    %1274 = vrot.lane.b32.xlu0 %v905, 127
    %v1275 = vpop.permute.xlu0 %1274
    %v1276 = vsel %vm531, %v1273, %v1275
    %v1277 = vsel %vm531, %v1275, %v1273
    %v1278 = vmul.f32 %v1276, %v538
    %v1279 = vmul.f32 %v1277, %v542
    %s1280 = scalar_lea.vmem %s2, 20
    %v1281 = vld [vmem:[%s1280] sm:$0xf]
    %1283 = vset.pattern.permute.xlu0 0
    %1284 = vperm.xlu0 %1283, %v1281
    %v1285 = vpop.permute.xlu0 %1284
    %v1287 = vlaneseq
    %v1288 = vshrl.u32 %v1287, 7
    %v1289 = vsub.s32 0, %v1288
    %v1290 = vrot.slane %v1278, %v1289
    %v1291 = vlaneseq
    %v1292 = vshrl.u32 %v1291, 7
    %v1293 = vsub.s32 0, %v1292
    %v1294 = vrot.slane %v1279, %v1293
    %v1295 = vmul.f32 %v1285, %v1290
    %v1296 = vmul.f32 %v1285, %v1294
    %v1297 = vadd.f32 %v1270, %v1295
    %v1298 = vadd.f32 %v1271, %v1296
    %1299 = vset.pattern.permute.xlu0 1
    %1300 = vperm.xlu0 %1299, %v1281
    %v1301 = vpop.permute.xlu0 %1300
    %v1303 = vlaneseq
    %v1304 = vshrl.u32 %v1303, 7
    %v1305 = vsub.s32 1, %v1304
    %v1306 = vrot.slane %v1278, %v1305
    %v1307 = vlaneseq
    %v1308 = vshrl.u32 %v1307, 7
    %v1309 = vsub.s32 1, %v1308
    %v1310 = vrot.slane %v1279, %v1309
    %v1311 = vmul.f32 %v1301, %v1306
    %v1312 = vmul.f32 %v1301, %v1310
    %v1313 = vadd.f32 %v1297, %v1311
    %v1314 = vadd.f32 %v1298, %v1312
    %1315 = vset.pattern.permute.xlu0 2
    %1316 = vperm.xlu0 %1315, %v1281
    %v1317 = vpop.permute.xlu0 %1316
    %v1319 = vlaneseq
    %v1320 = vshrl.u32 %v1319, 7
    %v1321 = vsub.s32 2, %v1320
    %v1322 = vrot.slane %v1278, %v1321
    %v1323 = vlaneseq
    %v1324 = vshrl.u32 %v1323, 7
    %v1325 = vsub.s32 2, %v1324
    %v1326 = vrot.slane %v1279, %v1325
    %v1327 = vmul.f32 %v1317, %v1322
    %v1328 = vmul.f32 %v1317, %v1326
    %v1329 = vadd.f32 %v1313, %v1327
    %v1330 = vadd.f32 %v1314, %v1328
    %1331 = vset.pattern.permute.xlu0 3
    %1332 = vperm.xlu0 %1331, %v1281
    %v1333 = vpop.permute.xlu0 %1332
    %v1335 = vlaneseq
    %v1336 = vshrl.u32 %v1335, 7
    %v1337 = vsub.s32 3, %v1336
    %v1338 = vrot.slane %v1278, %v1337
    %v1339 = vlaneseq
    %v1340 = vshrl.u32 %v1339, 7
    %v1341 = vsub.s32 3, %v1340
    %v1342 = vrot.slane %v1279, %v1341
    %v1343 = vmul.f32 %v1333, %v1338
    %v1344 = vmul.f32 %v1333, %v1342
    %v1345 = vadd.f32 %v1329, %v1343
    %v1346 = vadd.f32 %v1330, %v1344
    %1347 = vrot.lane.b32.xlu0 %v904, 113
    %v1348 = vpop.permute.xlu0 %1347
    %1349 = vrot.lane.b32.xlu0 %v905, 113
    %v1350 = vpop.permute.xlu0 %1349
    %v1351 = vsel %vm618, %v1348, %v1350
    %v1352 = vsel %vm618, %v1350, %v1348
    %v1353 = vmul.f32 %v1351, %v625
    %v1354 = vmul.f32 %v1352, %v629
    %s1355 = scalar_lea.vmem %s2, 24
    %v1356 = vld [vmem:[%s1355] sm:$0xf]
    %1358 = vset.pattern.permute.xlu0 0
    %1359 = vperm.xlu0 %1358, %v1356
    %v1360 = vpop.permute.xlu0 %1359
    %v1362 = vlaneseq
    %v1363 = vshrl.u32 %v1362, 7
    %v1364 = vsub.s32 0, %v1363
    %v1365 = vrot.slane %v1353, %v1364
    %v1366 = vlaneseq
    %v1367 = vshrl.u32 %v1366, 7
    %v1368 = vsub.s32 0, %v1367
    %v1369 = vrot.slane %v1354, %v1368
    %v1370 = vmul.f32 %v1360, %v1365
    %v1371 = vmul.f32 %v1360, %v1369
    %v1372 = vadd.f32 %v1345, %v1370
    %v1373 = vadd.f32 %v1346, %v1371
    %1374 = vset.pattern.permute.xlu0 1
    %1375 = vperm.xlu0 %1374, %v1356
    %v1376 = vpop.permute.xlu0 %1375
    %v1378 = vlaneseq
    %v1379 = vshrl.u32 %v1378, 7
    %v1380 = vsub.s32 1, %v1379
    %v1381 = vrot.slane %v1353, %v1380
    %v1382 = vlaneseq
    %v1383 = vshrl.u32 %v1382, 7
    %v1384 = vsub.s32 1, %v1383
    %v1385 = vrot.slane %v1354, %v1384
    %v1386 = vmul.f32 %v1376, %v1381
    %v1387 = vmul.f32 %v1376, %v1385
    %v1388 = vadd.f32 %v1372, %v1386
    %v1389 = vadd.f32 %v1373, %v1387
    %1390 = vset.pattern.permute.xlu0 2
    %1391 = vperm.xlu0 %1390, %v1356
    %v1392 = vpop.permute.xlu0 %1391
    %v1394 = vlaneseq
    %v1395 = vshrl.u32 %v1394, 7
    %v1396 = vsub.s32 2, %v1395
    %v1397 = vrot.slane %v1353, %v1396
    %v1398 = vlaneseq
    %v1399 = vshrl.u32 %v1398, 7
    %v1400 = vsub.s32 2, %v1399
    %v1401 = vrot.slane %v1354, %v1400
    %v1402 = vmul.f32 %v1392, %v1397
    %v1403 = vmul.f32 %v1392, %v1401
    %v1404 = vadd.f32 %v1388, %v1402
    %v1405 = vadd.f32 %v1389, %v1403
    %1406 = vset.pattern.permute.xlu0 3
    %1407 = vperm.xlu0 %1406, %v1356
    %v1408 = vpop.permute.xlu0 %1407
    %v1410 = vlaneseq
    %v1411 = vshrl.u32 %v1410, 7
    %v1412 = vsub.s32 3, %v1411
    %v1413 = vrot.slane %v1353, %v1412
    %v1414 = vlaneseq
    %v1415 = vshrl.u32 %v1414, 7
    %v1416 = vsub.s32 3, %v1415
    %v1417 = vrot.slane %v1354, %v1416
    %v1418 = vmul.f32 %v1408, %v1413
    %v1419 = vmul.f32 %v1408, %v1417
    %v1420 = vadd.f32 %v1404, %v1418
    %v1421 = vadd.f32 %v1405, %v1419
    %1422 = vrot.lane.b32.xlu0 %v904, 112
    %v1423 = vpop.permute.xlu0 %1422
    %1424 = vrot.lane.b32.xlu0 %v905, 112
    %v1425 = vpop.permute.xlu0 %1424
    %v1426 = vsel %vm705, %v1423, %v1425
    %v1427 = vsel %vm705, %v1425, %v1423
    %v1428 = vmul.f32 %v1426, %v712
    %v1429 = vmul.f32 %v1427, %v716
    %s1430 = scalar_lea.vmem %s2, 28
    %v1431 = vld [vmem:[%s1430] sm:$0xf]
    %1433 = vset.pattern.permute.xlu0 0
    %1434 = vperm.xlu0 %1433, %v1431
    %v1435 = vpop.permute.xlu0 %1434
    %v1437 = vlaneseq
    %v1438 = vshrl.u32 %v1437, 7
    %v1439 = vsub.s32 0, %v1438
    %v1440 = vrot.slane %v1428, %v1439
    %v1441 = vlaneseq
    %v1442 = vshrl.u32 %v1441, 7
    %v1443 = vsub.s32 0, %v1442
    %v1444 = vrot.slane %v1429, %v1443
    %v1445 = vmul.f32 %v1435, %v1440
    %v1446 = vmul.f32 %v1435, %v1444
    %v1447 = vadd.f32 %v1420, %v1445
    %v1448 = vadd.f32 %v1421, %v1446
    %1449 = vset.pattern.permute.xlu0 1
    %1450 = vperm.xlu0 %1449, %v1431
    %v1451 = vpop.permute.xlu0 %1450
    %v1453 = vlaneseq
    %v1454 = vshrl.u32 %v1453, 7
    %v1455 = vsub.s32 1, %v1454
    %v1456 = vrot.slane %v1428, %v1455
    %v1457 = vlaneseq
    %v1458 = vshrl.u32 %v1457, 7
    %v1459 = vsub.s32 1, %v1458
    %v1460 = vrot.slane %v1429, %v1459
    %v1461 = vmul.f32 %v1451, %v1456
    %v1462 = vmul.f32 %v1451, %v1460
    %v1463 = vadd.f32 %v1447, %v1461
    %v1464 = vadd.f32 %v1448, %v1462
    %1465 = vset.pattern.permute.xlu0 2
    %1466 = vperm.xlu0 %1465, %v1431
    %v1467 = vpop.permute.xlu0 %1466
    %v1469 = vlaneseq
    %v1470 = vshrl.u32 %v1469, 7
    %v1471 = vsub.s32 2, %v1470
    %v1472 = vrot.slane %v1428, %v1471
    %v1473 = vlaneseq
    %v1474 = vshrl.u32 %v1473, 7
    %v1475 = vsub.s32 2, %v1474
    %v1476 = vrot.slane %v1429, %v1475
    %v1477 = vmul.f32 %v1467, %v1472
    %v1478 = vmul.f32 %v1467, %v1476
    %v1479 = vadd.f32 %v1463, %v1477
    %v1480 = vadd.f32 %v1464, %v1478
    %1481 = vset.pattern.permute.xlu0 3
    %1482 = vperm.xlu0 %1481, %v1431
    %v1483 = vpop.permute.xlu0 %1482
    %v1485 = vlaneseq
    %v1486 = vshrl.u32 %v1485, 7
    %v1487 = vsub.s32 3, %v1486
    %v1488 = vrot.slane %v1428, %v1487
    %v1489 = vlaneseq
    %v1490 = vshrl.u32 %v1489, 7
    %v1491 = vsub.s32 3, %v1490
    %v1492 = vrot.slane %v1429, %v1491
    %v1493 = vmul.f32 %v1483, %v1488
    %v1494 = vmul.f32 %v1483, %v1492
    %v1495 = vadd.f32 %v1479, %v1493
    %v1496 = vadd.f32 %v1480, %v1494
    %1497 = vrot.lane.b32.xlu0 %v904, 111
    %v1498 = vpop.permute.xlu0 %1497
    %1499 = vrot.lane.b32.xlu0 %v905, 111
    %v1500 = vpop.permute.xlu0 %1499
    %v1501 = vsel %vm792, %v1498, %v1500
    %v1502 = vsel %vm792, %v1500, %v1498
    %v1503 = vmul.f32 %v1501, %v799
    %v1504 = vmul.f32 %v1502, %v803
    %s1505 = scalar_lea.vmem %s2, 32
    %v1506 = vld [vmem:[%s1505] sm:$0xf]
    %1508 = vset.pattern.permute.xlu0 0
    %1509 = vperm.xlu0 %1508, %v1506
    %v1510 = vpop.permute.xlu0 %1509
    %v1512 = vlaneseq
    %v1513 = vshrl.u32 %v1512, 7
    %v1514 = vsub.s32 0, %v1513
    %v1515 = vrot.slane %v1503, %v1514
    %v1516 = vlaneseq
    %v1517 = vshrl.u32 %v1516, 7
    %v1518 = vsub.s32 0, %v1517
    %v1519 = vrot.slane %v1504, %v1518
    %v1520 = vmul.f32 %v1510, %v1515
    %v1521 = vmul.f32 %v1510, %v1519
    %v1522 = vadd.f32 %v1495, %v1520
    %v1523 = vadd.f32 %v1496, %v1521
    %1524 = vset.pattern.permute.xlu0 1
    %1525 = vperm.xlu0 %1524, %v1506
    %v1526 = vpop.permute.xlu0 %1525
    %v1528 = vlaneseq
    %v1529 = vshrl.u32 %v1528, 7
    %v1530 = vsub.s32 1, %v1529
    %v1531 = vrot.slane %v1503, %v1530
    %v1532 = vlaneseq
    %v1533 = vshrl.u32 %v1532, 7
    %v1534 = vsub.s32 1, %v1533
    %v1535 = vrot.slane %v1504, %v1534
    %v1536 = vmul.f32 %v1526, %v1531
    %v1537 = vmul.f32 %v1526, %v1535
    %v1538 = vadd.f32 %v1522, %v1536
    %v1539 = vadd.f32 %v1523, %v1537
    %1540 = vset.pattern.permute.xlu0 2
    %1541 = vperm.xlu0 %1540, %v1506
    %v1542 = vpop.permute.xlu0 %1541
    %v1544 = vlaneseq
    %v1545 = vshrl.u32 %v1544, 7
    %v1546 = vsub.s32 2, %v1545
    %v1547 = vrot.slane %v1503, %v1546
    %v1548 = vlaneseq
    %v1549 = vshrl.u32 %v1548, 7
    %v1550 = vsub.s32 2, %v1549
    %v1551 = vrot.slane %v1504, %v1550
    %v1552 = vmul.f32 %v1542, %v1547
    %v1553 = vmul.f32 %v1542, %v1551
    %v1554 = vadd.f32 %v1538, %v1552
    %v1555 = vadd.f32 %v1539, %v1553
    %1556 = vset.pattern.permute.xlu0 3
    %1557 = vperm.xlu0 %1556, %v1506
    %v1558 = vpop.permute.xlu0 %1557
    %v1560 = vlaneseq
    %v1561 = vshrl.u32 %v1560, 7
    %v1562 = vsub.s32 3, %v1561
    %v1563 = vrot.slane %v1503, %v1562
    %v1564 = vlaneseq
    %v1565 = vshrl.u32 %v1564, 7
    %v1566 = vsub.s32 3, %v1565
    %v1567 = vrot.slane %v1504, %v1566
    %v1568 = vmul.f32 %v1558, %v1563
    %v1569 = vmul.f32 %v1558, %v1567
    %v1570 = vadd.f32 %v1554, %v1568
    %v1571 = vadd.f32 %v1555, %v1569
    %v1572 = vld [vmem:[%s9] sm:$0x3]
    %v1573 = vstv %s66
    %v1574 = vmul.f32 %v1573, %v1572
    %v1576 = vlaneseq
    %v1577 = vshrl.u32 %v1576, 7
    %v1578 = vsub.s32 0, %v1577
    %v1579 = vrot.slane %v1574, %v1578
    %v1580 = vlaneseq
    %v1581 = vshrl.u32 %v1580, 7
    %v1582 = vsub.s32 1, %v1581
    %v1583 = vrot.slane %v1574, %v1582
    %v1586 = vadd.f32 %v1570, %v1579
    %v1587 = vadd.f32 %v1571, %v1583
    %1589 = vset.pattern.permute.xlu0 0
    %1590 = vperm.xlu0 %1589, %v64
    %v1591 = vpop.permute.xlu0 %1590
    %v1593 = vadd.f32 %v1586, %v1591
    %v1594 = vadd.f32 %v1587, %v1591
    %vm1595 = vcmp.ge.f32.partialorder %v1593, 0.0
    %vm1596 = vcmp.ge.f32.partialorder %v1594, 0.0
    %v1597 = vmul.f32 %v1593, 0.2
    %v1598 = vmul.f32 %v1594, 0.2
    %v1599 = vsel %vm1595, %v1593, %v1597
    %v1600 = vsel %vm1596, %v1594, %v1598
    %v1601 = vmul.f32 %v1599, 1.4142135
    %v1602 = vmul.f32 %v1600, 1.4142135
    %v1603 = vld [vmem:[%s3] sm:$0x1]
    %1605 = vset.pattern.permute.xlu0 0
    %1606 = vperm.xlu0 %1605, %v1603
    %v1607 = vpop.permute.xlu0 %1606
    %v1609 = vlaneseq
    %v1610 = vshrl.u32 %v1609, 7
    %v1611 = vsub.s32 0, %v1610
    %v1612 = vrot.slane %v1607, %v1611
    %v1613 = vmul.f32 %v1612, %v1601
    %v1614 = vmul.f32 %v1612, %v1602
    %v1615 = vadd.f32 %v1613, 0.0
    %v1616 = vadd.f32 %v1614, 0.0
    %1617 = vset.pattern.permute.xlu0 1
    %1618 = vperm.xlu0 %1617, %v1603
    %v1619 = vpop.permute.xlu0 %1618
    %v1621 = vlaneseq
    %v1622 = vshrl.u32 %v1621, 7
    %v1623 = vsub.s32 0, %v1622
    %v1624 = vrot.slane %v1619, %v1623
    %v1625 = vmul.f32 %v1624, %v1601
    %v1626 = vmul.f32 %v1624, %v1602
    %v1629 = vrot.slane %v1625, 1
    %v1630 = vrot.slane %v1626, 1
    %v1633 = vadd.f32 %v1615, %v1629
    %v1634 = vadd.f32 %v1616, %v1630
    %1635 = vset.pattern.permute.xlu0 2
    %1636 = vperm.xlu0 %1635, %v1603
    %v1637 = vpop.permute.xlu0 %1636
    %v1639 = vlaneseq
    %v1640 = vshrl.u32 %v1639, 7
    %v1641 = vsub.s32 0, %v1640
    %v1642 = vrot.slane %v1637, %v1641
    %v1643 = vmul.f32 %v1642, %v1601
    %v1644 = vmul.f32 %v1642, %v1602
    %v1647 = vrot.slane %v1643, 2
    %v1648 = vrot.slane %v1644, 2
    %v1651 = vadd.f32 %v1633, %v1647
    %v1652 = vadd.f32 %v1634, %v1648
    %1653 = vset.pattern.permute.xlu0 3
    %1654 = vperm.xlu0 %1653, %v1603
    %v1655 = vpop.permute.xlu0 %1654
    %v1657 = vlaneseq
    %v1658 = vshrl.u32 %v1657, 7
    %v1659 = vsub.s32 0, %v1658
    %v1660 = vrot.slane %v1655, %v1659
    %v1661 = vmul.f32 %v1660, %v1601
    %v1662 = vmul.f32 %v1660, %v1602
    %v1665 = vrot.slane %v1661, 3
    %v1666 = vrot.slane %v1662, 3
    %v1669 = vadd.f32 %v1651, %v1665
    %v1670 = vadd.f32 %v1652, %v1666
    %v1673 = vcombine.low %v1669, %v1670
    %v1675 = vunpack.c.l.s4 1966171168
    %v1676 = vunpack.c.0.s8 %v1675
    %v1677 = vlaneseq
    %v1678 = vshrl.u32 %v1677, 7
    %v1679 = vsub.s32 %v1676, %v1678
    %v1680 = vrot.slane %v1673, %v1679
    %v1682 = vunpack.c.l.s4 1966171168
    %v1683 = vunpack.c.0.s8 %v1682
    %v1684 = vlaneseq
    %v1685 = vshrl.u32 %v1684, 7
    %v1686 = vsub.s32 %v1683, %v1685
    %v1687 = vrot.slane %v1680, %v1686
    %v1689 = vlaneseq
    %vm1690 = vcmp.ge.s32.totalorder %v1689, 0
    %vm1691 = vcmp.lt.s32.totalorder %v1689, 256
    %vm1692 = vmand %vm1690, %vm1691
    %1693 = vst.msk [vmem:[%s10] sm:$0x3] %vm1692, %v1687
    %s1694 = scalar_lea.vmem %s7, 8
    %v1695 = vld [vmem:[%s1694] sm:$0xff]
    %v1697 = vcombine.high %v1695, %v1695
    %1699 = vrot.lane.b32.xlu0 %v1695, 17
    %v1700 = vpop.permute.xlu0 %1699
    %1701 = vrot.lane.b32.xlu0 %v1697, 17
    %v1702 = vpop.permute.xlu0 %1701
    %v1703 = vsel %vm77, %v1700, %v1702
    %v1704 = vsel %vm77, %v1702, %v1700
    %v1705 = vmul.f32 %v1704, %v84
    %v1706 = vmul.f32 %v1703, %v88
    %s1707 = scalar_lea.vmem %s1, 36
    %v1708 = vld [vmem:[%s1707] sm:$0xf]
    %1710 = vset.pattern.permute.xlu0 0
    %1711 = vperm.xlu0 %1710, %v1708
    %v1712 = vpop.permute.xlu0 %1711
    %v1714 = vlaneseq
    %v1715 = vshrl.u32 %v1714, 7
    %v1716 = vsub.s32 0, %v1715
    %v1717 = vrot.slane %v1705, %v1716
    %v1718 = vlaneseq
    %v1719 = vshrl.u32 %v1718, 7
    %v1720 = vsub.s32 0, %v1719
    %v1721 = vrot.slane %v1706, %v1720
    %v1722 = vmul.f32 %v1712, %v1717
    %v1723 = vmul.f32 %v1712, %v1721
    %v1724 = vadd.f32 %v1722, 0.0
    %v1725 = vadd.f32 %v1723, 0.0
    %1726 = vset.pattern.permute.xlu0 1
    %1727 = vperm.xlu0 %1726, %v1708
    %v1728 = vpop.permute.xlu0 %1727
    %v1730 = vlaneseq
    %v1731 = vshrl.u32 %v1730, 7
    %v1732 = vsub.s32 1, %v1731
    %v1733 = vrot.slane %v1705, %v1732
    %v1734 = vlaneseq
    %v1735 = vshrl.u32 %v1734, 7
    %v1736 = vsub.s32 1, %v1735
    %v1737 = vrot.slane %v1706, %v1736
    %v1738 = vmul.f32 %v1728, %v1733
    %v1739 = vmul.f32 %v1728, %v1737
    %v1740 = vadd.f32 %v1724, %v1738
    %v1741 = vadd.f32 %v1725, %v1739
    %1742 = vset.pattern.permute.xlu0 2
    %1743 = vperm.xlu0 %1742, %v1708
    %v1744 = vpop.permute.xlu0 %1743
    %v1746 = vlaneseq
    %v1747 = vshrl.u32 %v1746, 7
    %v1748 = vsub.s32 2, %v1747
    %v1749 = vrot.slane %v1705, %v1748
    %v1750 = vlaneseq
    %v1751 = vshrl.u32 %v1750, 7
    %v1752 = vsub.s32 2, %v1751
    %v1753 = vrot.slane %v1706, %v1752
    %v1754 = vmul.f32 %v1744, %v1749
    %v1755 = vmul.f32 %v1744, %v1753
    %v1756 = vadd.f32 %v1740, %v1754
    %v1757 = vadd.f32 %v1741, %v1755
    %1758 = vset.pattern.permute.xlu0 3
    %1759 = vperm.xlu0 %1758, %v1708
    %v1760 = vpop.permute.xlu0 %1759
    %v1762 = vlaneseq
    %v1763 = vshrl.u32 %v1762, 7
    %v1764 = vsub.s32 3, %v1763
    %v1765 = vrot.slane %v1705, %v1764
    %v1766 = vlaneseq
    %v1767 = vshrl.u32 %v1766, 7
    %v1768 = vsub.s32 3, %v1767
    %v1769 = vrot.slane %v1706, %v1768
    %v1770 = vmul.f32 %v1760, %v1765
    %v1771 = vmul.f32 %v1760, %v1769
    %v1772 = vadd.f32 %v1756, %v1770
    %v1773 = vadd.f32 %v1757, %v1771
    %1774 = vrot.lane.b32.xlu0 %v1695, 16
    %v1775 = vpop.permute.xlu0 %1774
    %1776 = vrot.lane.b32.xlu0 %v1697, 16
    %v1777 = vpop.permute.xlu0 %1776
    %v1778 = vsel %vm163, %v1775, %v1777
    %v1779 = vsel %vm163, %v1777, %v1775
    %v1780 = vmul.f32 %v1779, %v170
    %v1781 = vmul.f32 %v1778, %v174
    %s1782 = scalar_lea.vmem %s1, 40
    %v1783 = vld [vmem:[%s1782] sm:$0xf]
    %1785 = vset.pattern.permute.xlu0 0
    %1786 = vperm.xlu0 %1785, %v1783
    %v1787 = vpop.permute.xlu0 %1786
    %v1789 = vlaneseq
    %v1790 = vshrl.u32 %v1789, 7
    %v1791 = vsub.s32 0, %v1790
    %v1792 = vrot.slane %v1780, %v1791
    %v1793 = vlaneseq
    %v1794 = vshrl.u32 %v1793, 7
    %v1795 = vsub.s32 0, %v1794
    %v1796 = vrot.slane %v1781, %v1795
    %v1797 = vmul.f32 %v1787, %v1792
    %v1798 = vmul.f32 %v1787, %v1796
    %v1799 = vadd.f32 %v1772, %v1797
    %v1800 = vadd.f32 %v1773, %v1798
    %1801 = vset.pattern.permute.xlu0 1
    %1802 = vperm.xlu0 %1801, %v1783
    %v1803 = vpop.permute.xlu0 %1802
    %v1805 = vlaneseq
    %v1806 = vshrl.u32 %v1805, 7
    %v1807 = vsub.s32 1, %v1806
    %v1808 = vrot.slane %v1780, %v1807
    %v1809 = vlaneseq
    %v1810 = vshrl.u32 %v1809, 7
    %v1811 = vsub.s32 1, %v1810
    %v1812 = vrot.slane %v1781, %v1811
    %v1813 = vmul.f32 %v1803, %v1808
    %v1814 = vmul.f32 %v1803, %v1812
    %v1815 = vadd.f32 %v1799, %v1813
    %v1816 = vadd.f32 %v1800, %v1814
    %1817 = vset.pattern.permute.xlu0 2
    %1818 = vperm.xlu0 %1817, %v1783
    %v1819 = vpop.permute.xlu0 %1818
    %v1821 = vlaneseq
    %v1822 = vshrl.u32 %v1821, 7
    %v1823 = vsub.s32 2, %v1822
    %v1824 = vrot.slane %v1780, %v1823
    %v1825 = vlaneseq
    %v1826 = vshrl.u32 %v1825, 7
    %v1827 = vsub.s32 2, %v1826
    %v1828 = vrot.slane %v1781, %v1827
    %v1829 = vmul.f32 %v1819, %v1824
    %v1830 = vmul.f32 %v1819, %v1828
    %v1831 = vadd.f32 %v1815, %v1829
    %v1832 = vadd.f32 %v1816, %v1830
    %1833 = vset.pattern.permute.xlu0 3
    %1834 = vperm.xlu0 %1833, %v1783
    %v1835 = vpop.permute.xlu0 %1834
    %v1837 = vlaneseq
    %v1838 = vshrl.u32 %v1837, 7
    %v1839 = vsub.s32 3, %v1838
    %v1840 = vrot.slane %v1780, %v1839
    %v1841 = vlaneseq
    %v1842 = vshrl.u32 %v1841, 7
    %v1843 = vsub.s32 3, %v1842
    %v1844 = vrot.slane %v1781, %v1843
    %v1845 = vmul.f32 %v1835, %v1840
    %v1846 = vmul.f32 %v1835, %v1844
    %v1847 = vadd.f32 %v1831, %v1845
    %v1848 = vadd.f32 %v1832, %v1846
    %1849 = vrot.lane.b32.xlu0 %v1695, 15
    %v1850 = vpop.permute.xlu0 %1849
    %1851 = vrot.lane.b32.xlu0 %v1697, 15
    %v1852 = vpop.permute.xlu0 %1851
    %v1853 = vsel %vm250, %v1850, %v1852
    %v1854 = vsel %vm250, %v1852, %v1850
    %v1855 = vmul.f32 %v1854, %v257
    %v1856 = vmul.f32 %v1853, %v261
    %s1857 = scalar_lea.vmem %s1, 44
    %v1858 = vld [vmem:[%s1857] sm:$0xf]
    %1860 = vset.pattern.permute.xlu0 0
    %1861 = vperm.xlu0 %1860, %v1858
    %v1862 = vpop.permute.xlu0 %1861
    %v1864 = vlaneseq
    %v1865 = vshrl.u32 %v1864, 7
    %v1866 = vsub.s32 0, %v1865
    %v1867 = vrot.slane %v1855, %v1866
    %v1868 = vlaneseq
    %v1869 = vshrl.u32 %v1868, 7
    %v1870 = vsub.s32 0, %v1869
    %v1871 = vrot.slane %v1856, %v1870
    %v1872 = vmul.f32 %v1862, %v1867
    %v1873 = vmul.f32 %v1862, %v1871
    %v1874 = vadd.f32 %v1847, %v1872
    %v1875 = vadd.f32 %v1848, %v1873
    %1876 = vset.pattern.permute.xlu0 1
    %1877 = vperm.xlu0 %1876, %v1858
    %v1878 = vpop.permute.xlu0 %1877
    %v1880 = vlaneseq
    %v1881 = vshrl.u32 %v1880, 7
    %v1882 = vsub.s32 1, %v1881
    %v1883 = vrot.slane %v1855, %v1882
    %v1884 = vlaneseq
    %v1885 = vshrl.u32 %v1884, 7
    %v1886 = vsub.s32 1, %v1885
    %v1887 = vrot.slane %v1856, %v1886
    %v1888 = vmul.f32 %v1878, %v1883
    %v1889 = vmul.f32 %v1878, %v1887
    %v1890 = vadd.f32 %v1874, %v1888
    %v1891 = vadd.f32 %v1875, %v1889
    %1892 = vset.pattern.permute.xlu0 2
    %1893 = vperm.xlu0 %1892, %v1858
    %v1894 = vpop.permute.xlu0 %1893
    %v1896 = vlaneseq
    %v1897 = vshrl.u32 %v1896, 7
    %v1898 = vsub.s32 2, %v1897
    %v1899 = vrot.slane %v1855, %v1898
    %v1900 = vlaneseq
    %v1901 = vshrl.u32 %v1900, 7
    %v1902 = vsub.s32 2, %v1901
    %v1903 = vrot.slane %v1856, %v1902
    %v1904 = vmul.f32 %v1894, %v1899
    %v1905 = vmul.f32 %v1894, %v1903
    %v1906 = vadd.f32 %v1890, %v1904
    %v1907 = vadd.f32 %v1891, %v1905
    %1908 = vset.pattern.permute.xlu0 3
    %1909 = vperm.xlu0 %1908, %v1858
    %v1910 = vpop.permute.xlu0 %1909
    %v1912 = vlaneseq
    %v1913 = vshrl.u32 %v1912, 7
    %v1914 = vsub.s32 3, %v1913
    %v1915 = vrot.slane %v1855, %v1914
    %v1916 = vlaneseq
    %v1917 = vshrl.u32 %v1916, 7
    %v1918 = vsub.s32 3, %v1917
    %v1919 = vrot.slane %v1856, %v1918
    %v1920 = vmul.f32 %v1910, %v1915
    %v1921 = vmul.f32 %v1910, %v1919
    %v1922 = vadd.f32 %v1906, %v1920
    %v1923 = vadd.f32 %v1907, %v1921
    %1924 = vrot.lane.b32.xlu0 %v1695, 1
    %v1925 = vpop.permute.xlu0 %1924
    %1926 = vrot.lane.b32.xlu0 %v1697, 1
    %v1927 = vpop.permute.xlu0 %1926
    %v1928 = vsel %vm337, %v1925, %v1927
    %v1929 = vsel %vm337, %v1927, %v1925
    %v1930 = vmul.f32 %v1929, %v344
    %v1931 = vmul.f32 %v1928, %v348
    %s1932 = scalar_lea.vmem %s1, 48
    %v1933 = vld [vmem:[%s1932] sm:$0xf]
    %1935 = vset.pattern.permute.xlu0 0
    %1936 = vperm.xlu0 %1935, %v1933
    %v1937 = vpop.permute.xlu0 %1936
    %v1939 = vlaneseq
    %v1940 = vshrl.u32 %v1939, 7
    %v1941 = vsub.s32 0, %v1940
    %v1942 = vrot.slane %v1930, %v1941
    %v1943 = vlaneseq
    %v1944 = vshrl.u32 %v1943, 7
    %v1945 = vsub.s32 0, %v1944
    %v1946 = vrot.slane %v1931, %v1945
    %v1947 = vmul.f32 %v1937, %v1942
    %v1948 = vmul.f32 %v1937, %v1946
    %v1949 = vadd.f32 %v1922, %v1947
    %v1950 = vadd.f32 %v1923, %v1948
    %1951 = vset.pattern.permute.xlu0 1
    %1952 = vperm.xlu0 %1951, %v1933
    %v1953 = vpop.permute.xlu0 %1952
    %v1955 = vlaneseq
    %v1956 = vshrl.u32 %v1955, 7
    %v1957 = vsub.s32 1, %v1956
    %v1958 = vrot.slane %v1930, %v1957
    %v1959 = vlaneseq
    %v1960 = vshrl.u32 %v1959, 7
    %v1961 = vsub.s32 1, %v1960
    %v1962 = vrot.slane %v1931, %v1961
    %v1963 = vmul.f32 %v1953, %v1958
    %v1964 = vmul.f32 %v1953, %v1962
    %v1965 = vadd.f32 %v1949, %v1963
    %v1966 = vadd.f32 %v1950, %v1964
    %1967 = vset.pattern.permute.xlu0 2
    %1968 = vperm.xlu0 %1967, %v1933
    %v1969 = vpop.permute.xlu0 %1968
    %v1971 = vlaneseq
    %v1972 = vshrl.u32 %v1971, 7
    %v1973 = vsub.s32 2, %v1972
    %v1974 = vrot.slane %v1930, %v1973
    %v1975 = vlaneseq
    %v1976 = vshrl.u32 %v1975, 7
    %v1977 = vsub.s32 2, %v1976
    %v1978 = vrot.slane %v1931, %v1977
    %v1979 = vmul.f32 %v1969, %v1974
    %v1980 = vmul.f32 %v1969, %v1978
    %v1981 = vadd.f32 %v1965, %v1979
    %v1982 = vadd.f32 %v1966, %v1980
    %1983 = vset.pattern.permute.xlu0 3
    %1984 = vperm.xlu0 %1983, %v1933
    %v1985 = vpop.permute.xlu0 %1984
    %v1987 = vlaneseq
    %v1988 = vshrl.u32 %v1987, 7
    %v1989 = vsub.s32 3, %v1988
    %v1990 = vrot.slane %v1930, %v1989
    %v1991 = vlaneseq
    %v1992 = vshrl.u32 %v1991, 7
    %v1993 = vsub.s32 3, %v1992
    %v1994 = vrot.slane %v1931, %v1993
    %v1995 = vmul.f32 %v1985, %v1990
    %v1996 = vmul.f32 %v1985, %v1994
    %v1997 = vadd.f32 %v1981, %v1995
    %v1998 = vadd.f32 %v1982, %v1996
    %s1999 = scalar_lea.vmem %s1, 52
    %v2000 = vld [vmem:[%s1999] sm:$0xf]
    %2002 = vset.pattern.permute.xlu0 0
    %2003 = vperm.xlu0 %2002, %v2000
    %v2004 = vpop.permute.xlu0 %2003
    %v2006 = vlaneseq
    %v2007 = vshrl.u32 %v2006, 7
    %v2008 = vsub.s32 0, %v2007
    %v2009 = vrot.slane %v1695, %v2008
    %v2010 = vlaneseq
    %v2011 = vshrl.u32 %v2010, 7
    %v2012 = vsub.s32 4, %v2011
    %v2013 = vrot.slane %v1695, %v2012
    %v2016 = vlaneseq
    %v2017 = vshrl.u32 %v2016, 7
    %v2018 = vsub.s32 0, %v2017
    %v2019 = vrot.slane %v2009, %v2018
    %v2020 = vlaneseq
    %v2021 = vshrl.u32 %v2020, 7
    %v2022 = vsub.s32 0, %v2021
    %v2023 = vrot.slane %v2013, %v2022
    %v2024 = vmul.f32 %v2004, %v2019
    %v2025 = vmul.f32 %v2004, %v2023
    %v2026 = vadd.f32 %v1997, %v2024
    %v2027 = vadd.f32 %v1998, %v2025
    %2028 = vset.pattern.permute.xlu0 1
    %2029 = vperm.xlu0 %2028, %v2000
    %v2030 = vpop.permute.xlu0 %2029
    %v2032 = vlaneseq
    %v2033 = vshrl.u32 %v2032, 7
    %v2034 = vsub.s32 1, %v2033
    %v2035 = vrot.slane %v1695, %v2034
    %v2036 = vlaneseq
    %v2037 = vshrl.u32 %v2036, 7
    %v2038 = vsub.s32 5, %v2037
    %v2039 = vrot.slane %v1695, %v2038
    %v2042 = vlaneseq
    %v2043 = vshrl.u32 %v2042, 7
    %v2044 = vsub.s32 1, %v2043
    %v2045 = vrot.slane %v2035, %v2044
    %v2046 = vlaneseq
    %v2047 = vshrl.u32 %v2046, 7
    %v2048 = vsub.s32 1, %v2047
    %v2049 = vrot.slane %v2039, %v2048
    %v2050 = vmul.f32 %v2030, %v2045
    %v2051 = vmul.f32 %v2030, %v2049
    %v2052 = vadd.f32 %v2026, %v2050
    %v2053 = vadd.f32 %v2027, %v2051
    %2054 = vset.pattern.permute.xlu0 2
    %2055 = vperm.xlu0 %2054, %v2000
    %v2056 = vpop.permute.xlu0 %2055
    %v2058 = vlaneseq
    %v2059 = vshrl.u32 %v2058, 7
    %v2060 = vsub.s32 2, %v2059
    %v2061 = vrot.slane %v1695, %v2060
    %v2062 = vlaneseq
    %v2063 = vshrl.u32 %v2062, 7
    %v2064 = vsub.s32 6, %v2063
    %v2065 = vrot.slane %v1695, %v2064
    %v2068 = vlaneseq
    %v2069 = vshrl.u32 %v2068, 7
    %v2070 = vsub.s32 2, %v2069
    %v2071 = vrot.slane %v2061, %v2070
    %v2072 = vlaneseq
    %v2073 = vshrl.u32 %v2072, 7
    %v2074 = vsub.s32 2, %v2073
    %v2075 = vrot.slane %v2065, %v2074
    %v2076 = vmul.f32 %v2056, %v2071
    %v2077 = vmul.f32 %v2056, %v2075
    %v2078 = vadd.f32 %v2052, %v2076
    %v2079 = vadd.f32 %v2053, %v2077
    %2080 = vset.pattern.permute.xlu0 3
    %2081 = vperm.xlu0 %2080, %v2000
    %v2082 = vpop.permute.xlu0 %2081
    %v2084 = vlaneseq
    %v2085 = vshrl.u32 %v2084, 7
    %v2086 = vsub.s32 3, %v2085
    %v2087 = vrot.slane %v1695, %v2086
    %v2088 = vlaneseq
    %v2089 = vshrl.u32 %v2088, 7
    %v2090 = vsub.s32 7, %v2089
    %v2091 = vrot.slane %v1695, %v2090
    %v2094 = vlaneseq
    %v2095 = vshrl.u32 %v2094, 7
    %v2096 = vsub.s32 3, %v2095
    %v2097 = vrot.slane %v2087, %v2096
    %v2098 = vlaneseq
    %v2099 = vshrl.u32 %v2098, 7
    %v2100 = vsub.s32 3, %v2099
    %v2101 = vrot.slane %v2091, %v2100
    %v2102 = vmul.f32 %v2082, %v2097
    %v2103 = vmul.f32 %v2082, %v2101
    %v2104 = vadd.f32 %v2078, %v2102
    %v2105 = vadd.f32 %v2079, %v2103
    %2106 = vrot.lane.b32.xlu0 %v1695, 127
    %v2107 = vpop.permute.xlu0 %2106
    %2108 = vrot.lane.b32.xlu0 %v1697, 127
    %v2109 = vpop.permute.xlu0 %2108
    %v2110 = vsel %vm531, %v2107, %v2109
    %v2111 = vsel %vm531, %v2109, %v2107
    %v2112 = vmul.f32 %v2110, %v538
    %v2113 = vmul.f32 %v2111, %v542
    %s2114 = scalar_lea.vmem %s1, 56
    %v2115 = vld [vmem:[%s2114] sm:$0xf]
    %2117 = vset.pattern.permute.xlu0 0
    %2118 = vperm.xlu0 %2117, %v2115
    %v2119 = vpop.permute.xlu0 %2118
    %v2121 = vlaneseq
    %v2122 = vshrl.u32 %v2121, 7
    %v2123 = vsub.s32 0, %v2122
    %v2124 = vrot.slane %v2112, %v2123
    %v2125 = vlaneseq
    %v2126 = vshrl.u32 %v2125, 7
    %v2127 = vsub.s32 0, %v2126
    %v2128 = vrot.slane %v2113, %v2127
    %v2129 = vmul.f32 %v2119, %v2124
    %v2130 = vmul.f32 %v2119, %v2128
    %v2131 = vadd.f32 %v2104, %v2129
    %v2132 = vadd.f32 %v2105, %v2130
    %2133 = vset.pattern.permute.xlu0 1
    %2134 = vperm.xlu0 %2133, %v2115
    %v2135 = vpop.permute.xlu0 %2134
    %v2137 = vlaneseq
    %v2138 = vshrl.u32 %v2137, 7
    %v2139 = vsub.s32 1, %v2138
    %v2140 = vrot.slane %v2112, %v2139
    %v2141 = vlaneseq
    %v2142 = vshrl.u32 %v2141, 7
    %v2143 = vsub.s32 1, %v2142
    %v2144 = vrot.slane %v2113, %v2143
    %v2145 = vmul.f32 %v2135, %v2140
    %v2146 = vmul.f32 %v2135, %v2144
    %v2147 = vadd.f32 %v2131, %v2145
    %v2148 = vadd.f32 %v2132, %v2146
    %2149 = vset.pattern.permute.xlu0 2
    %2150 = vperm.xlu0 %2149, %v2115
    %v2151 = vpop.permute.xlu0 %2150
    %v2153 = vlaneseq
    %v2154 = vshrl.u32 %v2153, 7
    %v2155 = vsub.s32 2, %v2154
    %v2156 = vrot.slane %v2112, %v2155
    %v2157 = vlaneseq
    %v2158 = vshrl.u32 %v2157, 7
    %v2159 = vsub.s32 2, %v2158
    %v2160 = vrot.slane %v2113, %v2159
    %v2161 = vmul.f32 %v2151, %v2156
    %v2162 = vmul.f32 %v2151, %v2160
    %v2163 = vadd.f32 %v2147, %v2161
    %v2164 = vadd.f32 %v2148, %v2162
    %2165 = vset.pattern.permute.xlu0 3
    %2166 = vperm.xlu0 %2165, %v2115
    %v2167 = vpop.permute.xlu0 %2166
    %v2169 = vlaneseq
    %v2170 = vshrl.u32 %v2169, 7
    %v2171 = vsub.s32 3, %v2170
    %v2172 = vrot.slane %v2112, %v2171
    %v2173 = vlaneseq
    %v2174 = vshrl.u32 %v2173, 7
    %v2175 = vsub.s32 3, %v2174
    %v2176 = vrot.slane %v2113, %v2175
    %v2177 = vmul.f32 %v2167, %v2172
    %v2178 = vmul.f32 %v2167, %v2176
    %v2179 = vadd.f32 %v2163, %v2177
    %v2180 = vadd.f32 %v2164, %v2178
    %2181 = vrot.lane.b32.xlu0 %v1695, 113
    %v2182 = vpop.permute.xlu0 %2181
    %2183 = vrot.lane.b32.xlu0 %v1697, 113
    %v2184 = vpop.permute.xlu0 %2183
    %v2185 = vsel %vm618, %v2182, %v2184
    %v2186 = vsel %vm618, %v2184, %v2182
    %v2187 = vmul.f32 %v2185, %v625
    %v2188 = vmul.f32 %v2186, %v629
    %s2189 = scalar_lea.vmem %s1, 60
    %v2190 = vld [vmem:[%s2189] sm:$0xf]
    %2192 = vset.pattern.permute.xlu0 0
    %2193 = vperm.xlu0 %2192, %v2190
    %v2194 = vpop.permute.xlu0 %2193
    %v2196 = vlaneseq
    %v2197 = vshrl.u32 %v2196, 7
    %v2198 = vsub.s32 0, %v2197
    %v2199 = vrot.slane %v2187, %v2198
    %v2200 = vlaneseq
    %v2201 = vshrl.u32 %v2200, 7
    %v2202 = vsub.s32 0, %v2201
    %v2203 = vrot.slane %v2188, %v2202
    %v2204 = vmul.f32 %v2194, %v2199
    %v2205 = vmul.f32 %v2194, %v2203
    %v2206 = vadd.f32 %v2179, %v2204
    %v2207 = vadd.f32 %v2180, %v2205
    %2208 = vset.pattern.permute.xlu0 1
    %2209 = vperm.xlu0 %2208, %v2190
    %v2210 = vpop.permute.xlu0 %2209
    %v2212 = vlaneseq
    %v2213 = vshrl.u32 %v2212, 7
    %v2214 = vsub.s32 1, %v2213
    %v2215 = vrot.slane %v2187, %v2214
    %v2216 = vlaneseq
    %v2217 = vshrl.u32 %v2216, 7
    %v2218 = vsub.s32 1, %v2217
    %v2219 = vrot.slane %v2188, %v2218
    %v2220 = vmul.f32 %v2210, %v2215
    %v2221 = vmul.f32 %v2210, %v2219
    %v2222 = vadd.f32 %v2206, %v2220
    %v2223 = vadd.f32 %v2207, %v2221
    %2224 = vset.pattern.permute.xlu0 2
    %2225 = vperm.xlu0 %2224, %v2190
    %v2226 = vpop.permute.xlu0 %2225
    %v2228 = vlaneseq
    %v2229 = vshrl.u32 %v2228, 7
    %v2230 = vsub.s32 2, %v2229
    %v2231 = vrot.slane %v2187, %v2230
    %v2232 = vlaneseq
    %v2233 = vshrl.u32 %v2232, 7
    %v2234 = vsub.s32 2, %v2233
    %v2235 = vrot.slane %v2188, %v2234
    %v2236 = vmul.f32 %v2226, %v2231
    %v2237 = vmul.f32 %v2226, %v2235
    %v2238 = vadd.f32 %v2222, %v2236
    %v2239 = vadd.f32 %v2223, %v2237
    %2240 = vset.pattern.permute.xlu0 3
    %2241 = vperm.xlu0 %2240, %v2190
    %v2242 = vpop.permute.xlu0 %2241
    %v2244 = vlaneseq
    %v2245 = vshrl.u32 %v2244, 7
    %v2246 = vsub.s32 3, %v2245
    %v2247 = vrot.slane %v2187, %v2246
    %v2248 = vlaneseq
    %v2249 = vshrl.u32 %v2248, 7
    %v2250 = vsub.s32 3, %v2249
    %v2251 = vrot.slane %v2188, %v2250
    %v2252 = vmul.f32 %v2242, %v2247
    %v2253 = vmul.f32 %v2242, %v2251
    %v2254 = vadd.f32 %v2238, %v2252
    %v2255 = vadd.f32 %v2239, %v2253
    %2256 = vrot.lane.b32.xlu0 %v1695, 112
    %v2257 = vpop.permute.xlu0 %2256
    %2258 = vrot.lane.b32.xlu0 %v1697, 112
    %v2259 = vpop.permute.xlu0 %2258
    %v2260 = vsel %vm705, %v2257, %v2259
    %v2261 = vsel %vm705, %v2259, %v2257
    %v2262 = vmul.f32 %v2260, %v712
    %v2263 = vmul.f32 %v2261, %v716
    %s2264 = scalar_lea.vmem %s1, 64
    %v2265 = vld [vmem:[%s2264] sm:$0xf]
    %2267 = vset.pattern.permute.xlu0 0
    %2268 = vperm.xlu0 %2267, %v2265
    %v2269 = vpop.permute.xlu0 %2268
    %v2271 = vlaneseq
    %v2272 = vshrl.u32 %v2271, 7
    %v2273 = vsub.s32 0, %v2272
    %v2274 = vrot.slane %v2262, %v2273
    %v2275 = vlaneseq
    %v2276 = vshrl.u32 %v2275, 7
    %v2277 = vsub.s32 0, %v2276
    %v2278 = vrot.slane %v2263, %v2277
    %v2279 = vmul.f32 %v2269, %v2274
    %v2280 = vmul.f32 %v2269, %v2278
    %v2281 = vadd.f32 %v2254, %v2279
    %v2282 = vadd.f32 %v2255, %v2280
    %2283 = vset.pattern.permute.xlu0 1
    %2284 = vperm.xlu0 %2283, %v2265
    %v2285 = vpop.permute.xlu0 %2284
    %v2287 = vlaneseq
    %v2288 = vshrl.u32 %v2287, 7
    %v2289 = vsub.s32 1, %v2288
    %v2290 = vrot.slane %v2262, %v2289
    %v2291 = vlaneseq
    %v2292 = vshrl.u32 %v2291, 7
    %v2293 = vsub.s32 1, %v2292
    %v2294 = vrot.slane %v2263, %v2293
    %v2295 = vmul.f32 %v2285, %v2290
    %v2296 = vmul.f32 %v2285, %v2294
    %v2297 = vadd.f32 %v2281, %v2295
    %v2298 = vadd.f32 %v2282, %v2296
    %2299 = vset.pattern.permute.xlu0 2
    %2300 = vperm.xlu0 %2299, %v2265
    %v2301 = vpop.permute.xlu0 %2300
    %v2303 = vlaneseq
    %v2304 = vshrl.u32 %v2303, 7
    %v2305 = vsub.s32 2, %v2304
    %v2306 = vrot.slane %v2262, %v2305
    %v2307 = vlaneseq
    %v2308 = vshrl.u32 %v2307, 7
    %v2309 = vsub.s32 2, %v2308
    %v2310 = vrot.slane %v2263, %v2309
    %v2311 = vmul.f32 %v2301, %v2306
    %v2312 = vmul.f32 %v2301, %v2310
    %v2313 = vadd.f32 %v2297, %v2311
    %v2314 = vadd.f32 %v2298, %v2312
    %2315 = vset.pattern.permute.xlu0 3
    %2316 = vperm.xlu0 %2315, %v2265
    %v2317 = vpop.permute.xlu0 %2316
    %v2319 = vlaneseq
    %v2320 = vshrl.u32 %v2319, 7
    %v2321 = vsub.s32 3, %v2320
    %v2322 = vrot.slane %v2262, %v2321
    %v2323 = vlaneseq
    %v2324 = vshrl.u32 %v2323, 7
    %v2325 = vsub.s32 3, %v2324
    %v2326 = vrot.slane %v2263, %v2325
    %v2327 = vmul.f32 %v2317, %v2322
    %v2328 = vmul.f32 %v2317, %v2326
    %v2329 = vadd.f32 %v2313, %v2327
    %v2330 = vadd.f32 %v2314, %v2328
    %2331 = vrot.lane.b32.xlu0 %v1695, 111
    %v2332 = vpop.permute.xlu0 %2331
    %2333 = vrot.lane.b32.xlu0 %v1697, 111
    %v2334 = vpop.permute.xlu0 %2333
    %v2335 = vsel %vm792, %v2332, %v2334
    %v2336 = vsel %vm792, %v2334, %v2332
    %v2337 = vmul.f32 %v2335, %v799
    %v2338 = vmul.f32 %v2336, %v803
    %s2339 = scalar_lea.vmem %s1, 68
    %v2340 = vld [vmem:[%s2339] sm:$0xf]
    %2342 = vset.pattern.permute.xlu0 0
    %2343 = vperm.xlu0 %2342, %v2340
    %v2344 = vpop.permute.xlu0 %2343
    %v2346 = vlaneseq
    %v2347 = vshrl.u32 %v2346, 7
    %v2348 = vsub.s32 0, %v2347
    %v2349 = vrot.slane %v2337, %v2348
    %v2350 = vlaneseq
    %v2351 = vshrl.u32 %v2350, 7
    %v2352 = vsub.s32 0, %v2351
    %v2353 = vrot.slane %v2338, %v2352
    %v2354 = vmul.f32 %v2344, %v2349
    %v2355 = vmul.f32 %v2344, %v2353
    %v2356 = vadd.f32 %v2329, %v2354
    %v2357 = vadd.f32 %v2330, %v2355
    %2358 = vset.pattern.permute.xlu0 1
    %2359 = vperm.xlu0 %2358, %v2340
    %v2360 = vpop.permute.xlu0 %2359
    %v2362 = vlaneseq
    %v2363 = vshrl.u32 %v2362, 7
    %v2364 = vsub.s32 1, %v2363
    %v2365 = vrot.slane %v2337, %v2364
    %v2366 = vlaneseq
    %v2367 = vshrl.u32 %v2366, 7
    %v2368 = vsub.s32 1, %v2367
    %v2369 = vrot.slane %v2338, %v2368
    %v2370 = vmul.f32 %v2360, %v2365
    %v2371 = vmul.f32 %v2360, %v2369
    %v2372 = vadd.f32 %v2356, %v2370
    %v2373 = vadd.f32 %v2357, %v2371
    %2374 = vset.pattern.permute.xlu0 2
    %2375 = vperm.xlu0 %2374, %v2340
    %v2376 = vpop.permute.xlu0 %2375
    %v2378 = vlaneseq
    %v2379 = vshrl.u32 %v2378, 7
    %v2380 = vsub.s32 2, %v2379
    %v2381 = vrot.slane %v2337, %v2380
    %v2382 = vlaneseq
    %v2383 = vshrl.u32 %v2382, 7
    %v2384 = vsub.s32 2, %v2383
    %v2385 = vrot.slane %v2338, %v2384
    %v2386 = vmul.f32 %v2376, %v2381
    %v2387 = vmul.f32 %v2376, %v2385
    %v2388 = vadd.f32 %v2372, %v2386
    %v2389 = vadd.f32 %v2373, %v2387
    %2390 = vset.pattern.permute.xlu0 3
    %2391 = vperm.xlu0 %2390, %v2340
    %v2392 = vpop.permute.xlu0 %2391
    %v2394 = vlaneseq
    %v2395 = vshrl.u32 %v2394, 7
    %v2396 = vsub.s32 3, %v2395
    %v2397 = vrot.slane %v2337, %v2396
    %v2398 = vlaneseq
    %v2399 = vshrl.u32 %v2398, 7
    %v2400 = vsub.s32 3, %v2399
    %v2401 = vrot.slane %v2338, %v2400
    %v2402 = vmul.f32 %v2392, %v2397
    %v2403 = vmul.f32 %v2392, %v2401
    %v2404 = vadd.f32 %v2388, %v2402
    %v2405 = vadd.f32 %v2389, %v2403
    %s2406 = scalar_lea.vmem %s8, 2
    %v2407 = vld [vmem:[%s2406] sm:$0x3]
    %v2408 = vmul.f32 %v876, %v2407
    %v2410 = vlaneseq
    %v2411 = vshrl.u32 %v2410, 7
    %v2412 = vsub.s32 0, %v2411
    %v2413 = vrot.slane %v2408, %v2412
    %v2414 = vlaneseq
    %v2415 = vshrl.u32 %v2414, 7
    %v2416 = vsub.s32 1, %v2415
    %v2417 = vrot.slane %v2408, %v2416
    %v2420 = vadd.f32 %v2404, %v2413
    %v2421 = vadd.f32 %v2405, %v2417
    %v2422 = vadd.f32 %v2420, %v894
    %v2423 = vadd.f32 %v2421, %v894
    %vm2424 = vcmp.ge.f32.partialorder %v2422, 0.0
    %vm2425 = vcmp.ge.f32.partialorder %v2423, 0.0
    %v2426 = vmul.f32 %v2422, 0.2
    %v2427 = vmul.f32 %v2423, 0.2
    %v2428 = vsel %vm2424, %v2422, %v2426
    %v2429 = vsel %vm2425, %v2423, %v2427
    %v2430 = vmul.f32 %v2428, 1.4142135
    %v2431 = vmul.f32 %v2429, 1.4142135
    %2432 = vrot.lane.b32.xlu0 %v2430, 17
    %v2433 = vpop.permute.xlu0 %2432
    %2434 = vrot.lane.b32.xlu0 %v2431, 17
    %v2435 = vpop.permute.xlu0 %2434
    %v2436 = vsel %vm77, %v2433, %v2435
    %v2437 = vsel %vm77, %v2435, %v2433
    %v2438 = vmul.f32 %v2437, %v84
    %v2439 = vmul.f32 %v2436, %v88
    %s2440 = scalar_lea.vmem %s2, 36
    %v2441 = vld [vmem:[%s2440] sm:$0xf]
    %2443 = vset.pattern.permute.xlu0 0
    %2444 = vperm.xlu0 %2443, %v2441
    %v2445 = vpop.permute.xlu0 %2444
    %v2447 = vlaneseq
    %v2448 = vshrl.u32 %v2447, 7
    %v2449 = vsub.s32 0, %v2448
    %v2450 = vrot.slane %v2438, %v2449
    %v2451 = vlaneseq
    %v2452 = vshrl.u32 %v2451, 7
    %v2453 = vsub.s32 0, %v2452
    %v2454 = vrot.slane %v2439, %v2453
    %v2455 = vmul.f32 %v2445, %v2450
    %v2456 = vmul.f32 %v2445, %v2454
    %v2457 = vadd.f32 %v2455, 0.0
    %v2458 = vadd.f32 %v2456, 0.0
    %2459 = vset.pattern.permute.xlu0 1
    %2460 = vperm.xlu0 %2459, %v2441
    %v2461 = vpop.permute.xlu0 %2460
    %v2463 = vlaneseq
    %v2464 = vshrl.u32 %v2463, 7
    %v2465 = vsub.s32 1, %v2464
    %v2466 = vrot.slane %v2438, %v2465
    %v2467 = vlaneseq
    %v2468 = vshrl.u32 %v2467, 7
    %v2469 = vsub.s32 1, %v2468
    %v2470 = vrot.slane %v2439, %v2469
    %v2471 = vmul.f32 %v2461, %v2466
    %v2472 = vmul.f32 %v2461, %v2470
    %v2473 = vadd.f32 %v2457, %v2471
    %v2474 = vadd.f32 %v2458, %v2472
    %2475 = vset.pattern.permute.xlu0 2
    %2476 = vperm.xlu0 %2475, %v2441
    %v2477 = vpop.permute.xlu0 %2476
    %v2479 = vlaneseq
    %v2480 = vshrl.u32 %v2479, 7
    %v2481 = vsub.s32 2, %v2480
    %v2482 = vrot.slane %v2438, %v2481
    %v2483 = vlaneseq
    %v2484 = vshrl.u32 %v2483, 7
    %v2485 = vsub.s32 2, %v2484
    %v2486 = vrot.slane %v2439, %v2485
    %v2487 = vmul.f32 %v2477, %v2482
    %v2488 = vmul.f32 %v2477, %v2486
    %v2489 = vadd.f32 %v2473, %v2487
    %v2490 = vadd.f32 %v2474, %v2488
    %2491 = vset.pattern.permute.xlu0 3
    %2492 = vperm.xlu0 %2491, %v2441
    %v2493 = vpop.permute.xlu0 %2492
    %v2495 = vlaneseq
    %v2496 = vshrl.u32 %v2495, 7
    %v2497 = vsub.s32 3, %v2496
    %v2498 = vrot.slane %v2438, %v2497
    %v2499 = vlaneseq
    %v2500 = vshrl.u32 %v2499, 7
    %v2501 = vsub.s32 3, %v2500
    %v2502 = vrot.slane %v2439, %v2501
    %v2503 = vmul.f32 %v2493, %v2498
    %v2504 = vmul.f32 %v2493, %v2502
    %v2505 = vadd.f32 %v2489, %v2503
    %v2506 = vadd.f32 %v2490, %v2504
    %2507 = vrot.lane.b32.xlu0 %v2430, 16
    %v2508 = vpop.permute.xlu0 %2507
    %2509 = vrot.lane.b32.xlu0 %v2431, 16
    %v2510 = vpop.permute.xlu0 %2509
    %v2511 = vsel %vm163, %v2508, %v2510
    %v2512 = vsel %vm163, %v2510, %v2508
    %v2513 = vmul.f32 %v2512, %v170
    %v2514 = vmul.f32 %v2511, %v174
    %s2515 = scalar_lea.vmem %s2, 40
    %v2516 = vld [vmem:[%s2515] sm:$0xf]
    %2518 = vset.pattern.permute.xlu0 0
    %2519 = vperm.xlu0 %2518, %v2516
    %v2520 = vpop.permute.xlu0 %2519
    %v2522 = vlaneseq
    %v2523 = vshrl.u32 %v2522, 7
    %v2524 = vsub.s32 0, %v2523
    %v2525 = vrot.slane %v2513, %v2524
    %v2526 = vlaneseq
    %v2527 = vshrl.u32 %v2526, 7
    %v2528 = vsub.s32 0, %v2527
    %v2529 = vrot.slane %v2514, %v2528
    %v2530 = vmul.f32 %v2520, %v2525
    %v2531 = vmul.f32 %v2520, %v2529
    %v2532 = vadd.f32 %v2505, %v2530
    %v2533 = vadd.f32 %v2506, %v2531
    %2534 = vset.pattern.permute.xlu0 1
    %2535 = vperm.xlu0 %2534, %v2516
    %v2536 = vpop.permute.xlu0 %2535
    %v2538 = vlaneseq
    %v2539 = vshrl.u32 %v2538, 7
    %v2540 = vsub.s32 1, %v2539
    %v2541 = vrot.slane %v2513, %v2540
    %v2542 = vlaneseq
    %v2543 = vshrl.u32 %v2542, 7
    %v2544 = vsub.s32 1, %v2543
    %v2545 = vrot.slane %v2514, %v2544
    %v2546 = vmul.f32 %v2536, %v2541
    %v2547 = vmul.f32 %v2536, %v2545
    %v2548 = vadd.f32 %v2532, %v2546
    %v2549 = vadd.f32 %v2533, %v2547
    %2550 = vset.pattern.permute.xlu0 2
    %2551 = vperm.xlu0 %2550, %v2516
    %v2552 = vpop.permute.xlu0 %2551
    %v2554 = vlaneseq
    %v2555 = vshrl.u32 %v2554, 7
    %v2556 = vsub.s32 2, %v2555
    %v2557 = vrot.slane %v2513, %v2556
    %v2558 = vlaneseq
    %v2559 = vshrl.u32 %v2558, 7
    %v2560 = vsub.s32 2, %v2559
    %v2561 = vrot.slane %v2514, %v2560
    %v2562 = vmul.f32 %v2552, %v2557
    %v2563 = vmul.f32 %v2552, %v2561
    %v2564 = vadd.f32 %v2548, %v2562
    %v2565 = vadd.f32 %v2549, %v2563
    %2566 = vset.pattern.permute.xlu0 3
    %2567 = vperm.xlu0 %2566, %v2516
    %v2568 = vpop.permute.xlu0 %2567
    %v2570 = vlaneseq
    %v2571 = vshrl.u32 %v2570, 7
    %v2572 = vsub.s32 3, %v2571
    %v2573 = vrot.slane %v2513, %v2572
    %v2574 = vlaneseq
    %v2575 = vshrl.u32 %v2574, 7
    %v2576 = vsub.s32 3, %v2575
    %v2577 = vrot.slane %v2514, %v2576
    %v2578 = vmul.f32 %v2568, %v2573
    %v2579 = vmul.f32 %v2568, %v2577
    %v2580 = vadd.f32 %v2564, %v2578
    %v2581 = vadd.f32 %v2565, %v2579
    %2582 = vrot.lane.b32.xlu0 %v2430, 15
    %v2583 = vpop.permute.xlu0 %2582
    %2584 = vrot.lane.b32.xlu0 %v2431, 15
    %v2585 = vpop.permute.xlu0 %2584
    %v2586 = vsel %vm250, %v2583, %v2585
    %v2587 = vsel %vm250, %v2585, %v2583
    %v2588 = vmul.f32 %v2587, %v257
    %v2589 = vmul.f32 %v2586, %v261
    %s2590 = scalar_lea.vmem %s2, 44
    %v2591 = vld [vmem:[%s2590] sm:$0xf]
    %2593 = vset.pattern.permute.xlu0 0
    %2594 = vperm.xlu0 %2593, %v2591
    %v2595 = vpop.permute.xlu0 %2594
    %v2597 = vlaneseq
    %v2598 = vshrl.u32 %v2597, 7
    %v2599 = vsub.s32 0, %v2598
    %v2600 = vrot.slane %v2588, %v2599
    %v2601 = vlaneseq
    %v2602 = vshrl.u32 %v2601, 7
    %v2603 = vsub.s32 0, %v2602
    %v2604 = vrot.slane %v2589, %v2603
    %v2605 = vmul.f32 %v2595, %v2600
    %v2606 = vmul.f32 %v2595, %v2604
    %v2607 = vadd.f32 %v2580, %v2605
    %v2608 = vadd.f32 %v2581, %v2606
    %2609 = vset.pattern.permute.xlu0 1
    %2610 = vperm.xlu0 %2609, %v2591
    %v2611 = vpop.permute.xlu0 %2610
    %v2613 = vlaneseq
    %v2614 = vshrl.u32 %v2613, 7
    %v2615 = vsub.s32 1, %v2614
    %v2616 = vrot.slane %v2588, %v2615
    %v2617 = vlaneseq
    %v2618 = vshrl.u32 %v2617, 7
    %v2619 = vsub.s32 1, %v2618
    %v2620 = vrot.slane %v2589, %v2619
    %v2621 = vmul.f32 %v2611, %v2616
    %v2622 = vmul.f32 %v2611, %v2620
    %v2623 = vadd.f32 %v2607, %v2621
    %v2624 = vadd.f32 %v2608, %v2622
    %2625 = vset.pattern.permute.xlu0 2
    %2626 = vperm.xlu0 %2625, %v2591
    %v2627 = vpop.permute.xlu0 %2626
    %v2629 = vlaneseq
    %v2630 = vshrl.u32 %v2629, 7
    %v2631 = vsub.s32 2, %v2630
    %v2632 = vrot.slane %v2588, %v2631
    %v2633 = vlaneseq
    %v2634 = vshrl.u32 %v2633, 7
    %v2635 = vsub.s32 2, %v2634
    %v2636 = vrot.slane %v2589, %v2635
    %v2637 = vmul.f32 %v2627, %v2632
    %v2638 = vmul.f32 %v2627, %v2636
    %v2639 = vadd.f32 %v2623, %v2637
    %v2640 = vadd.f32 %v2624, %v2638
    %2641 = vset.pattern.permute.xlu0 3
    %2642 = vperm.xlu0 %2641, %v2591
    %v2643 = vpop.permute.xlu0 %2642
    %v2645 = vlaneseq
    %v2646 = vshrl.u32 %v2645, 7
    %v2647 = vsub.s32 3, %v2646
    %v2648 = vrot.slane %v2588, %v2647
    %v2649 = vlaneseq
    %v2650 = vshrl.u32 %v2649, 7
    %v2651 = vsub.s32 3, %v2650
    %v2652 = vrot.slane %v2589, %v2651
    %v2653 = vmul.f32 %v2643, %v2648
    %v2654 = vmul.f32 %v2643, %v2652
    %v2655 = vadd.f32 %v2639, %v2653
    %v2656 = vadd.f32 %v2640, %v2654
    %2657 = vrot.lane.b32.xlu0 %v2430, 1
    %v2658 = vpop.permute.xlu0 %2657
    %2659 = vrot.lane.b32.xlu0 %v2431, 1
    %v2660 = vpop.permute.xlu0 %2659
    %v2661 = vsel %vm337, %v2658, %v2660
    %v2662 = vsel %vm337, %v2660, %v2658
    %v2663 = vmul.f32 %v2662, %v344
    %v2664 = vmul.f32 %v2661, %v348
    %s2665 = scalar_lea.vmem %s2, 48
    %v2666 = vld [vmem:[%s2665] sm:$0xf]
    %2668 = vset.pattern.permute.xlu0 0
    %2669 = vperm.xlu0 %2668, %v2666
    %v2670 = vpop.permute.xlu0 %2669
    %v2672 = vlaneseq
    %v2673 = vshrl.u32 %v2672, 7
    %v2674 = vsub.s32 0, %v2673
    %v2675 = vrot.slane %v2663, %v2674
    %v2676 = vlaneseq
    %v2677 = vshrl.u32 %v2676, 7
    %v2678 = vsub.s32 0, %v2677
    %v2679 = vrot.slane %v2664, %v2678
    %v2680 = vmul.f32 %v2670, %v2675
    %v2681 = vmul.f32 %v2670, %v2679
    %v2682 = vadd.f32 %v2655, %v2680
    %v2683 = vadd.f32 %v2656, %v2681
    %2684 = vset.pattern.permute.xlu0 1
    %2685 = vperm.xlu0 %2684, %v2666
    %v2686 = vpop.permute.xlu0 %2685
    %v2688 = vlaneseq
    %v2689 = vshrl.u32 %v2688, 7
    %v2690 = vsub.s32 1, %v2689
    %v2691 = vrot.slane %v2663, %v2690
    %v2692 = vlaneseq
    %v2693 = vshrl.u32 %v2692, 7
    %v2694 = vsub.s32 1, %v2693
    %v2695 = vrot.slane %v2664, %v2694
    %v2696 = vmul.f32 %v2686, %v2691
    %v2697 = vmul.f32 %v2686, %v2695
    %v2698 = vadd.f32 %v2682, %v2696
    %v2699 = vadd.f32 %v2683, %v2697
    %2700 = vset.pattern.permute.xlu0 2
    %2701 = vperm.xlu0 %2700, %v2666
    %v2702 = vpop.permute.xlu0 %2701
    %v2704 = vlaneseq
    %v2705 = vshrl.u32 %v2704, 7
    %v2706 = vsub.s32 2, %v2705
    %v2707 = vrot.slane %v2663, %v2706
    %v2708 = vlaneseq
    %v2709 = vshrl.u32 %v2708, 7
    %v2710 = vsub.s32 2, %v2709
    %v2711 = vrot.slane %v2664, %v2710
    %v2712 = vmul.f32 %v2702, %v2707
    %v2713 = vmul.f32 %v2702, %v2711
    %v2714 = vadd.f32 %v2698, %v2712
    %v2715 = vadd.f32 %v2699, %v2713
    %2716 = vset.pattern.permute.xlu0 3
    %2717 = vperm.xlu0 %2716, %v2666
    %v2718 = vpop.permute.xlu0 %2717
    %v2720 = vlaneseq
    %v2721 = vshrl.u32 %v2720, 7
    %v2722 = vsub.s32 3, %v2721
    %v2723 = vrot.slane %v2663, %v2722
    %v2724 = vlaneseq
    %v2725 = vshrl.u32 %v2724, 7
    %v2726 = vsub.s32 3, %v2725
    %v2727 = vrot.slane %v2664, %v2726
    %v2728 = vmul.f32 %v2718, %v2723
    %v2729 = vmul.f32 %v2718, %v2727
    %v2730 = vadd.f32 %v2714, %v2728
    %v2731 = vadd.f32 %v2715, %v2729
    %s2732 = scalar_lea.vmem %s2, 52
    %v2733 = vld [vmem:[%s2732] sm:$0xf]
    %2735 = vset.pattern.permute.xlu0 0
    %2736 = vperm.xlu0 %2735, %v2733
    %v2737 = vpop.permute.xlu0 %2736
    %v2739 = vlaneseq
    %v2740 = vshrl.u32 %v2739, 7
    %v2741 = vsub.s32 0, %v2740
    %v2742 = vrot.slane %v2430, %v2741
    %v2743 = vlaneseq
    %v2744 = vshrl.u32 %v2743, 7
    %v2745 = vsub.s32 0, %v2744
    %v2746 = vrot.slane %v2431, %v2745
    %v2747 = vmul.f32 %v2737, %v2742
    %v2748 = vmul.f32 %v2737, %v2746
    %v2749 = vadd.f32 %v2730, %v2747
    %v2750 = vadd.f32 %v2731, %v2748
    %2751 = vset.pattern.permute.xlu0 1
    %2752 = vperm.xlu0 %2751, %v2733
    %v2753 = vpop.permute.xlu0 %2752
    %v2755 = vlaneseq
    %v2756 = vshrl.u32 %v2755, 7
    %v2757 = vsub.s32 1, %v2756
    %v2758 = vrot.slane %v2430, %v2757
    %v2759 = vlaneseq
    %v2760 = vshrl.u32 %v2759, 7
    %v2761 = vsub.s32 1, %v2760
    %v2762 = vrot.slane %v2431, %v2761
    %v2763 = vmul.f32 %v2753, %v2758
    %v2764 = vmul.f32 %v2753, %v2762
    %v2765 = vadd.f32 %v2749, %v2763
    %v2766 = vadd.f32 %v2750, %v2764
    %2767 = vset.pattern.permute.xlu0 2
    %2768 = vperm.xlu0 %2767, %v2733
    %v2769 = vpop.permute.xlu0 %2768
    %v2771 = vlaneseq
    %v2772 = vshrl.u32 %v2771, 7
    %v2773 = vsub.s32 2, %v2772
    %v2774 = vrot.slane %v2430, %v2773
    %v2775 = vlaneseq
    %v2776 = vshrl.u32 %v2775, 7
    %v2777 = vsub.s32 2, %v2776
    %v2778 = vrot.slane %v2431, %v2777
    %v2779 = vmul.f32 %v2769, %v2774
    %v2780 = vmul.f32 %v2769, %v2778
    %v2781 = vadd.f32 %v2765, %v2779
    %v2782 = vadd.f32 %v2766, %v2780
    %2783 = vset.pattern.permute.xlu0 3
    %2784 = vperm.xlu0 %2783, %v2733
    %v2785 = vpop.permute.xlu0 %2784
    %v2787 = vlaneseq
    %v2788 = vshrl.u32 %v2787, 7
    %v2789 = vsub.s32 3, %v2788
    %v2790 = vrot.slane %v2430, %v2789
    %v2791 = vlaneseq
    %v2792 = vshrl.u32 %v2791, 7
    %v2793 = vsub.s32 3, %v2792
    %v2794 = vrot.slane %v2431, %v2793
    %v2795 = vmul.f32 %v2785, %v2790
    %v2796 = vmul.f32 %v2785, %v2794
    %v2797 = vadd.f32 %v2781, %v2795
    %v2798 = vadd.f32 %v2782, %v2796
    %2799 = vrot.lane.b32.xlu0 %v2430, 127
    %v2800 = vpop.permute.xlu0 %2799
    %2801 = vrot.lane.b32.xlu0 %v2431, 127
    %v2802 = vpop.permute.xlu0 %2801
    %v2803 = vsel %vm531, %v2800, %v2802
    %v2804 = vsel %vm531, %v2802, %v2800
    %v2805 = vmul.f32 %v2803, %v538
    %v2806 = vmul.f32 %v2804, %v542
    %s2807 = scalar_lea.vmem %s2, 56
    %v2808 = vld [vmem:[%s2807] sm:$0xf]
    %2810 = vset.pattern.permute.xlu0 0
    %2811 = vperm.xlu0 %2810, %v2808
    %v2812 = vpop.permute.xlu0 %2811
    %v2814 = vlaneseq
    %v2815 = vshrl.u32 %v2814, 7
    %v2816 = vsub.s32 0, %v2815
    %v2817 = vrot.slane %v2805, %v2816
    %v2818 = vlaneseq
    %v2819 = vshrl.u32 %v2818, 7
    %v2820 = vsub.s32 0, %v2819
    %v2821 = vrot.slane %v2806, %v2820
    %v2822 = vmul.f32 %v2812, %v2817
    %v2823 = vmul.f32 %v2812, %v2821
    %v2824 = vadd.f32 %v2797, %v2822
    %v2825 = vadd.f32 %v2798, %v2823
    %2826 = vset.pattern.permute.xlu0 1
    %2827 = vperm.xlu0 %2826, %v2808
    %v2828 = vpop.permute.xlu0 %2827
    %v2830 = vlaneseq
    %v2831 = vshrl.u32 %v2830, 7
    %v2832 = vsub.s32 1, %v2831
    %v2833 = vrot.slane %v2805, %v2832
    %v2834 = vlaneseq
    %v2835 = vshrl.u32 %v2834, 7
    %v2836 = vsub.s32 1, %v2835
    %v2837 = vrot.slane %v2806, %v2836
    %v2838 = vmul.f32 %v2828, %v2833
    %v2839 = vmul.f32 %v2828, %v2837
    %v2840 = vadd.f32 %v2824, %v2838
    %v2841 = vadd.f32 %v2825, %v2839
    %2842 = vset.pattern.permute.xlu0 2
    %2843 = vperm.xlu0 %2842, %v2808
    %v2844 = vpop.permute.xlu0 %2843
    %v2846 = vlaneseq
    %v2847 = vshrl.u32 %v2846, 7
    %v2848 = vsub.s32 2, %v2847
    %v2849 = vrot.slane %v2805, %v2848
    %v2850 = vlaneseq
    %v2851 = vshrl.u32 %v2850, 7
    %v2852 = vsub.s32 2, %v2851
    %v2853 = vrot.slane %v2806, %v2852
    %v2854 = vmul.f32 %v2844, %v2849
    %v2855 = vmul.f32 %v2844, %v2853
    %v2856 = vadd.f32 %v2840, %v2854
    %v2857 = vadd.f32 %v2841, %v2855
    %2858 = vset.pattern.permute.xlu0 3
    %2859 = vperm.xlu0 %2858, %v2808
    %v2860 = vpop.permute.xlu0 %2859
    %v2862 = vlaneseq
    %v2863 = vshrl.u32 %v2862, 7
    %v2864 = vsub.s32 3, %v2863
    %v2865 = vrot.slane %v2805, %v2864
    %v2866 = vlaneseq
    %v2867 = vshrl.u32 %v2866, 7
    %v2868 = vsub.s32 3, %v2867
    %v2869 = vrot.slane %v2806, %v2868
    %v2870 = vmul.f32 %v2860, %v2865
    %v2871 = vmul.f32 %v2860, %v2869
    %v2872 = vadd.f32 %v2856, %v2870
    %v2873 = vadd.f32 %v2857, %v2871
    %2874 = vrot.lane.b32.xlu0 %v2430, 113
    %v2875 = vpop.permute.xlu0 %2874
    %2876 = vrot.lane.b32.xlu0 %v2431, 113
    %v2877 = vpop.permute.xlu0 %2876
    %v2878 = vsel %vm618, %v2875, %v2877
    %v2879 = vsel %vm618, %v2877, %v2875
    %v2880 = vmul.f32 %v2878, %v625
    %v2881 = vmul.f32 %v2879, %v629
    %s2882 = scalar_lea.vmem %s2, 60
    %v2883 = vld [vmem:[%s2882] sm:$0xf]
    %2885 = vset.pattern.permute.xlu0 0
    %2886 = vperm.xlu0 %2885, %v2883
    %v2887 = vpop.permute.xlu0 %2886
    %v2889 = vlaneseq
    %v2890 = vshrl.u32 %v2889, 7
    %v2891 = vsub.s32 0, %v2890
    %v2892 = vrot.slane %v2880, %v2891
    %v2893 = vlaneseq
    %v2894 = vshrl.u32 %v2893, 7
    %v2895 = vsub.s32 0, %v2894
    %v2896 = vrot.slane %v2881, %v2895
    %v2897 = vmul.f32 %v2887, %v2892
    %v2898 = vmul.f32 %v2887, %v2896
    %v2899 = vadd.f32 %v2872, %v2897
    %v2900 = vadd.f32 %v2873, %v2898
    %2901 = vset.pattern.permute.xlu0 1
    %2902 = vperm.xlu0 %2901, %v2883
    %v2903 = vpop.permute.xlu0 %2902
    %v2905 = vlaneseq
    %v2906 = vshrl.u32 %v2905, 7
    %v2907 = vsub.s32 1, %v2906
    %v2908 = vrot.slane %v2880, %v2907
    %v2909 = vlaneseq
    %v2910 = vshrl.u32 %v2909, 7
    %v2911 = vsub.s32 1, %v2910
    %v2912 = vrot.slane %v2881, %v2911
    %v2913 = vmul.f32 %v2903, %v2908
    %v2914 = vmul.f32 %v2903, %v2912
    %v2915 = vadd.f32 %v2899, %v2913
    %v2916 = vadd.f32 %v2900, %v2914
    %2917 = vset.pattern.permute.xlu0 2
    %2918 = vperm.xlu0 %2917, %v2883
    %v2919 = vpop.permute.xlu0 %2918
    %v2921 = vlaneseq
    %v2922 = vshrl.u32 %v2921, 7
    %v2923 = vsub.s32 2, %v2922
    %v2924 = vrot.slane %v2880, %v2923
    %v2925 = vlaneseq
    %v2926 = vshrl.u32 %v2925, 7
    %v2927 = vsub.s32 2, %v2926
    %v2928 = vrot.slane %v2881, %v2927
    %v2929 = vmul.f32 %v2919, %v2924
    %v2930 = vmul.f32 %v2919, %v2928
    %v2931 = vadd.f32 %v2915, %v2929
    %v2932 = vadd.f32 %v2916, %v2930
    %2933 = vset.pattern.permute.xlu0 3
    %2934 = vperm.xlu0 %2933, %v2883
    %v2935 = vpop.permute.xlu0 %2934
    %v2937 = vlaneseq
    %v2938 = vshrl.u32 %v2937, 7
    %v2939 = vsub.s32 3, %v2938
    %v2940 = vrot.slane %v2880, %v2939
    %v2941 = vlaneseq
    %v2942 = vshrl.u32 %v2941, 7
    %v2943 = vsub.s32 3, %v2942
    %v2944 = vrot.slane %v2881, %v2943
    %v2945 = vmul.f32 %v2935, %v2940
    %v2946 = vmul.f32 %v2935, %v2944
    %v2947 = vadd.f32 %v2931, %v2945
    %v2948 = vadd.f32 %v2932, %v2946
    %2949 = vrot.lane.b32.xlu0 %v2430, 112
    %v2950 = vpop.permute.xlu0 %2949
    %2951 = vrot.lane.b32.xlu0 %v2431, 112
    %v2952 = vpop.permute.xlu0 %2951
    %v2953 = vsel %vm705, %v2950, %v2952
    %v2954 = vsel %vm705, %v2952, %v2950
    %v2955 = vmul.f32 %v2953, %v712
    %v2956 = vmul.f32 %v2954, %v716
    %s2957 = scalar_lea.vmem %s2, 64
    %v2958 = vld [vmem:[%s2957] sm:$0xf]
    %2960 = vset.pattern.permute.xlu0 0
    %2961 = vperm.xlu0 %2960, %v2958
    %v2962 = vpop.permute.xlu0 %2961
    %v2964 = vlaneseq
    %v2965 = vshrl.u32 %v2964, 7
    %v2966 = vsub.s32 0, %v2965
    %v2967 = vrot.slane %v2955, %v2966
    %v2968 = vlaneseq
    %v2969 = vshrl.u32 %v2968, 7
    %v2970 = vsub.s32 0, %v2969
    %v2971 = vrot.slane %v2956, %v2970
    %v2972 = vmul.f32 %v2962, %v2967
    %v2973 = vmul.f32 %v2962, %v2971
    %v2974 = vadd.f32 %v2947, %v2972
    %v2975 = vadd.f32 %v2948, %v2973
    %2976 = vset.pattern.permute.xlu0 1
    %2977 = vperm.xlu0 %2976, %v2958
    %v2978 = vpop.permute.xlu0 %2977
    %v2980 = vlaneseq
    %v2981 = vshrl.u32 %v2980, 7
    %v2982 = vsub.s32 1, %v2981
    %v2983 = vrot.slane %v2955, %v2982
    %v2984 = vlaneseq
    %v2985 = vshrl.u32 %v2984, 7
    %v2986 = vsub.s32 1, %v2985
    %v2987 = vrot.slane %v2956, %v2986
    %v2988 = vmul.f32 %v2978, %v2983
    %v2989 = vmul.f32 %v2978, %v2987
    %v2990 = vadd.f32 %v2974, %v2988
    %v2991 = vadd.f32 %v2975, %v2989
    %2992 = vset.pattern.permute.xlu0 2
    %2993 = vperm.xlu0 %2992, %v2958
    %v2994 = vpop.permute.xlu0 %2993
    %v2996 = vlaneseq
    %v2997 = vshrl.u32 %v2996, 7
    %v2998 = vsub.s32 2, %v2997
    %v2999 = vrot.slane %v2955, %v2998
    %v3000 = vlaneseq
    %v3001 = vshrl.u32 %v3000, 7
    %v3002 = vsub.s32 2, %v3001
    %v3003 = vrot.slane %v2956, %v3002
    %v3004 = vmul.f32 %v2994, %v2999
    %v3005 = vmul.f32 %v2994, %v3003
    %v3006 = vadd.f32 %v2990, %v3004
    %v3007 = vadd.f32 %v2991, %v3005
    %3008 = vset.pattern.permute.xlu0 3
    %3009 = vperm.xlu0 %3008, %v2958
    %v3010 = vpop.permute.xlu0 %3009
    %v3012 = vlaneseq
    %v3013 = vshrl.u32 %v3012, 7
    %v3014 = vsub.s32 3, %v3013
    %v3015 = vrot.slane %v2955, %v3014
    %v3016 = vlaneseq
    %v3017 = vshrl.u32 %v3016, 7
    %v3018 = vsub.s32 3, %v3017
    %v3019 = vrot.slane %v2956, %v3018
    %v3020 = vmul.f32 %v3010, %v3015
    %v3021 = vmul.f32 %v3010, %v3019
    %v3022 = vadd.f32 %v3006, %v3020
    %v3023 = vadd.f32 %v3007, %v3021
    %3024 = vrot.lane.b32.xlu0 %v2430, 111
    %v3025 = vpop.permute.xlu0 %3024
    %3026 = vrot.lane.b32.xlu0 %v2431, 111
    %v3027 = vpop.permute.xlu0 %3026
    %v3028 = vsel %vm792, %v3025, %v3027
    %v3029 = vsel %vm792, %v3027, %v3025
    %v3030 = vmul.f32 %v3028, %v799
    %v3031 = vmul.f32 %v3029, %v803
    %s3032 = scalar_lea.vmem %s2, 68
    %v3033 = vld [vmem:[%s3032] sm:$0xf]
    %3035 = vset.pattern.permute.xlu0 0
    %3036 = vperm.xlu0 %3035, %v3033
    %v3037 = vpop.permute.xlu0 %3036
    %v3039 = vlaneseq
    %v3040 = vshrl.u32 %v3039, 7
    %v3041 = vsub.s32 0, %v3040
    %v3042 = vrot.slane %v3030, %v3041
    %v3043 = vlaneseq
    %v3044 = vshrl.u32 %v3043, 7
    %v3045 = vsub.s32 0, %v3044
    %v3046 = vrot.slane %v3031, %v3045
    %v3047 = vmul.f32 %v3037, %v3042
    %v3048 = vmul.f32 %v3037, %v3046
    %v3049 = vadd.f32 %v3022, %v3047
    %v3050 = vadd.f32 %v3023, %v3048
    %3051 = vset.pattern.permute.xlu0 1
    %3052 = vperm.xlu0 %3051, %v3033
    %v3053 = vpop.permute.xlu0 %3052
    %v3055 = vlaneseq
    %v3056 = vshrl.u32 %v3055, 7
    %v3057 = vsub.s32 1, %v3056
    %v3058 = vrot.slane %v3030, %v3057
    %v3059 = vlaneseq
    %v3060 = vshrl.u32 %v3059, 7
    %v3061 = vsub.s32 1, %v3060
    %v3062 = vrot.slane %v3031, %v3061
    %v3063 = vmul.f32 %v3053, %v3058
    %v3064 = vmul.f32 %v3053, %v3062
    %v3065 = vadd.f32 %v3049, %v3063
    %v3066 = vadd.f32 %v3050, %v3064
    %3067 = vset.pattern.permute.xlu0 2
    %3068 = vperm.xlu0 %3067, %v3033
    %v3069 = vpop.permute.xlu0 %3068
    %v3071 = vlaneseq
    %v3072 = vshrl.u32 %v3071, 7
    %v3073 = vsub.s32 2, %v3072
    %v3074 = vrot.slane %v3030, %v3073
    %v3075 = vlaneseq
    %v3076 = vshrl.u32 %v3075, 7
    %v3077 = vsub.s32 2, %v3076
    %v3078 = vrot.slane %v3031, %v3077
    %v3079 = vmul.f32 %v3069, %v3074
    %v3080 = vmul.f32 %v3069, %v3078
    %v3081 = vadd.f32 %v3065, %v3079
    %v3082 = vadd.f32 %v3066, %v3080
    %3083 = vset.pattern.permute.xlu0 3
    %3084 = vperm.xlu0 %3083, %v3033
    %v3085 = vpop.permute.xlu0 %3084
    %v3087 = vlaneseq
    %v3088 = vshrl.u32 %v3087, 7
    %v3089 = vsub.s32 3, %v3088
    %v3090 = vrot.slane %v3030, %v3089
    %v3091 = vlaneseq
    %v3092 = vshrl.u32 %v3091, 7
    %v3093 = vsub.s32 3, %v3092
    %v3094 = vrot.slane %v3031, %v3093
    %v3095 = vmul.f32 %v3085, %v3090
    %v3096 = vmul.f32 %v3085, %v3094
    %v3097 = vadd.f32 %v3081, %v3095
    %v3098 = vadd.f32 %v3082, %v3096
    %s3099 = scalar_lea.vmem %s9, 2
    %v3100 = vld [vmem:[%s3099] sm:$0x3]
    %v3101 = vmul.f32 %v1573, %v3100
    %v3103 = vlaneseq
    %v3104 = vshrl.u32 %v3103, 7
    %v3105 = vsub.s32 0, %v3104
    %v3106 = vrot.slane %v3101, %v3105
    %v3107 = vlaneseq
    %v3108 = vshrl.u32 %v3107, 7
    %v3109 = vsub.s32 1, %v3108
    %v3110 = vrot.slane %v3101, %v3109
    %v3113 = vadd.f32 %v3097, %v3106
    %v3114 = vadd.f32 %v3098, %v3110
    %v3115 = vadd.f32 %v3113, %v1591
    %v3116 = vadd.f32 %v3114, %v1591
    %vm3117 = vcmp.ge.f32.partialorder %v3115, 0.0
    %vm3118 = vcmp.ge.f32.partialorder %v3116, 0.0
    %v3119 = vmul.f32 %v3115, 0.2
    %v3120 = vmul.f32 %v3116, 0.2
    %v3121 = vsel %vm3117, %v3115, %v3119
    %v3122 = vsel %vm3118, %v3116, %v3120
    %v3123 = vmul.f32 %v3121, 1.4142135
    %v3124 = vmul.f32 %v3122, 1.4142135
    %s3125 = scalar_lea.vmem %s3, 1
    %v3126 = vld [vmem:[%s3125] sm:$0x1]
    %3128 = vset.pattern.permute.xlu0 0
    %3129 = vperm.xlu0 %3128, %v3126
    %v3130 = vpop.permute.xlu0 %3129
    %v3132 = vlaneseq
    %v3133 = vshrl.u32 %v3132, 7
    %v3134 = vsub.s32 0, %v3133
    %v3135 = vrot.slane %v3130, %v3134
    %v3136 = vmul.f32 %v3135, %v3123
    %v3137 = vmul.f32 %v3135, %v3124
    %v3138 = vadd.f32 %v3136, 0.0
    %v3139 = vadd.f32 %v3137, 0.0
    %3140 = vset.pattern.permute.xlu0 1
    %3141 = vperm.xlu0 %3140, %v3126
    %v3142 = vpop.permute.xlu0 %3141
    %v3144 = vlaneseq
    %v3145 = vshrl.u32 %v3144, 7
    %v3146 = vsub.s32 0, %v3145
    %v3147 = vrot.slane %v3142, %v3146
    %v3148 = vmul.f32 %v3147, %v3123
    %v3149 = vmul.f32 %v3147, %v3124
    %v3152 = vrot.slane %v3148, 1
    %v3153 = vrot.slane %v3149, 1
    %v3156 = vadd.f32 %v3138, %v3152
    %v3157 = vadd.f32 %v3139, %v3153
    %3158 = vset.pattern.permute.xlu0 2
    %3159 = vperm.xlu0 %3158, %v3126
    %v3160 = vpop.permute.xlu0 %3159
    %v3162 = vlaneseq
    %v3163 = vshrl.u32 %v3162, 7
    %v3164 = vsub.s32 0, %v3163
    %v3165 = vrot.slane %v3160, %v3164
    %v3166 = vmul.f32 %v3165, %v3123
    %v3167 = vmul.f32 %v3165, %v3124
    %v3170 = vrot.slane %v3166, 2
    %v3171 = vrot.slane %v3167, 2
    %v3174 = vadd.f32 %v3156, %v3170
    %v3175 = vadd.f32 %v3157, %v3171
    %3176 = vset.pattern.permute.xlu0 3
    %3177 = vperm.xlu0 %3176, %v3126
    %v3178 = vpop.permute.xlu0 %3177
    %v3180 = vlaneseq
    %v3181 = vshrl.u32 %v3180, 7
    %v3182 = vsub.s32 0, %v3181
    %v3183 = vrot.slane %v3178, %v3182
    %v3184 = vmul.f32 %v3183, %v3123
    %v3185 = vmul.f32 %v3183, %v3124
    %v3188 = vrot.slane %v3184, 3
    %v3189 = vrot.slane %v3185, 3
    %v3192 = vadd.f32 %v3174, %v3188
    %v3193 = vadd.f32 %v3175, %v3189
    %v3196 = vcombine.low %v3192, %v3193
    %v3198 = vunpack.c.l.s4 1966171168
    %v3199 = vunpack.c.0.s8 %v3198
    %v3200 = vlaneseq
    %v3201 = vshrl.u32 %v3200, 7
    %v3202 = vsub.s32 %v3199, %v3201
    %v3203 = vrot.slane %v3196, %v3202
    %v3205 = vunpack.c.l.s4 1966171168
    %v3206 = vunpack.c.0.s8 %v3205
    %v3207 = vlaneseq
    %v3208 = vshrl.u32 %v3207, 7
    %v3209 = vsub.s32 %v3206, %v3208
    %v3210 = vrot.slane %v3203, %v3209
    %s3212 = scalar_lea.vmem %s10, 2
    %3213 = vst.msk [vmem:[%s3212] sm:$0x3] %vm1692, %v3210
    // Predicated region
    $region46: #{_lambda_.1} parent=1 // pred_check
      _
    $region47: #{_lambda_.1} parent=1 // pred_check_branch
      %3215 = sbr.rel (0) target = $region49
    $region48: #{_lambda_.1} parent=1 // pred_region
      _
    $region49: #{_lambda_.1} parent=1 // pred_fallthru
      _
    // Predicated region
    $region50: #{_lambda_.1} parent=1 // pred_check
      _
    $region51: #{_lambda_.1} parent=1 // pred_check_branch
      %3217 = sbr.rel (0) target = $region53
    $region52: #{_lambda_.1} parent=1 // pred_region
      _
    $region53: #{_lambda_.1} parent=1 // pred_fallthru
      _
    %3218 = vsyncpa [#allocation3], 1

</llo_original>
